<compile_context>
chip_gen: v7x
topology: tpu7x:2x2x1
jax: 0.10.0
libtpu: 0.0.40
codegen_flags: <defaults>
</compile_context>

<pallas_src>
import math

import numpy as np
import jax
import jax.numpy as jnp
from jax import lax
from jax.experimental import pallas as pl
from jax.experimental.pallas import tpu as pltpu


def _make_kernel(H, W, Cin, Cout, K, pad):
    assert K == 3 and pad == 1, "strip-trick kernel assumes 3x3 conv, pad=1"
    WP = W + 2 * pad                 # padded row width
    HP = H + 2 * pad
    HWP = H * WP                     # length of one whole-plane conv strip
    XLEN = (HP + 1) * WP             # padded plane + one extra zero row (slack)
    Ho, Wo = H // 2, W // 2

    def kernel(xt_ref, xp_ref, w1_ref, b1_ref, w2_ref, wsc_ref, bout_ref,
               pool_ref, out_ref, h1_ref, acc2_ref):
        # xt_ref  : (1, HWP, 9*Cin) bf16  strip im2col of the zero-padded input
        # xp_ref  : (1, Ho*Wo, Cin) bf16  2x2 avg-pooled input (shortcut path)
        # h1_ref  : (XLEN, Cout)    bf16  scratch: zero-padded relu(conv1(x))
        # acc2_ref: (HWP, Cout)     bf16  scratch: conv2 plane (pooling reads)
        # out_ref : (1, Ho*Wo, Cout) f32
        w1 = w1_ref[...]              # (9*Cin, Cout)
        w2 = w2_ref[...]              # (9, Cout, Cout)
        wsc = wsc_ref[...]            # (Cin, Cout)
        b1 = b1_ref[...]              # (1, Cout) f32
        bout = bout_ref[...]          # (1, Cout) f32  (= b2 + bsc)
        pool = pool_ref[...]          # (Wo, 2*WP) bf16

        # Zero the whole h1 scratch once (aligned full store); the interior
        # strip store below overwrites everything except the halo rows/columns
        # that must stay zero for conv2's padding.
        h1_ref[...] = jnp.zeros((XLEN, Cout), jnp.bfloat16)

        # ---- conv1: one im2col matmul (contraction dim = 9*Cin) -------------
        acc1 = jnp.dot(xt_ref[0], w1,
                       preferred_element_type=jnp.float32)        # (HWP, Cout)
        # In-kernel wrap-column mask (replaces the old full-plane mask input):
        # strip rows whose column index is >= W are row-wrap garbage; they must
        # be stored as zeros because they land on h1's halo columns.
        ridx = lax.broadcasted_iota(jnp.int32, (HWP, Cout), 0)
        keep = (ridx % WP) < W
        h1 = jnp.where(keep, jnp.maximum(acc1 + b1, 0.0), 0.0)
        h1_ref[pl.ds(WP + pad, HWP), :] = h1.astype(jnp.bfloat16)

        # ---- conv2: 9 whole-plane strip matmuls (bf16 in, f32 acc) ----------
        # TODO(synk): tile the row dim of this accumulation (256-512 rows) at
        # realistic plane sizes so the accumulator stays vreg-resident.
        acc2 = jnp.zeros((HWP, Cout), jnp.float32)
        for ky in range(K):
            for kx in range(K):
                hs = h1_ref[pl.ds(ky * WP + kx, HWP), :]          # (HWP, Cout)
                acc2 = acc2 + jnp.dot(hs, w2[ky * K + kx],
                                      preferred_element_type=jnp.float32)
        acc2_ref[...] = acc2.astype(jnp.bfloat16)

        # ---- shortcut: 1x1 conv on the pre-pooled input + folded bias -------
        base = jnp.dot(xp_ref[0], wsc,
                       preferred_element_type=jnp.float32) + bout  # (Ho*Wo, Cout)

        # ---- 2x2 average pool of the conv2 plane: banded per-row-pair matmul
        blocks = []
        for i in range(Ho):
            band = acc2_ref[pl.ds(2 * i * WP, 2 * WP), :]          # (2*WP, Cout)
            blocks.append(jnp.dot(pool, band,
                                  preferred_element_type=jnp.float32))
        res = jnp.concatenate(blocks, axis=0)                      # (Ho*Wo, Cout)

        # single batched store per batch element
        # TODO(synk): for small Cout the last dim is not lane-dense (<128);
        # consider packing Wo into lanes for the store at production shapes.
        out_ref[0, :, :] = res + base

    return kernel


def optimized_block_forward(x_nchw, params):
    """x_nchw: (N, Cin, H, W) float32; params: spectral-normalized weights."""
    w1, b1, w2, b2, wsc, bsc = params
    N, Cin, H, W = x_nchw.shape
    Cout, K, pad = w1.shape[0], w1.shape[2], 1
    WP = W + 2 * pad
    HP = H + 2 * pad
    HWP = H * WP
    XLEN = (HP + 1) * WP
    Ho, Wo = H // 2, W // 2

    # NCHW -> NHWC
    x_nhwc = jnp.transpose(x_nchw, (0, 2, 3, 1)).astype(jnp.float32)

    # zero-pad (+1 extra bottom row of strip slack), flatten spatial, and
    # build the strip im2col: x_taps[n, p, t*Cin + c] = x_pad_flat[n, p+off_t, c]
    xpad = jnp.pad(x_nhwc, ((0, 0), (pad, pad + 1), (pad, pad), (0, 0)))
    x_flat = xpad.reshape(N, XLEN, Cin)
    taps = [x_flat[:, ky * WP + kx: ky * WP + kx + HWP, :]
            for ky in range(K) for kx in range(K)]
    x_taps = jnp.stack(taps, axis=2).reshape(N, HWP, K * K * Cin)
    x_taps = x_taps.astype(jnp.bfloat16)

    # shortcut input: 2x2 average pool done in the wrapper (cheap XLA op),
    # so the kernel only does the 1x1 matmul.
    x_pool = x_nhwc.reshape(N, Ho, 2, Wo, 2, Cin).mean(axis=(2, 4))
    x_pool = x_pool.reshape(N, Ho * Wo, Cin).astype(jnp.bfloat16)

    # repack conv weights as bf16 matmul operands (accumulation stays f32)
    w1_p = jnp.transpose(w1, (2, 3, 1, 0)).reshape(K * K * Cin, Cout)
    w1_p = w1_p.astype(jnp.bfloat16)
    w2_p = jnp.transpose(w2, (2, 3, 1, 0)).reshape(K * K, Cout, Cout)
    w2_p = w2_p.astype(jnp.bfloat16)
    wsc_p = wsc[:, :, 0, 0].T.astype(jnp.bfloat16)                 # (Cin, Cout)
    b1_p = b1.reshape(1, Cout).astype(jnp.float32)
    bout_p = (b2 + bsc).reshape(1, Cout).astype(jnp.float32)       # folded bias

    # tiny banded 2x2 average-pool matrix (one output row pair per matmul)
    pool_np = np.zeros((Wo, 2 * WP), np.float32)
    jj = np.arange(Wo)
    for dx in range(2):
        pool_np[jj, 2 * jj + dx] = 0.25
        pool_np[jj, WP + 2 * jj + dx] = 0.25
    pool_mat = jnp.asarray(pool_np, dtype=jnp.bfloat16)

    kernel = _make_kernel(H, W, Cin, Cout, K, pad)

    out_flat = pl.pallas_call(
        kernel,
        out_shape=jax.ShapeDtypeStruct((N, Ho * Wo, Cout), jnp.float32),
        grid_spec=pltpu.PrefetchScalarGridSpec(
            num_scalar_prefetch=0,
            grid=(N,),
            in_specs=[
                pl.BlockSpec((1, HWP, K * K * Cin), lambda n: (n, 0, 0)),
                pl.BlockSpec((1, Ho * Wo, Cin), lambda n: (n, 0, 0)),
                pl.BlockSpec((K * K * Cin, Cout), lambda n: (0, 0)),
                pl.BlockSpec((1, Cout), lambda n: (0, 0)),
                pl.BlockSpec((K * K, Cout, Cout), lambda n: (0, 0, 0)),
                pl.BlockSpec((Cin, Cout), lambda n: (0, 0)),
                pl.BlockSpec((1, Cout), lambda n: (0, 0)),
                pl.BlockSpec((Wo, 2 * WP), lambda n: (0, 0)),
            ],
            out_specs=pl.BlockSpec((1, Ho * Wo, Cout), lambda n: (n, 0, 0)),
            scratch_shapes=[pltpu.VMEM((XLEN, Cout), jnp.bfloat16),
                            pltpu.VMEM((HWP, Cout), jnp.bfloat16)],
        ),
        compiler_params=pltpu.CompilerParams(
            dimension_semantics=("parallel",)),   # shard batch across TCs (v7x)
    )(x_taps, x_pool, w1_p, b1_p, w2_p, wsc_p, bout_p, pool_mat)

    # flattened NHWC -> NCHW
    return out_flat.reshape(N, Ho, Wo, Cout).transpose(0, 3, 1, 2)


# ---------------- deterministic parameter setup (glue) ----------------

def xavier_uniform(key, shape, gain=1.0):
    fan_out = shape[0] * shape[2] * shape[3]
    fan_in = shape[1] * shape[2] * shape[3]
    bound = gain * math.sqrt(6.0 / (fan_in + fan_out))
    return jax.random.uniform(key, shape, jnp.float32, -bound, bound)


def conv_bias_init(key, cout, fan_in):
    bound = 1.0 / math.sqrt(fan_in)
    return jax.random.uniform(key, (cout,), jnp.float32, -bound, bound)


def spectral_norm(w, key, n_power_iterations=1, eps=1e-12):
    """torch.nn.utils.spectral_norm semantics: one power iteration, W / sigma."""
    cout = w.shape[0]
    w_mat = w.reshape(cout, -1)
    u = jax.random.normal(key, (cout,), jnp.float32)
    u = u / (jnp.linalg.norm(u) + eps)
    v = None
    for _ in range(n_power_iterations):
        v = w_mat.T @ u
        v = v / (jnp.linalg.norm(v) + eps)
        u = w_mat @ v
        u = u / (jnp.linalg.norm(u) + eps)
    sigma = u @ (w_mat @ v)
    return w / sigma


if __name__ == "__main__":
    N, Cin, Cout, H, W, K, pad = 2, 4, 8, 16, 16, 3, 1
    keys = jax.random.split(jax.random.PRNGKey(0), 8)

    w1 = xavier_uniform(keys[0], (Cout, Cin, K, K), gain=math.sqrt(2.0))
    b1 = conv_bias_init(keys[1], Cout, Cin * K * K)
    w2 = xavier_uniform(keys[2], (Cout, Cout, K, K), gain=math.sqrt(2.0))
    b2 = conv_bias_init(keys[3], Cout, Cout * K * K)
    wsc = xavier_uniform(keys[4], (Cout, Cin, 1, 1), gain=1.0)
    bsc = conv_bias_init(keys[5], Cout, Cin)

    w1n = spectral_norm(w1, jax.random.fold_in(keys[6], 0))
    w2n = spectral_norm(w2, jax.random.fold_in(keys[6], 1))
    wscn = spectral_norm(wsc, jax.random.fold_in(keys[6], 2))

    x = jax.random.normal(keys[7], (N, Cin, H, W), jnp.float32)

    params = (w1n, b1, w2n, b2, wscn, bsc)
    out = jax.block_until_ready(optimized_block_forward(x, params))

    # pure-JAX f32 reference for correctness (kernel uses bf16 operands,
    # so tolerances are loosened accordingly)
    dn = ("NCHW", "OIHW", "NCHW")

    def conv(xx, w, b, p):
        y = lax.conv_general_dilated(xx, w, (1, 1), [(p, p), (p, p)],
                                     dimension_numbers=dn)
        return y + b[None, :, None, None]

    def avgpool2(xx):
        n, c, h, w = xx.shape
        return xx.reshape(n, c, h // 2, 2, w // 2, 2).mean(axis=(3, 5))

    h_ref = jnp.maximum(conv(x, w1n, b1, pad), 0.0)
    ref = avgpool2(conv(h_ref, w2n, b2, pad)) + conv(avgpool2(x), wscn, bsc, 0)

    assert out.shape == (N, Cout, H // 2, W // 2)
    assert jnp.allclose(out, ref, rtol=5e-2, atol=5e-2)
    print("KERNEL_OK")
</pallas_src>

<mosaic_0001>
module attributes {stable_mosaic.version = 11 : i64} {
  func.func @kernel(%arg0: i32, %arg1: memref<1x288x36xbf16, #tpu.memory_space<vmem>>, %arg2: memref<1x64x4xbf16, #tpu.memory_space<vmem>>, %arg3: memref<36x8xbf16, #tpu.memory_space<vmem>>, %arg4: memref<1x8xf32, #tpu.memory_space<vmem>>, %arg5: memref<9x8x8xbf16, #tpu.memory_space<vmem>>, %arg6: memref<4x8xbf16, #tpu.memory_space<vmem>>, %arg7: memref<1x8xf32, #tpu.memory_space<vmem>>, %arg8: memref<8x36xbf16, #tpu.memory_space<vmem>>, %arg9: memref<1x64x8xf32, #tpu.memory_space<vmem>>, %arg10: memref<342x8xbf16, #tpu.memory_space<vmem>>, %arg11: memref<288x8xbf16, #tpu.memory_space<vmem>>) attributes {dimension_semantics = [#tpu.dimension_semantics<parallel>], iteration_bounds = array<i64: 2>, scalar_prefetch = 0 : i64, scratch_operands = 2 : i64, tpu.core_type = #tpu.core_type<tc>, window_params = [{transform_indices = @transform_0, window_bounds = array<i64: 1, 288, 36>}, {transform_indices = @transform_1, window_bounds = array<i64: 1, 64, 4>}, {pipeline_mode = #tpu.pipeline_mode<synchronous>, transform_indices = @transform_2, window_bounds = array<i64: 36, 8>}, {pipeline_mode = #tpu.pipeline_mode<synchronous>, transform_indices = @transform_3, window_bounds = array<i64: 1, 8>}, {pipeline_mode = #tpu.pipeline_mode<synchronous>, transform_indices = @transform_4, window_bounds = array<i64: 9, 8, 8>}, {pipeline_mode = #tpu.pipeline_mode<synchronous>, transform_indices = @transform_5, window_bounds = array<i64: 4, 8>}, {pipeline_mode = #tpu.pipeline_mode<synchronous>, transform_indices = @transform_6, window_bounds = array<i64: 1, 8>}, {pipeline_mode = #tpu.pipeline_mode<synchronous>, transform_indices = @transform_7, window_bounds = array<i64: 8, 36>}, {transform_indices = @transform_8, window_bounds = array<i64: 1, 64, 8>}]} {
    %c0 = arith.constant 0 : index
    %c0_0 = arith.constant 0 : index
    %0 = vector.load %arg3[%c0, %c0_0] : memref<36x8xbf16, #tpu.memory_space<vmem>>, vector<36x8xbf16>
    %c0_1 = arith.constant 0 : index
    %c0_2 = arith.constant 0 : index
    %c0_3 = arith.constant 0 : index
    %1 = vector.load %arg5[%c0_1, %c0_2, %c0_3] : memref<9x8x8xbf16, #tpu.memory_space<vmem>>, vector<9x8x8xbf16>
    %c0_4 = arith.constant 0 : index
    %c0_5 = arith.constant 0 : index
    %2 = vector.load %arg6[%c0_4, %c0_5] : memref<4x8xbf16, #tpu.memory_space<vmem>>, vector<4x8xbf16>
    %c0_6 = arith.constant 0 : index
    %c0_7 = arith.constant 0 : index
    %3 = vector.load %arg4[%c0_6, %c0_7] : memref<1x8xf32, #tpu.memory_space<vmem>>, vector<1x8xf32>
    %c0_8 = arith.constant 0 : index
    %c0_9 = arith.constant 0 : index
    %4 = vector.load %arg7[%c0_8, %c0_9] : memref<1x8xf32, #tpu.memory_space<vmem>>, vector<1x8xf32>
    %c0_10 = arith.constant 0 : index
    %c0_11 = arith.constant 0 : index
    %5 = vector.load %arg8[%c0_10, %c0_11] : memref<8x36xbf16, #tpu.memory_space<vmem>>, vector<8x36xbf16>
    %cst = arith.constant 0.000000e+00 : bf16
    %6 = vector.broadcast %cst : bf16 to vector<342x8xbf16>
    %c0_12 = arith.constant 0 : index
    %c0_13 = arith.constant 0 : index
    %7 = vector.load %arg10[%c0_12, %c0_13] : memref<342x8xbf16, #tpu.memory_space<vmem>>, vector<342x8xbf16>
    tpu.vector_store %arg10[%c0_12, %c0_13], %6 {strides = array<i32>} : memref<342x8xbf16, #tpu.memory_space<vmem>>, vector<342x8xbf16>,
    %c0_14 = arith.constant 0 : index
    %c0_15 = arith.constant 0 : index
    %c0_16 = arith.constant 0 : index
    %8 = vector.load %arg1[%c0_14, %c0_15, %c0_16] : memref<1x288x36xbf16, #tpu.memory_space<vmem>>, vector<1x288x36xbf16>
    %9 = vector.shape_cast %8 : vector<1x288x36xbf16> to vector<288x36xbf16>
    %cst_17 = arith.constant dense<0.000000e+00> : vector<288x8xf32>
    %10 = tpu.matmul %9, %0, %cst_17 {dimension_numbers = #tpu.dot_dimension_numbers<[1], [0], [0], [1], [0, 0, 1, 1], [], []>} : vector<288x36xbf16>, vector<36x8xbf16>, vector<288x8xf32> -> vector<288x8xf32>
    %11 = tpu.iota {dimensions = array<i32: 0>} : vector<288x8xi32>
    %c18_i32 = arith.constant 18 : i32
    %c0_i32 = arith.constant 0 : i32
    %12 = arith.cmpi eq, %c18_i32, %c0_i32 : i32
    %c1_i32 = arith.constant 1 : i32
    %13 = arith.select %12, %c1_i32, %c18_i32 : i32
    %14 = vector.broadcast %13 : i32 to vector<288x8xi32>
    %15 = arith.remsi %11, %14 : vector<288x8xi32>
    %c0_i32_18 = arith.constant 0 : i32
    %16 = vector.broadcast %c0_i32_18 : i32 to vector<288x8xi32>
    %17 = arith.cmpi ne, %15, %16 : vector<288x8xi32>
    %c0_i32_19 = arith.constant 0 : i32
    %18 = vector.broadcast %c0_i32_19 : i32 to vector<288x8xi32>
    %19 = arith.cmpi slt, %15, %18 : vector<288x8xi32>
    %c0_i32_20 = arith.constant 0 : i32
    %20 = arith.cmpi slt, %13, %c0_i32_20 : i32
    %21 = vector.broadcast %20 : i1 to vector<288x8xi1>
    %22 = vector.broadcast %21 : vector<288x8xi1> to vector<288x8xi1>
    %23 = arith.xori %19, %22 : vector<288x8xi1>
    %24 = arith.andi %23, %17 : vector<288x8xi1>
    %25 = vector.broadcast %13 : i32 to vector<288x8xi32>
    %26 = arith.addi %15, %25 : vector<288x8xi32>
    %27 = arith.select %24, %26, %15 : vector<288x8xi1>, vector<288x8xi32>
    %c16_i32 = arith.constant 16 : i32
    %28 = vector.broadcast %c16_i32 : i32 to vector<288x8xi32>
    %29 = arith.cmpi slt, %27, %28 : vector<288x8xi32>
    %30 = vector.broadcast %3 : vector<1x8xf32> to vector<288x8xf32>
    %31 = arith.addf %10, %30 : vector<288x8xf32>
    %cst_21 = arith.constant 0.000000e+00 : f32
    %32 = vector.broadcast %cst_21 : f32 to vector<288x8xf32>
    %33 = arith.maximumf %31, %32 : vector<288x8xf32>
    %cst_22 = arith.constant 0.000000e+00 : f32
    %34 = vector.broadcast %cst_22 : f32 to vector<288x8xf32>
    %35 = arith.select %29, %33, %34 : vector<288x8xi1>, vector<288x8xf32>
    %36 = arith.truncf %35 : vector<288x8xf32> to vector<288x8xbf16>
    %c19 = arith.constant 19 : index
    %c0_23 = arith.constant 0 : index
    %37 = vector.load %arg10[%c19, %c0_23] : memref<342x8xbf16, #tpu.memory_space<vmem>>, vector<288x8xbf16>
    tpu.vector_store %arg10[%c19, %c0_23], %36 {strides = array<i32>} : memref<342x8xbf16, #tpu.memory_space<vmem>>, vector<288x8xbf16>,
    %cst_24 = arith.constant 0.000000e+00 : f32
    %38 = vector.broadcast %cst_24 : f32 to vector<288x8xf32>
    %c0_25 = arith.constant 0 : index
    %c0_26 = arith.constant 0 : index
    %39 = vector.load %arg10[%c0_25, %c0_26] : memref<342x8xbf16, #tpu.memory_space<vmem>>, vector<288x8xbf16>
    %40 = vector.extract_strided_slice %1 {offsets = [0, 0, 0], sizes = [1, 8, 8], strides = [1, 1, 1]} : vector<9x8x8xbf16> to vector<1x8x8xbf16>
    %41 = vector.shape_cast %40 : vector<1x8x8xbf16> to vector<8x8xbf16>
    %cst_27 = arith.constant dense<0.000000e+00> : vector<288x8xf32>
    %42 = tpu.matmul %39, %41, %cst_27 {dimension_numbers = #tpu.dot_dimension_numbers<[1], [0], [0], [1], [0, 0, 1, 1], [], []>} : vector<288x8xbf16>, vector<8x8xbf16>, vector<288x8xf32> -> vector<288x8xf32>
    %43 = arith.addf %38, %42 : vector<288x8xf32>
    %c1 = arith.constant 1 : index
    %c0_28 = arith.constant 0 : index
    %44 = vector.load %arg10[%c1, %c0_28] : memref<342x8xbf16, #tpu.memory_space<vmem>>, vector<288x8xbf16>
    %45 = vector.extract_strided_slice %1 {offsets = [1, 0, 0], sizes = [1, 8, 8], strides = [1, 1, 1]} : vector<9x8x8xbf16> to vector<1x8x8xbf16>
    %46 = vector.shape_cast %45 : vector<1x8x8xbf16> to vector<8x8xbf16>
    %cst_29 = arith.constant dense<0.000000e+00> : vector<288x8xf32>
    %47 = tpu.matmul %44, %46, %cst_29 {dimension_numbers = #tpu.dot_dimension_numbers<[1], [0], [0], [1], [0, 0, 1, 1], [], []>} : vector<288x8xbf16>, vector<8x8xbf16>, vector<288x8xf32> -> vector<288x8xf32>
    %48 = arith.addf %43, %47 : vector<288x8xf32>
    %c2 = arith.constant 2 : index
    %c0_30 = arith.constant 0 : index
    %49 = vector.load %arg10[%c2, %c0_30] : memref<342x8xbf16, #tpu.memory_space<vmem>>, vector<288x8xbf16>
    %50 = vector.extract_strided_slice %1 {offsets = [2, 0, 0], sizes = [1, 8, 8], strides = [1, 1, 1]} : vector<9x8x8xbf16> to vector<1x8x8xbf16>
    %51 = vector.shape_cast %50 : vector<1x8x8xbf16> to vector<8x8xbf16>
    %cst_31 = arith.constant dense<0.000000e+00> : vector<288x8xf32>
    %52 = tpu.matmul %49, %51, %cst_31 {dimension_numbers = #tpu.dot_dimension_numbers<[1], [0], [0], [1], [0, 0, 1, 1], [], []>} : vector<288x8xbf16>, vector<8x8xbf16>, vector<288x8xf32> -> vector<288x8xf32>
    %53 = arith.addf %48, %52 : vector<288x8xf32>
    %c18 = arith.constant 18 : index
    %c0_32 = arith.constant 0 : index
    %54 = vector.load %arg10[%c18, %c0_32] : memref<342x8xbf16, #tpu.memory_space<vmem>>, vector<288x8xbf16>
    %55 = vector.extract_strided_slice %1 {offsets = [3, 0, 0], sizes = [1, 8, 8], strides = [1, 1, 1]} : vector<9x8x8xbf16> to vector<1x8x8xbf16>
    %56 = vector.shape_cast %55 : vector<1x8x8xbf16> to vector<8x8xbf16>
    %cst_33 = arith.constant dense<0.000000e+00> : vector<288x8xf32>
    %57 = tpu.matmul %54, %56, %cst_33 {dimension_numbers = #tpu.dot_dimension_numbers<[1], [0], [0], [1], [0, 0, 1, 1], [], []>} : vector<288x8xbf16>, vector<8x8xbf16>, vector<288x8xf32> -> vector<288x8xf32>
    %58 = arith.addf %53, %57 : vector<288x8xf32>
    %c19_34 = arith.constant 19 : index
    %c0_35 = arith.constant 0 : index
    %59 = vector.load %arg10[%c19_34, %c0_35] : memref<342x8xbf16, #tpu.memory_space<vmem>>, vector<288x8xbf16>
    %60 = vector.extract_strided_slice %1 {offsets = [4, 0, 0], sizes = [1, 8, 8], strides = [1, 1, 1]} : vector<9x8x8xbf16> to vector<1x8x8xbf16>
    %61 = vector.shape_cast %60 : vector<1x8x8xbf16> to vector<8x8xbf16>
    %cst_36 = arith.constant dense<0.000000e+00> : vector<288x8xf32>
    %62 = tpu.matmul %59, %61, %cst_36 {dimension_numbers = #tpu.dot_dimension_numbers<[1], [0], [0], [1], [0, 0, 1, 1], [], []>} : vector<288x8xbf16>, vector<8x8xbf16>, vector<288x8xf32> -> vector<288x8xf32>
    %63 = arith.addf %58, %62 : vector<288x8xf32>
    %c20 = arith.constant 20 : index
    %c0_37 = arith.constant 0 : index
    %64 = vector.load %arg10[%c20, %c0_37] : memref<342x8xbf16, #tpu.memory_space<vmem>>, vector<288x8xbf16>
    %65 = vector.extract_strided_slice %1 {offsets = [5, 0, 0], sizes = [1, 8, 8], strides = [1, 1, 1]} : vector<9x8x8xbf16> to vector<1x8x8xbf16>
    %66 = vector.shape_cast %65 : vector<1x8x8xbf16> to vector<8x8xbf16>
    %cst_38 = arith.constant dense<0.000000e+00> : vector<288x8xf32>
    %67 = tpu.matmul %64, %66, %cst_38 {dimension_numbers = #tpu.dot_dimension_numbers<[1], [0], [0], [1], [0, 0, 1, 1], [], []>} : vector<288x8xbf16>, vector<8x8xbf16>, vector<288x8xf32> -> vector<288x8xf32>
    %68 = arith.addf %63, %67 : vector<288x8xf32>
    %c36 = arith.constant 36 : index
    %c0_39 = arith.constant 0 : index
    %69 = vector.load %arg10[%c36, %c0_39] : memref<342x8xbf16, #tpu.memory_space<vmem>>, vector<288x8xbf16>
    %70 = vector.extract_strided_slice %1 {offsets = [6, 0, 0], sizes = [1, 8, 8], strides = [1, 1, 1]} : vector<9x8x8xbf16> to vector<1x8x8xbf16>
    %71 = vector.shape_cast %70 : vector<1x8x8xbf16> to vector<8x8xbf16>
    %cst_40 = arith.constant dense<0.000000e+00> : vector<288x8xf32>
    %72 = tpu.matmul %69, %71, %cst_40 {dimension_numbers = #tpu.dot_dimension_numbers<[1], [0], [0], [1], [0, 0, 1, 1], [], []>} : vector<288x8xbf16>, vector<8x8xbf16>, vector<288x8xf32> -> vector<288x8xf32>
    %73 = arith.addf %68, %72 : vector<288x8xf32>
    %c37 = arith.constant 37 : index
    %c0_41 = arith.constant 0 : index
    %74 = vector.load %arg10[%c37, %c0_41] : memref<342x8xbf16, #tpu.memory_space<vmem>>, vector<288x8xbf16>
    %75 = vector.extract_strided_slice %1 {offsets = [7, 0, 0], sizes = [1, 8, 8], strides = [1, 1, 1]} : vector<9x8x8xbf16> to vector<1x8x8xbf16>
    %76 = vector.shape_cast %75 : vector<1x8x8xbf16> to vector<8x8xbf16>
    %cst_42 = arith.constant dense<0.000000e+00> : vector<288x8xf32>
    %77 = tpu.matmul %74, %76, %cst_42 {dimension_numbers = #tpu.dot_dimension_numbers<[1], [0], [0], [1], [0, 0, 1, 1], [], []>} : vector<288x8xbf16>, vector<8x8xbf16>, vector<288x8xf32> -> vector<288x8xf32>
    %78 = arith.addf %73, %77 : vector<288x8xf32>
    %c38 = arith.constant 38 : index
    %c0_43 = arith.constant 0 : index
    %79 = vector.load %arg10[%c38, %c0_43] : memref<342x8xbf16, #tpu.memory_space<vmem>>, vector<288x8xbf16>
    %80 = vector.extract_strided_slice %1 {offsets = [8, 0, 0], sizes = [1, 8, 8], strides = [1, 1, 1]} : vector<9x8x8xbf16> to vector<1x8x8xbf16>
    %81 = vector.shape_cast %80 : vector<1x8x8xbf16> to vector<8x8xbf16>
    %cst_44 = arith.constant dense<0.000000e+00> : vector<288x8xf32>
    %82 = tpu.matmul %79, %81, %cst_44 {dimension_numbers = #tpu.dot_dimension_numbers<[1], [0], [0], [1], [0, 0, 1, 1], [], []>} : vector<288x8xbf16>, vector<8x8xbf16>, vector<288x8xf32> -> vector<288x8xf32>
    %83 = arith.addf %78, %82 : vector<288x8xf32>
    %84 = arith.truncf %83 : vector<288x8xf32> to vector<288x8xbf16>
    %c0_45 = arith.constant 0 : index
    %c0_46 = arith.constant 0 : index
    %85 = vector.load %arg11[%c0_45, %c0_46] : memref<288x8xbf16, #tpu.memory_space<vmem>>, vector<288x8xbf16>
    tpu.vector_store %arg11[%c0_45, %c0_46], %84 {strides = array<i32>} : memref<288x8xbf16, #tpu.memory_space<vmem>>, vector<288x8xbf16>,
    %c0_47 = arith.constant 0 : index
    %c0_48 = arith.constant 0 : index
    %c0_49 = arith.constant 0 : index
    %86 = vector.load %arg2[%c0_47, %c0_48, %c0_49] : memref<1x64x4xbf16, #tpu.memory_space<vmem>>, vector<1x64x4xbf16>
    %87 = vector.shape_cast %86 : vector<1x64x4xbf16> to vector<64x4xbf16>
    %cst_50 = arith.constant dense<0.000000e+00> : vector<64x8xf32>
    %88 = tpu.matmul %87, %2, %cst_50 {dimension_numbers = #tpu.dot_dimension_numbers<[1], [0], [0], [1], [0, 0, 1, 1], [], []>} : vector<64x4xbf16>, vector<4x8xbf16>, vector<64x8xf32> -> vector<64x8xf32>
    %89 = vector.broadcast %4 : vector<1x8xf32> to vector<64x8xf32>
    %90 = arith.addf %88, %89 : vector<64x8xf32>
    %c0_51 = arith.constant 0 : index
    %c0_52 = arith.constant 0 : index
    %91 = vector.load %arg11[%c0_51, %c0_52] : memref<288x8xbf16, #tpu.memory_space<vmem>>, vector<36x8xbf16>
    %cst_53 = arith.constant dense<0.000000e+00> : vector<8x8xf32>
    %92 = tpu.matmul %5, %91, %cst_53 {dimension_numbers = #tpu.dot_dimension_numbers<[1], [0], [0], [1], [0, 0, 1, 1], [], []>} : vector<8x36xbf16>, vector<36x8xbf16>, vector<8x8xf32> -> vector<8x8xf32>
    %c36_54 = arith.constant 36 : index
    %c0_55 = arith.constant 0 : index
    %93 = vector.load %arg11[%c36_54, %c0_55] : memref<288x8xbf16, #tpu.memory_space<vmem>>, vector<36x8xbf16>
    %cst_56 = arith.constant dense<0.000000e+00> : vector<8x8xf32>
    %94 = tpu.matmul %5, %93, %cst_56 {dimension_numbers = #tpu.dot_dimension_numbers<[1], [0], [0], [1], [0, 0, 1, 1], [], []>} : vector<8x36xbf16>, vector<36x8xbf16>, vector<8x8xf32> -> vector<8x8xf32>
    %c72 = arith.constant 72 : index
    %c0_57 = arith.constant 0 : index
    %95 = vector.load %arg11[%c72, %c0_57] : memref<288x8xbf16, #tpu.memory_space<vmem>>, vector<36x8xbf16>
    %cst_58 = arith.constant dense<0.000000e+00> : vector<8x8xf32>
    %96 = tpu.matmul %5, %95, %cst_58 {dimension_numbers = #tpu.dot_dimension_numbers<[1], [0], [0], [1], [0, 0, 1, 1], [], []>} : vector<8x36xbf16>, vector<36x8xbf16>, vector<8x8xf32> -> vector<8x8xf32>
    %c108 = arith.constant 108 : index
    %c0_59 = arith.constant 0 : index
    %97 = vector.load %arg11[%c108, %c0_59] : memref<288x8xbf16, #tpu.memory_space<vmem>>, vector<36x8xbf16>
    %cst_60 = arith.constant dense<0.000000e+00> : vector<8x8xf32>
    %98 = tpu.matmul %5, %97, %cst_60 {dimension_numbers = #tpu.dot_dimension_numbers<[1], [0], [0], [1], [0, 0, 1, 1], [], []>} : vector<8x36xbf16>, vector<36x8xbf16>, vector<8x8xf32> -> vector<8x8xf32>
    %c144 = arith.constant 144 : index
    %c0_61 = arith.constant 0 : index
    %99 = vector.load %arg11[%c144, %c0_61] : memref<288x8xbf16, #tpu.memory_space<vmem>>, vector<36x8xbf16>
    %cst_62 = arith.constant dense<0.000000e+00> : vector<8x8xf32>
    %100 = tpu.matmul %5, %99, %cst_62 {dimension_numbers = #tpu.dot_dimension_numbers<[1], [0], [0], [1], [0, 0, 1, 1], [], []>} : vector<8x36xbf16>, vector<36x8xbf16>, vector<8x8xf32> -> vector<8x8xf32>
    %c180 = arith.constant 180 : index
    %c0_63 = arith.constant 0 : index
    %101 = vector.load %arg11[%c180, %c0_63] : memref<288x8xbf16, #tpu.memory_space<vmem>>, vector<36x8xbf16>
    %cst_64 = arith.constant dense<0.000000e+00> : vector<8x8xf32>
    %102 = tpu.matmul %5, %101, %cst_64 {dimension_numbers = #tpu.dot_dimension_numbers<[1], [0], [0], [1], [0, 0, 1, 1], [], []>} : vector<8x36xbf16>, vector<36x8xbf16>, vector<8x8xf32> -> vector<8x8xf32>
    %c216 = arith.constant 216 : index
    %c0_65 = arith.constant 0 : index
    %103 = vector.load %arg11[%c216, %c0_65] : memref<288x8xbf16, #tpu.memory_space<vmem>>, vector<36x8xbf16>
    %cst_66 = arith.constant dense<0.000000e+00> : vector<8x8xf32>
    %104 = tpu.matmul %5, %103, %cst_66 {dimension_numbers = #tpu.dot_dimension_numbers<[1], [0], [0], [1], [0, 0, 1, 1], [], []>} : vector<8x36xbf16>, vector<36x8xbf16>, vector<8x8xf32> -> vector<8x8xf32>
    %c252 = arith.constant 252 : index
    %c0_67 = arith.constant 0 : index
    %105 = vector.load %arg11[%c252, %c0_67] : memref<288x8xbf16, #tpu.memory_space<vmem>>, vector<36x8xbf16>
    %cst_68 = arith.constant dense<0.000000e+00> : vector<8x8xf32>
    %106 = tpu.matmul %5, %105, %cst_68 {dimension_numbers = #tpu.dot_dimension_numbers<[1], [0], [0], [1], [0, 0, 1, 1], [], []>} : vector<8x36xbf16>, vector<36x8xbf16>, vector<8x8xf32> -> vector<8x8xf32>
    %107 = tpu.concatenate %92, %94, %96, %98, %100, %102, %104, %106 in 0 : vector<8x8xf32>, vector<8x8xf32>, vector<8x8xf32>, vector<8x8xf32>, vector<8x8xf32>, vector<8x8xf32>, vector<8x8xf32>, vector<8x8xf32> -> vector<64x8xf32>
    %108 = arith.addf %107, %90 : vector<64x8xf32>
    %c0_69 = arith.constant 0 : index
    %c0_70 = arith.constant 0 : index
    %c0_71 = arith.constant 0 : index
    %109 = vector.load %arg9[%c0_69, %c0_70, %c0_71] : memref<1x64x8xf32, #tpu.memory_space<vmem>>, vector<1x64x8xf32>
    %110 = vector.shape_cast %109 : vector<1x64x8xf32> to vector<64x8xf32>
    %111 = vector.shape_cast %108 : vector<64x8xf32> to vector<1x64x8xf32>
    tpu.vector_store %arg9[%c0_69, %c0_70, %c0_71], %111 {strides = array<i32>} : memref<1x64x8xf32, #tpu.memory_space<vmem>>, vector<1x64x8xf32>,
    return
  }
  func.func @transform_0(%arg0: i32) -> (i32, i32, i32) {
    %c0_i32 = arith.constant 0 : i32
    %c0_i32_0 = arith.constant 0 : i32
    %c0_i32_1 = arith.constant 0 : i32
    return %arg0, %c0_i32, %c0_i32_0 : i32, i32, i32
  }
  func.func @transform_1(%arg0: i32) -> (i32, i32, i32) {
    %c0_i32 = arith.constant 0 : i32
    %c0_i32_0 = arith.constant 0 : i32
    %c0_i32_1 = arith.constant 0 : i32
    return %arg0, %c0_i32, %c0_i32_0 : i32, i32, i32
  }
  func.func @transform_2(%arg0: i32) -> (i32, i32) {
    %c0_i32 = arith.constant 0 : i32
    %c0_i32_0 = arith.constant 0 : i32
    %c0_i32_1 = arith.constant 0 : i32
    return %c0_i32, %c0_i32_0 : i32, i32
  }
  func.func @transform_3(%arg0: i32) -> (i32, i32) {
    %c0_i32 = arith.constant 0 : i32
    %c0_i32_0 = arith.constant 0 : i32
    %c0_i32_1 = arith.constant 0 : i32
    return %c0_i32, %c0_i32_0 : i32, i32
  }
  func.func @transform_4(%arg0: i32) -> (i32, i32, i32) {
    %c0_i32 = arith.constant 0 : i32
    %c0_i32_0 = arith.constant 0 : i32
    %c0_i32_1 = arith.constant 0 : i32
    %c0_i32_2 = arith.constant 0 : i32
    return %c0_i32, %c0_i32_0, %c0_i32_1 : i32, i32, i32
  }
  func.func @transform_5(%arg0: i32) -> (i32, i32) {
    %c0_i32 = arith.constant 0 : i32
    %c0_i32_0 = arith.constant 0 : i32
    %c0_i32_1 = arith.constant 0 : i32
    return %c0_i32, %c0_i32_0 : i32, i32
  }
  func.func @transform_6(%arg0: i32) -> (i32, i32) {
    %c0_i32 = arith.constant 0 : i32
    %c0_i32_0 = arith.constant 0 : i32
    %c0_i32_1 = arith.constant 0 : i32
    return %c0_i32, %c0_i32_0 : i32, i32
  }
  func.func @transform_7(%arg0: i32) -> (i32, i32) {
    %c0_i32 = arith.constant 0 : i32
    %c0_i32_0 = arith.constant 0 : i32
    %c0_i32_1 = arith.constant 0 : i32
    return %c0_i32, %c0_i32_0 : i32, i32
  }
  func.func @transform_8(%arg0: i32) -> (i32, i32, i32) {
    %c0_i32 = arith.constant 0 : i32
    %c0_i32_0 = arith.constant 0 : i32
    %c0_i32_1 = arith.constant 0 : i32
    return %arg0, %c0_i32, %c0_i32_0 : i32, i32, i32
  }
}

</mosaic_0001>

<llo_original>
// kernel: tpu_custom_call.1
$region0: #{tpu_custom_call.1}
  #allocation0 [shape = 'u32[]', space=smem, size = 0x4, offset = 0x4, fixed_abs, tag = 'smem constant byte address 0x4 - core index']
  #allocation1 [shape = 'u32[144,128]{1,0:T(1,128)}', space=vmem, size = 0x12000, scoped, tag = 'internal scratch']
  #allocation2 [shape = 'bf16[342,8]{1,0:T(8,128)(2,1)}', space=vmem, size = 0x15800, scoped, tag = 'scratch operand']
  #allocation3 [shape = 'bf16[288,8]{1,0:T(16,128)(2,1)}', space=vmem, size = 0x12000, scoped, tag = 'scratch operand']
  %s0 = inlined_call_operand.vmem [shape: bf16[2,288,36], index: 0, kind: input, shape index: {}]
  %s1 = inlined_call_operand.vmem [shape: bf16[2,64,4], index: 1, kind: input, shape index: {}]
  %s2 = inlined_call_operand.vmem [shape: bf16[36,8], index: 2, kind: input, shape index: {}]
  %s3 = inlined_call_operand.vmem [shape: f32[1,8], index: 3, kind: input, shape index: {}]
  %s4 = inlined_call_operand.vmem [shape: bf16[9,8,8], index: 4, kind: input, shape index: {}]
  %s5 = inlined_call_operand.vmem [shape: bf16[4,8], index: 5, kind: input, shape index: {}]
  %s6 = inlined_call_operand.vmem [shape: f32[1,8], index: 6, kind: input, shape index: {}]
  %s7 = inlined_call_operand.vmem [shape: bf16[8,36], index: 7, kind: input, shape index: {}]
  %s8 = inlined_call_operand.vmem [shape: f32[2,64,8], index: 8, kind: output, shape index: {}]
  %s9 = sld [smem:[#allocation0]]
  $region65: #{tpu_custom_call.1} parent=0
    _
  %s11 = ssub.s32 1, %s9
  %s12 = scalar_select 0, %s11, %s9
  loop: start=0, step=1, limit=4
  $region2: #{tpu_custom_call.1} parent=0 // loop_pre_header
    _
  $region3: #{tpu_custom_call.1} parent=0 // loop_header
    %s14 = sphi 0, %s18
    %p15 = scmp.ge.s32.totalorder %s14, 4
    %s24 = sphi 0, %s26
    %s27 = sphi 0, %s24
    %s28 = sphi 0, %s27
    %s44 = sphi 0, %s28
    %s50 = sphi 0, %s52
    %s53 = sphi 0, %s50
    %s54 = sphi 0, %s53
    %s70 = sphi 0, %s54
    %s74 = sphi 0, %s74
    %s76 = sphi 0, %s74
    %s77 = sphi 0, %s76
    %s91 = sphi 0, %s77
    %s95 = sphi 0, %s95
    %s97 = sphi 0, %s95
    %s98 = sphi 0, %s97
    %s112 = sphi 0, %s98
    %s116 = sphi 0, %s116
    %s118 = sphi 0, %s116
    %s119 = sphi 0, %s118
    %s133 = sphi 0, %s119
    %s137 = sphi 0, %s137
    %s139 = sphi 0, %s137
    %s140 = sphi 0, %s139
    %s154 = sphi 0, %s140
    %s158 = sphi 0, %s158
    %s160 = sphi 0, %s158
    %s161 = sphi 0, %s160
    %s175 = sphi 0, %s161
    %s179 = sphi 0, %s179
    %s181 = sphi 0, %s179
    %s182 = sphi 0, %s181
    %s196 = sphi 0, %s182
    %s202 = sphi 0, %s204
    %s205 = sphi 0, %s202
    %s206 = sphi 0, %s205
    %s222 = sphi 0, %s206
  $region4: #{tpu_custom_call.1} parent=0 // loop_header_branch
    %17 = sbr.rel (%p15) target = $region8
  $region5: #{tpu_custom_call.1} parent=0 // loop_body
    %s19 = ssub.s32 %s14, 1
    %s20 = ssub.s32 %s14, 2
    %s21 = sadd.s32 %s14, 1
    %s22 = ssub.s32 %s14, %s21
    %p23 = scmp.eq.s32.totalorder %s22, 0
    %s25 = sadd.s32 %s24, 1
    %s26 = scalar_select %p23, %s24, %s25
    %p29 = pneg %p23
    %p30 = scmp.eq.s32.totalorder %s14, 1
    %p31 = por %p29, %p30
    %p32 = scmp.ne.s32.totalorder %s24, %s27
    %p33 = scmp.eq.s32.totalorder %s14, 0
    %p34 = por %p32, %p33
    %p35 = scmp.ne.s32.totalorder %s24, %s27
    %p36 = scmp.eq.s32.totalorder %s19, 1
    %p37 = por %p35, %p36
    %p38 = scmp.ne.s32.totalorder %s27, %s28
    %p39 = scmp.eq.s32.totalorder %s19, 0
    %p40 = por %p38, %p39
    %p41 = scmp.ne.s32.totalorder %s27, %s28
    %p42 = scmp.eq.s32.totalorder %s20, 1
    %p43 = por %p41, %p42
    %p45 = scmp.ne.s32.totalorder %s28, %s44
    %p46 = scmp.eq.s32.totalorder %s20, 0
    %p47 = por %p45, %p46
    %s48 = ssub.s32 %s14, %s21
    %p49 = scmp.eq.s32.totalorder %s48, 0
    %s51 = sadd.s32 %s50, 1
    %s52 = scalar_select %p49, %s50, %s51
    %p55 = pneg %p49
    %p56 = scmp.eq.s32.totalorder %s14, 1
    %p57 = por %p55, %p56
    %p58 = scmp.ne.s32.totalorder %s50, %s53
    %p59 = scmp.eq.s32.totalorder %s14, 0
    %p60 = por %p58, %p59
    %p61 = scmp.ne.s32.totalorder %s50, %s53
    %p62 = scmp.eq.s32.totalorder %s19, 1
    %p63 = por %p61, %p62
    %p64 = scmp.ne.s32.totalorder %s53, %s54
    %p65 = scmp.eq.s32.totalorder %s19, 0
    %p66 = por %p64, %p65
    %p67 = scmp.ne.s32.totalorder %s53, %s54
    %p68 = scmp.eq.s32.totalorder %s20, 1
    %p69 = por %p67, %p68
    %p71 = scmp.ne.s32.totalorder %s54, %s70
    %p72 = scmp.eq.s32.totalorder %s20, 0
    %p73 = por %p71, %p72
    %s75 = sadd.s32 %s74, 1
    %p78 = scmp.eq.s32.totalorder %s14, 1
    %p79 = scmp.ne.s32.totalorder %s74, %s76
    %p80 = scmp.eq.s32.totalorder %s14, 0
    %p81 = por %p79, %p80
    %p82 = scmp.ne.s32.totalorder %s74, %s76
    %p83 = scmp.eq.s32.totalorder %s19, 1
    %p84 = por %p82, %p83
    %p85 = scmp.ne.s32.totalorder %s76, %s77
    %p86 = scmp.eq.s32.totalorder %s19, 0
    %p87 = por %p85, %p86
    %p88 = scmp.ne.s32.totalorder %s76, %s77
    %p89 = scmp.eq.s32.totalorder %s20, 1
    %p90 = por %p88, %p89
    %p92 = scmp.ne.s32.totalorder %s77, %s91
    %p93 = scmp.eq.s32.totalorder %s20, 0
    %p94 = por %p92, %p93
    %s96 = sadd.s32 %s95, 1
    %p99 = scmp.eq.s32.totalorder %s14, 1
    %p100 = scmp.ne.s32.totalorder %s95, %s97
    %p101 = scmp.eq.s32.totalorder %s14, 0
    %p102 = por %p100, %p101
    %p103 = scmp.ne.s32.totalorder %s95, %s97
    %p104 = scmp.eq.s32.totalorder %s19, 1
    %p105 = por %p103, %p104
    %p106 = scmp.ne.s32.totalorder %s97, %s98
    %p107 = scmp.eq.s32.totalorder %s19, 0
    %p108 = por %p106, %p107
    %p109 = scmp.ne.s32.totalorder %s97, %s98
    %p110 = scmp.eq.s32.totalorder %s20, 1
    %p111 = por %p109, %p110
    %p113 = scmp.ne.s32.totalorder %s98, %s112
    %p114 = scmp.eq.s32.totalorder %s20, 0
    %p115 = por %p113, %p114
    %s117 = sadd.s32 %s116, 1
    %p120 = scmp.eq.s32.totalorder %s14, 1
    %p121 = scmp.ne.s32.totalorder %s116, %s118
    %p122 = scmp.eq.s32.totalorder %s14, 0
    %p123 = por %p121, %p122
    %p124 = scmp.ne.s32.totalorder %s116, %s118
    %p125 = scmp.eq.s32.totalorder %s19, 1
    %p126 = por %p124, %p125
    %p127 = scmp.ne.s32.totalorder %s118, %s119
    %p128 = scmp.eq.s32.totalorder %s19, 0
    %p129 = por %p127, %p128
    %p130 = scmp.ne.s32.totalorder %s118, %s119
    %p131 = scmp.eq.s32.totalorder %s20, 1
    %p132 = por %p130, %p131
    %p134 = scmp.ne.s32.totalorder %s119, %s133
    %p135 = scmp.eq.s32.totalorder %s20, 0
    %p136 = por %p134, %p135
    %s138 = sadd.s32 %s137, 1
    %p141 = scmp.eq.s32.totalorder %s14, 1
    %p142 = scmp.ne.s32.totalorder %s137, %s139
    %p143 = scmp.eq.s32.totalorder %s14, 0
    %p144 = por %p142, %p143
    %p145 = scmp.ne.s32.totalorder %s137, %s139
    %p146 = scmp.eq.s32.totalorder %s19, 1
    %p147 = por %p145, %p146
    %p148 = scmp.ne.s32.totalorder %s139, %s140
    %p149 = scmp.eq.s32.totalorder %s19, 0
    %p150 = por %p148, %p149
    %p151 = scmp.ne.s32.totalorder %s139, %s140
    %p152 = scmp.eq.s32.totalorder %s20, 1
    %p153 = por %p151, %p152
    %p155 = scmp.ne.s32.totalorder %s140, %s154
    %p156 = scmp.eq.s32.totalorder %s20, 0
    %p157 = por %p155, %p156
    %s159 = sadd.s32 %s158, 1
    %p162 = scmp.eq.s32.totalorder %s14, 1
    %p163 = scmp.ne.s32.totalorder %s158, %s160
    %p164 = scmp.eq.s32.totalorder %s14, 0
    %p165 = por %p163, %p164
    %p166 = scmp.ne.s32.totalorder %s158, %s160
    %p167 = scmp.eq.s32.totalorder %s19, 1
    %p168 = por %p166, %p167
    %p169 = scmp.ne.s32.totalorder %s160, %s161
    %p170 = scmp.eq.s32.totalorder %s19, 0
    %p171 = por %p169, %p170
    %p172 = scmp.ne.s32.totalorder %s160, %s161
    %p173 = scmp.eq.s32.totalorder %s20, 1
    %p174 = por %p172, %p173
    %p176 = scmp.ne.s32.totalorder %s161, %s175
    %p177 = scmp.eq.s32.totalorder %s20, 0
    %p178 = por %p176, %p177
    %s180 = sadd.s32 %s179, 1
    %p183 = scmp.eq.s32.totalorder %s14, 1
    %p184 = scmp.ne.s32.totalorder %s179, %s181
    %p185 = scmp.eq.s32.totalorder %s14, 0
    %p186 = por %p184, %p185
    %p187 = scmp.ne.s32.totalorder %s179, %s181
    %p188 = scmp.eq.s32.totalorder %s19, 1
    %p189 = por %p187, %p188
    %p190 = scmp.ne.s32.totalorder %s181, %s182
    %p191 = scmp.eq.s32.totalorder %s19, 0
    %p192 = por %p190, %p191
    %p193 = scmp.ne.s32.totalorder %s181, %s182
    %p194 = scmp.eq.s32.totalorder %s20, 1
    %p195 = por %p193, %p194
    %p197 = scmp.ne.s32.totalorder %s182, %s196
    %p198 = scmp.eq.s32.totalorder %s20, 0
    %p199 = por %p197, %p198
    %s200 = ssub.s32 %s14, %s21
    %p201 = scmp.eq.s32.totalorder %s200, 0
    %s203 = sadd.s32 %s202, 1
    %s204 = scalar_select %p201, %s202, %s203
    %p207 = pneg %p201
    %p208 = scmp.eq.s32.totalorder %s14, 1
    %p209 = por %p207, %p208
    %p210 = scmp.ne.s32.totalorder %s202, %s205
    %p211 = scmp.eq.s32.totalorder %s14, 0
    %p212 = por %p210, %p211
    %p213 = scmp.ne.s32.totalorder %s202, %s205
    %p214 = scmp.eq.s32.totalorder %s19, 1
    %p215 = por %p213, %p214
    %p216 = scmp.ne.s32.totalorder %s205, %s206
    %p217 = scmp.eq.s32.totalorder %s19, 0
    %p218 = por %p216, %p217
    %p219 = scmp.ne.s32.totalorder %s205, %s206
    %p220 = scmp.eq.s32.totalorder %s20, 1
    %p221 = por %p219, %p220
    %p223 = scmp.ne.s32.totalorder %s206, %s222
    %p224 = scmp.eq.s32.totalorder %s20, 0
    %p225 = por %p223, %p224
    %p226 = scmp.le.s32.totalorder 1, %s14
    %p227 = scmp.lt.s32.totalorder %s14, 3
    %p228 = pnand %p226, %p227
    %p229 = pneg %p228
    // Predicated region
    $region9: #{tpu_custom_call.1} parent=5 // pred_check
      _
    $region10: #{tpu_custom_call.1} parent=5 // pred_check_branch
      %231 = sbr.rel (%p228) target = $region12
    $region11: #{tpu_custom_call.1} parent=5 // pred_region
      %s232 = ssub.s32 %s14, 1
      // Predicated region
      $region13: #{tpu_custom_call.1} parent=11 // pred_check
        %p233 = pneg %p87
      $region14: #{tpu_custom_call.1} parent=11 // pred_check_branch
        %235 = sbr.rel (%p233) target = $region16
      $region15: #{tpu_custom_call.1} parent=11 // pred_region
        _
      $region16: #{tpu_custom_call.1} parent=11 // pred_fallthru
        _
      // Predicated region
      $region17: #{tpu_custom_call.1} parent=11 // pred_check
        %p236 = pneg %p108
      $region18: #{tpu_custom_call.1} parent=11 // pred_check_branch
        %238 = sbr.rel (%p236) target = $region20
      $region19: #{tpu_custom_call.1} parent=11 // pred_region
        _
      $region20: #{tpu_custom_call.1} parent=11 // pred_fallthru
        _
      // Predicated region
      $region21: #{tpu_custom_call.1} parent=11 // pred_check
        %p239 = pneg %p129
      $region22: #{tpu_custom_call.1} parent=11 // pred_check_branch
        %241 = sbr.rel (%p239) target = $region24
      $region23: #{tpu_custom_call.1} parent=11 // pred_region
        _
      $region24: #{tpu_custom_call.1} parent=11 // pred_fallthru
        _
      // Predicated region
      $region25: #{tpu_custom_call.1} parent=11 // pred_check
        %p242 = pneg %p150
      $region26: #{tpu_custom_call.1} parent=11 // pred_check_branch
        %244 = sbr.rel (%p242) target = $region28
      $region27: #{tpu_custom_call.1} parent=11 // pred_region
        _
      $region28: #{tpu_custom_call.1} parent=11 // pred_fallthru
        _
      // Predicated region
      $region29: #{tpu_custom_call.1} parent=11 // pred_check
        %p245 = pneg %p171
      $region30: #{tpu_custom_call.1} parent=11 // pred_check_branch
        %247 = sbr.rel (%p245) target = $region32
      $region31: #{tpu_custom_call.1} parent=11 // pred_region
        _
      $region32: #{tpu_custom_call.1} parent=11 // pred_fallthru
        _
      // Predicated region
      $region33: #{tpu_custom_call.1} parent=11 // pred_check
        %p248 = pneg %p192
      $region34: #{tpu_custom_call.1} parent=11 // pred_check_branch
        %250 = sbr.rel (%p248) target = $region36
      $region35: #{tpu_custom_call.1} parent=11 // pred_region
        _
      $region36: #{tpu_custom_call.1} parent=11 // pred_fallthru
        _
    $region12: #{tpu_custom_call.1} parent=5 // pred_fallthru
      _
    %p251 = scmp.lt.s32.totalorder %s14, 2
    // Predicated region
    $region37: #{tpu_custom_call.1} parent=5 // pred_check
      %p252 = pneg %p251
    $region38: #{tpu_custom_call.1} parent=5 // pred_check_branch
      %254 = sbr.rel (%p252) target = $region40
    $region39: #{tpu_custom_call.1} parent=5 // pred_region
      // Predicated region
      $region41: #{tpu_custom_call.1} parent=39 // pred_check
        %p255 = pneg %p34
      $region42: #{tpu_custom_call.1} parent=39 // pred_check_branch
        %257 = sbr.rel (%p255) target = $region44
      $region43: #{tpu_custom_call.1} parent=39 // pred_region
        %p258 = scmp.lt.s32.totalorder %s14, 1
        %s259 = scalar_select %p258, %s14, 1
        %s260 = smul.addr %s259, 36
        %s261 = smul.addr %s260, 4
        %s262 = scalar_lea.vmem %s0, %s261
      $region44: #{tpu_custom_call.1} parent=39 // pred_fallthru
        _
      // Predicated region
      $region45: #{tpu_custom_call.1} parent=39 // pred_check
        %p263 = pneg %p60
      $region46: #{tpu_custom_call.1} parent=39 // pred_check_branch
        %265 = sbr.rel (%p263) target = $region48
      $region47: #{tpu_custom_call.1} parent=39 // pred_region
        %p266 = scmp.lt.s32.totalorder %s14, 1
        %s267 = scalar_select %p266, %s14, 1
        %s268 = smul.addr %s267, 8
        %s269 = smul.addr %s268, 4
        %s270 = scalar_lea.vmem %s1, %s269
      $region48: #{tpu_custom_call.1} parent=39 // pred_fallthru
        _
    $region40: #{tpu_custom_call.1} parent=5 // pred_fallthru
      _
    %p271 = scmp.le.s32.totalorder 1, %s14
    %p272 = scmp.lt.s32.totalorder %s14, 3
    %p273 = pnand %p271, %p272
    %p274 = pneg %p273
    // Predicated region
    $region49: #{tpu_custom_call.1} parent=5 // pred_check
      _
    $region50: #{tpu_custom_call.1} parent=5 // pred_check_branch
      %276 = sbr.rel (%p273) target = $region52
    $region51: #{tpu_custom_call.1} parent=5 // pred_region
      %s277 = ssub.s32 %s14, 1
      %p278 = scmp.lt.s32.totalorder %s19, 1
      %s279 = scalar_select %p278, %s19, 1
      %s280 = smul.addr %s279, 36
      %s281 = smul.addr %s280, 4
      %s282 = scalar_lea.vmem %s0, %s281
      %p283 = pneg %p40
      %p284 = pneg %p37
      %p285 = scmp.lt.s32.totalorder %s19, 1
      %s286 = scalar_select %p285, %s19, 1
      %s287 = smul.addr %s286, 8
      %s288 = smul.addr %s287, 4
      %s289 = scalar_lea.vmem %s1, %s288
      %p290 = pneg %p66
      %p291 = pneg %p63
      %p292 = pneg %p87
      %p293 = pneg %p84
      %p294 = pneg %p108
      %p295 = pneg %p105
      %p296 = pneg %p129
      %p297 = pneg %p126
      %p298 = pneg %p150
      %p299 = pneg %p147
      %p300 = pneg %p171
      %p301 = pneg %p168
      %p302 = pneg %p192
      %p303 = pneg %p189
      %p304 = pneg %p218
      %p305 = pneg %p215
      %p306 = scmp.lt.s32.totalorder %s19, 1
      %s307 = scalar_select %p306, %s19, 1
      %s308 = smul.addr %s307, 8
      %s309 = smul.addr %s308, 8
      %s310 = scalar_lea.vmem %s8, %s309
      %p311 = scmp.lt.s32.totalorder %s19, 1
      %s312 = scalar_select %p311, %s19, 1
      %s313 = smul.addr %s312, 36
      %s314 = smul.addr %s313, 4
      %s315 = scalar_lea.vmem %s0, %s314
      %p316 = scmp.lt.s32.totalorder %s19, 1
      %s317 = scalar_select %p316, %s19, 1
      %s318 = smul.addr %s317, 8
      %s319 = smul.addr %s318, 4
      %s320 = scalar_lea.vmem %s1, %s319
      %p321 = scmp.lt.s32.totalorder %s19, 1
      %s322 = scalar_select %p321, %s19, 1
      %s323 = smul.addr %s322, 8
      %s324 = smul.addr %s323, 8
      %s325 = scalar_lea.vmem %s8, %s324
      %v327 = vld [vmem:[%s2] sm:$0xf]
      %v328 = vld [vmem:[%s2 + $0x4] sm:$0xf]
      %v329 = vld [vmem:[%s2 + $0x8] sm:$0xf]
      %v330 = vld [vmem:[%s2 + $0xc] sm:$0xf]
      %v331 = vld [vmem:[%s2 + $0x10] sm:$0x3]
      %v332 = vld [vmem:[%s4] sm:$0xf]
      %v333 = vld [vmem:[%s4 + $0x4] sm:$0xf]
      %v334 = vld [vmem:[%s4 + $0x8] sm:$0xf]
      %v335 = vld [vmem:[%s4 + $0xc] sm:$0xf]
      %v336 = vld [vmem:[%s4 + $0x10] sm:$0xf]
      %v337 = vld [vmem:[%s4 + $0x14] sm:$0xf]
      %v338 = vld [vmem:[%s4 + $0x18] sm:$0xf]
      %v339 = vld [vmem:[%s4 + $0x1c] sm:$0xf]
      %v340 = vld [vmem:[%s4 + $0x20] sm:$0xf]
      %v341 = vld [vmem:[%s5] sm:$0x3]
      %v342 = vld [vmem:[%s3] sm:$0x1]
      %v343 = vld [vmem:[%s6] sm:$0x1]
      %v344 = vld [vmem:[%s7] sm:$0xf]
      %vm345 = vcmask 60416
      %346 = vst.msk [vmem:[#allocation2] sm:$0xf] %vm345, 0
      %347 = vst.msk [vmem:[#allocation2 + $0x4] sm:$0xf] %vm345, 0
      %348 = vst.msk [vmem:[#allocation2 + $0x8] sm:$0xf] %vm345, 0
      %349 = vst.msk [vmem:[#allocation2 + $0xc] sm:$0xf] %vm345, 0
      %350 = vst.msk [vmem:[#allocation2 + $0x10] sm:$0xf] %vm345, 0
      %351 = vst.msk [vmem:[#allocation2 + $0x14] sm:$0xf] %vm345, 0
      %352 = vst.msk [vmem:[#allocation2 + $0x18] sm:$0xf] %vm345, 0
      %353 = vst.msk [vmem:[#allocation2 + $0x1c] sm:$0xf] %vm345, 0
      %354 = vst.msk [vmem:[#allocation2 + $0x20] sm:$0xf] %vm345, 0
      %355 = vst.msk [vmem:[#allocation2 + $0x24] sm:$0xf] %vm345, 0
      %356 = vst.msk [vmem:[#allocation2 + $0x28] sm:$0xf] %vm345, 0
      %357 = vst.msk [vmem:[#allocation2 + $0x2c] sm:$0xf] %vm345, 0
      %358 = vst.msk [vmem:[#allocation2 + $0x30] sm:$0xf] %vm345, 0
      %359 = vst.msk [vmem:[#allocation2 + $0x34] sm:$0xf] %vm345, 0
      %360 = vst.msk [vmem:[#allocation2 + $0x38] sm:$0xf] %vm345, 0
      %361 = vst.msk [vmem:[#allocation2 + $0x3c] sm:$0xf] %vm345, 0
      %362 = vst.msk [vmem:[#allocation2 + $0x40] sm:$0xf] %vm345, 0
      %363 = vst.msk [vmem:[#allocation2 + $0x44] sm:$0xf] %vm345, 0
      %364 = vst.msk [vmem:[#allocation2 + $0x48] sm:$0xf] %vm345, 0
      %365 = vst.msk [vmem:[#allocation2 + $0x4c] sm:$0xf] %vm345, 0
      %366 = vst.msk [vmem:[#allocation2 + $0x50] sm:$0xf] %vm345, 0
      %367 = vst.msk [vmem:[#allocation2 + $0x54] sm:$0xf] %vm345, 0
      %368 = vst.msk [vmem:[#allocation2 + $0x58] sm:$0xf] %vm345, 0
      %369 = vst.msk [vmem:[#allocation2 + $0x5c] sm:$0xf] %vm345, 0
      %370 = vst.msk [vmem:[#allocation2 + $0x60] sm:$0xf] %vm345, 0
      %371 = vst.msk [vmem:[#allocation2 + $0x64] sm:$0xf] %vm345, 0
      %372 = vst.msk [vmem:[#allocation2 + $0x68] sm:$0xf] %vm345, 0
      %373 = vst.msk [vmem:[#allocation2 + $0x6c] sm:$0xf] %vm345, 0
      %374 = vst.msk [vmem:[#allocation2 + $0x70] sm:$0xf] %vm345, 0
      %375 = vst.msk [vmem:[#allocation2 + $0x74] sm:$0xf] %vm345, 0
      %376 = vst.msk [vmem:[#allocation2 + $0x78] sm:$0xf] %vm345, 0
      %377 = vst.msk [vmem:[#allocation2 + $0x7c] sm:$0xf] %vm345, 0
      %378 = vst.msk [vmem:[#allocation2 + $0x80] sm:$0xf] %vm345, 0
      %379 = vst.msk [vmem:[#allocation2 + $0x84] sm:$0xf] %vm345, 0
      %380 = vst.msk [vmem:[#allocation2 + $0x88] sm:$0xf] %vm345, 0
      %381 = vst.msk [vmem:[#allocation2 + $0x8c] sm:$0xf] %vm345, 0
      %382 = vst.msk [vmem:[#allocation2 + $0x90] sm:$0xf] %vm345, 0
      %383 = vst.msk [vmem:[#allocation2 + $0x94] sm:$0xf] %vm345, 0
      %384 = vst.msk [vmem:[#allocation2 + $0x98] sm:$0xf] %vm345, 0
      %385 = vst.msk [vmem:[#allocation2 + $0x9c] sm:$0xf] %vm345, 0
      %386 = vst.msk [vmem:[#allocation2 + $0xa0] sm:$0xf] %vm345, 0
      %387 = vst.msk [vmem:[#allocation2 + $0xa4] sm:$0xf] %vm345, 0
      %vm388 = vcmask 59392
      %389 = vst.msk [vmem:[#allocation2 + $0xa8] sm:$0x7] %vm388, 0
      %v390 = vld [vmem:[%s315] sm:$0xf]
      %v391 = vld [vmem:[%s315 + $0x4] sm:$0xf]
      %v392 = vld [vmem:[%s315 + $0x8] sm:$0xf]
      %v393 = vld [vmem:[%s315 + $0xc] sm:$0xf]
      %v394 = vld [vmem:[%s315 + $0x10] sm:$0xf]
      %v395 = vld [vmem:[%s315 + $0x14] sm:$0xf]
      %v396 = vld [vmem:[%s315 + $0x18] sm:$0xf]
      %v397 = vld [vmem:[%s315 + $0x1c] sm:$0xf]
      %v398 = vld [vmem:[%s315 + $0x20] sm:$0xf]
      %v399 = vld [vmem:[%s315 + $0x24] sm:$0xf]
      %v400 = vld [vmem:[%s315 + $0x28] sm:$0xf]
      %v401 = vld [vmem:[%s315 + $0x2c] sm:$0xf]
      %v402 = vld [vmem:[%s315 + $0x30] sm:$0xf]
      %v403 = vld [vmem:[%s315 + $0x34] sm:$0xf]
      %v404 = vld [vmem:[%s315 + $0x38] sm:$0xf]
      %v405 = vld [vmem:[%s315 + $0x3c] sm:$0xf]
      %v406 = vld [vmem:[%s315 + $0x40] sm:$0xf]
      %v407 = vld [vmem:[%s315 + $0x44] sm:$0xf]
      %v408 = vld [vmem:[%s315 + $0x48] sm:$0xf]
      %v409 = vld [vmem:[%s315 + $0x4c] sm:$0xf]
      %v410 = vld [vmem:[%s315 + $0x50] sm:$0xf]
      %v411 = vld [vmem:[%s315 + $0x54] sm:$0xf]
      %v412 = vld [vmem:[%s315 + $0x58] sm:$0xf]
      %v413 = vld [vmem:[%s315 + $0x5c] sm:$0xf]
      %v414 = vld [vmem:[%s315 + $0x60] sm:$0xf]
      %v415 = vld [vmem:[%s315 + $0x64] sm:$0xf]
      %v416 = vld [vmem:[%s315 + $0x68] sm:$0xf]
      %v417 = vld [vmem:[%s315 + $0x6c] sm:$0xf]
      %v418 = vld [vmem:[%s315 + $0x70] sm:$0xf]
      %v419 = vld [vmem:[%s315 + $0x74] sm:$0xf]
      %v420 = vld [vmem:[%s315 + $0x78] sm:$0xf]
      %v421 = vld [vmem:[%s315 + $0x7c] sm:$0xf]
      %v422 = vld [vmem:[%s315 + $0x80] sm:$0xf]
      %v423 = vld [vmem:[%s315 + $0x84] sm:$0xf]
      %v424 = vld [vmem:[%s315 + $0x88] sm:$0xf]
      %v425 = vld [vmem:[%s315 + $0x8c] sm:$0xf]
      %v426 = vlaneseq
      %v427 = vshrl.u32 %v426, 7
      %v428 = vadd.s32 %v427, 8
      %v429 = vadd.s32 %v427, 16
      %v430 = vadd.s32 %v427, 24
      %v431 = vadd.s32 %v427, 32
      %v432 = vadd.s32 %v427, 40
      %v433 = vadd.s32 %v427, 48
      %v434 = vadd.s32 %v427, 56
      %v435 = vadd.s32 %v427, 64
      %v436 = vadd.s32 %v427, 72
      %v437 = vadd.s32 %v427, 80
      %v438 = vadd.s32 %v427, 88
      %v439 = vadd.s32 %v427, 96
      %v440 = vadd.s32 %v427, 104
      %v441 = vadd.s32 %v427, 112
      %v442 = vadd.s32 %v427, 120
      %v443 = vadd.s32 %v427, 128
      %v444 = vadd.s32 %v427, 136
      %v445 = vadd.s32 %v427, 144
      %v446 = vadd.s32 %v427, 152
      %v447 = vadd.s32 %v427, 160
      %v448 = vadd.s32 %v427, 168
      %v449 = vadd.s32 %v427, 176
      %v450 = vadd.s32 %v427, 184
      %v451 = vadd.s32 %v427, 192
      %v452 = vadd.s32 %v427, 200
      %v453 = vadd.s32 %v427, 208
      %v454 = vadd.s32 %v427, 216
      %v455 = vadd.s32 %v427, 224
      %v456 = vadd.s32 %v427, 232
      %v457 = vadd.s32 %v427, 240
      %v458 = vadd.s32 %v427, 248
      %v459 = vadd.s32 %v427, 256
      %v460 = vadd.s32 %v427, 264
      %v461 = vadd.s32 %v427, 272
      %v462 = vadd.s32 %v427, 280
      %vm463 = vcmp.lt.s32.totalorder %v427, 0
      %v464 = vsub.s32 0, %v427
      %v465 = vsel %vm463, %v464, %v427
      %v466 = vmul.u32.u64.compose %v465, 3817748708
      %v467 = vextract.low.u32 %v466
      %v468 = vextract.high.u32 %v466
      %v469 = vshrl.u32 %v468, 4
      %v470 = vmul.u32 %v469, 18
      %v471 = vsub.s32 %v465, %v470
      %v472 = vsub.s32 0, %v471
      %v473 = vsel %vm463, %v472, %v471
      %vm474 = vcmp.lt.s32.totalorder %v428, 0
      %v475 = vsub.s32 0, %v428
      %v476 = vsel %vm474, %v475, %v428
      %v477 = vmul.u32.u64.compose %v476, 3817748708
      %v478 = vextract.low.u32 %v477
      %v479 = vextract.high.u32 %v477
      %v480 = vshrl.u32 %v479, 4
      %v481 = vmul.u32 %v480, 18
      %v482 = vsub.s32 %v476, %v481
      %v483 = vsub.s32 0, %v482
      %v484 = vsel %vm474, %v483, %v482
      %vm485 = vcmp.lt.s32.totalorder %v429, 0
      %v486 = vsub.s32 0, %v429
      %v487 = vsel %vm485, %v486, %v429
      %v488 = vmul.u32.u64.compose %v487, 3817748708
      %v489 = vextract.low.u32 %v488
      %v490 = vextract.high.u32 %v488
      %v491 = vshrl.u32 %v490, 4
      %v492 = vmul.u32 %v491, 18
      %v493 = vsub.s32 %v487, %v492
      %v494 = vsub.s32 0, %v493
      %v495 = vsel %vm485, %v494, %v493
      %vm496 = vcmp.lt.s32.totalorder %v430, 0
      %v497 = vsub.s32 0, %v430
      %v498 = vsel %vm496, %v497, %v430
      %v499 = vmul.u32.u64.compose %v498, 3817748708
      %v500 = vextract.low.u32 %v499
      %v501 = vextract.high.u32 %v499
      %v502 = vshrl.u32 %v501, 4
      %v503 = vmul.u32 %v502, 18
      %v504 = vsub.s32 %v498, %v503
      %v505 = vsub.s32 0, %v504
      %v506 = vsel %vm496, %v505, %v504
      %vm507 = vcmp.lt.s32.totalorder %v431, 0
      %v508 = vsub.s32 0, %v431
      %v509 = vsel %vm507, %v508, %v431
      %v510 = vmul.u32.u64.compose %v509, 3817748708
      %v511 = vextract.low.u32 %v510
      %v512 = vextract.high.u32 %v510
      %v513 = vshrl.u32 %v512, 4
      %v514 = vmul.u32 %v513, 18
      %v515 = vsub.s32 %v509, %v514
      %v516 = vsub.s32 0, %v515
      %v517 = vsel %vm507, %v516, %v515
      %vm518 = vcmp.lt.s32.totalorder %v432, 0
      %v519 = vsub.s32 0, %v432
      %v520 = vsel %vm518, %v519, %v432
      %v521 = vmul.u32.u64.compose %v520, 3817748708
      %v522 = vextract.low.u32 %v521
      %v523 = vextract.high.u32 %v521
      %v524 = vshrl.u32 %v523, 4
      %v525 = vmul.u32 %v524, 18
      %v526 = vsub.s32 %v520, %v525
      %v527 = vsub.s32 0, %v526
      %v528 = vsel %vm518, %v527, %v526
      %vm529 = vcmp.lt.s32.totalorder %v433, 0
      %v530 = vsub.s32 0, %v433
      %v531 = vsel %vm529, %v530, %v433
      %v532 = vmul.u32.u64.compose %v531, 3817748708
      %v533 = vextract.low.u32 %v532
      %v534 = vextract.high.u32 %v532
      %v535 = vshrl.u32 %v534, 4
      %v536 = vmul.u32 %v535, 18
      %v537 = vsub.s32 %v531, %v536
      %v538 = vsub.s32 0, %v537
      %v539 = vsel %vm529, %v538, %v537
      %vm540 = vcmp.lt.s32.totalorder %v434, 0
      %v541 = vsub.s32 0, %v434
      %v542 = vsel %vm540, %v541, %v434
      %v543 = vmul.u32.u64.compose %v542, 3817748708
      %v544 = vextract.low.u32 %v543
      %v545 = vextract.high.u32 %v543
      %v546 = vshrl.u32 %v545, 4
      %v547 = vmul.u32 %v546, 18
      %v548 = vsub.s32 %v542, %v547
      %v549 = vsub.s32 0, %v548
      %v550 = vsel %vm540, %v549, %v548
      %vm551 = vcmp.lt.s32.totalorder %v435, 0
      %v552 = vsub.s32 0, %v435
      %v553 = vsel %vm551, %v552, %v435
      %v554 = vmul.u32.u64.compose %v553, 3817748708
      %v555 = vextract.low.u32 %v554
      %v556 = vextract.high.u32 %v554
      %v557 = vshrl.u32 %v556, 4
      %v558 = vmul.u32 %v557, 18
      %v559 = vsub.s32 %v553, %v558
      %v560 = vsub.s32 0, %v559
      %v561 = vsel %vm551, %v560, %v559
      %vm562 = vcmp.lt.s32.totalorder %v436, 0
      %v563 = vsub.s32 0, %v436
      %v564 = vsel %vm562, %v563, %v436
      %v565 = vmul.u32.u64.compose %v564, 3817748708
      %v566 = vextract.low.u32 %v565
      %v567 = vextract.high.u32 %v565
      %v568 = vshrl.u32 %v567, 4
      %v569 = vmul.u32 %v568, 18
      %v570 = vsub.s32 %v564, %v569
      %v571 = vsub.s32 0, %v570
      %v572 = vsel %vm562, %v571, %v570
      %vm573 = vcmp.lt.s32.totalorder %v437, 0
      %v574 = vsub.s32 0, %v437
      %v575 = vsel %vm573, %v574, %v437
      %v576 = vmul.u32.u64.compose %v575, 3817748708
      %v577 = vextract.low.u32 %v576
      %v578 = vextract.high.u32 %v576
      %v579 = vshrl.u32 %v578, 4
      %v580 = vmul.u32 %v579, 18
      %v581 = vsub.s32 %v575, %v580
      %v582 = vsub.s32 0, %v581
      %v583 = vsel %vm573, %v582, %v581
      %vm584 = vcmp.lt.s32.totalorder %v438, 0
      %v585 = vsub.s32 0, %v438
      %v586 = vsel %vm584, %v585, %v438
      %v587 = vmul.u32.u64.compose %v586, 3817748708
      %v588 = vextract.low.u32 %v587
      %v589 = vextract.high.u32 %v587
      %v590 = vshrl.u32 %v589, 4
      %v591 = vmul.u32 %v590, 18
      %v592 = vsub.s32 %v586, %v591
      %v593 = vsub.s32 0, %v592
      %v594 = vsel %vm584, %v593, %v592
      %vm595 = vcmp.lt.s32.totalorder %v439, 0
      %v596 = vsub.s32 0, %v439
      %v597 = vsel %vm595, %v596, %v439
      %v598 = vmul.u32.u64.compose %v597, 3817748708
      %v599 = vextract.low.u32 %v598
      %v600 = vextract.high.u32 %v598
      %v601 = vshrl.u32 %v600, 4
      %v602 = vmul.u32 %v601, 18
      %v603 = vsub.s32 %v597, %v602
      %v604 = vsub.s32 0, %v603
      %v605 = vsel %vm595, %v604, %v603
      %vm606 = vcmp.lt.s32.totalorder %v440, 0
      %v607 = vsub.s32 0, %v440
      %v608 = vsel %vm606, %v607, %v440
      %v609 = vmul.u32.u64.compose %v608, 3817748708
      %v610 = vextract.low.u32 %v609
      %v611 = vextract.high.u32 %v609
      %v612 = vshrl.u32 %v611, 4
      %v613 = vmul.u32 %v612, 18
      %v614 = vsub.s32 %v608, %v613
      %v615 = vsub.s32 0, %v614
      %v616 = vsel %vm606, %v615, %v614
      %vm617 = vcmp.lt.s32.totalorder %v441, 0
      %v618 = vsub.s32 0, %v441
      %v619 = vsel %vm617, %v618, %v441
      %v620 = vmul.u32.u64.compose %v619, 3817748708
      %v621 = vextract.low.u32 %v620
      %v622 = vextract.high.u32 %v620
      %v623 = vshrl.u32 %v622, 4
      %v624 = vmul.u32 %v623, 18
      %v625 = vsub.s32 %v619, %v624
      %v626 = vsub.s32 0, %v625
      %v627 = vsel %vm617, %v626, %v625
      %vm628 = vcmp.lt.s32.totalorder %v442, 0
      %v629 = vsub.s32 0, %v442
      %v630 = vsel %vm628, %v629, %v442
      %v631 = vmul.u32.u64.compose %v630, 3817748708
      %v632 = vextract.low.u32 %v631
      %v633 = vextract.high.u32 %v631
      %v634 = vshrl.u32 %v633, 4
      %v635 = vmul.u32 %v634, 18
      %v636 = vsub.s32 %v630, %v635
      %v637 = vsub.s32 0, %v636
      %v638 = vsel %vm628, %v637, %v636
      %vm639 = vcmp.lt.s32.totalorder %v443, 0
      %v640 = vsub.s32 0, %v443
      %v641 = vsel %vm639, %v640, %v443
      %v642 = vmul.u32.u64.compose %v641, 3817748708
      %v643 = vextract.low.u32 %v642
      %v644 = vextract.high.u32 %v642
      %v645 = vshrl.u32 %v644, 4
      %v646 = vmul.u32 %v645, 18
      %v647 = vsub.s32 %v641, %v646
      %v648 = vsub.s32 0, %v647
      %v649 = vsel %vm639, %v648, %v647
      %vm650 = vcmp.lt.s32.totalorder %v444, 0
      %v651 = vsub.s32 0, %v444
      %v652 = vsel %vm650, %v651, %v444
      %v653 = vmul.u32.u64.compose %v652, 3817748708
      %v654 = vextract.low.u32 %v653
      %v655 = vextract.high.u32 %v653
      %v656 = vshrl.u32 %v655, 4
      %v657 = vmul.u32 %v656, 18
      %v658 = vsub.s32 %v652, %v657
      %v659 = vsub.s32 0, %v658
      %v660 = vsel %vm650, %v659, %v658
      %vm661 = vcmp.lt.s32.totalorder %v445, 0
      %v662 = vsub.s32 0, %v445
      %v663 = vsel %vm661, %v662, %v445
      %v664 = vmul.u32.u64.compose %v663, 3817748708
      %v665 = vextract.low.u32 %v664
      %v666 = vextract.high.u32 %v664
      %v667 = vshrl.u32 %v666, 4
      %v668 = vmul.u32 %v667, 18
      %v669 = vsub.s32 %v663, %v668
      %v670 = vsub.s32 0, %v669
      %v671 = vsel %vm661, %v670, %v669
      %vm672 = vcmp.lt.s32.totalorder %v446, 0
      %v673 = vsub.s32 0, %v446
      %v674 = vsel %vm672, %v673, %v446
      %v675 = vmul.u32.u64.compose %v674, 3817748708
      %v676 = vextract.low.u32 %v675
      %v677 = vextract.high.u32 %v675
      %v678 = vshrl.u32 %v677, 4
      %v679 = vmul.u32 %v678, 18
      %v680 = vsub.s32 %v674, %v679
      %v681 = vsub.s32 0, %v680
      %v682 = vsel %vm672, %v681, %v680
      %vm683 = vcmp.lt.s32.totalorder %v447, 0
      %v684 = vsub.s32 0, %v447
      %v685 = vsel %vm683, %v684, %v447
      %v686 = vmul.u32.u64.compose %v685, 3817748708
      %v687 = vextract.low.u32 %v686
      %v688 = vextract.high.u32 %v686
      %v689 = vshrl.u32 %v688, 4
      %v690 = vmul.u32 %v689, 18
      %v691 = vsub.s32 %v685, %v690
      %v692 = vsub.s32 0, %v691
      %v693 = vsel %vm683, %v692, %v691
      %vm694 = vcmp.lt.s32.totalorder %v448, 0
      %v695 = vsub.s32 0, %v448
      %v696 = vsel %vm694, %v695, %v448
      %v697 = vmul.u32.u64.compose %v696, 3817748708
      %v698 = vextract.low.u32 %v697
      %v699 = vextract.high.u32 %v697
      %v700 = vshrl.u32 %v699, 4
      %v701 = vmul.u32 %v700, 18
      %v702 = vsub.s32 %v696, %v701
      %v703 = vsub.s32 0, %v702
      %v704 = vsel %vm694, %v703, %v702
      %vm705 = vcmp.lt.s32.totalorder %v449, 0
      %v706 = vsub.s32 0, %v449
      %v707 = vsel %vm705, %v706, %v449
      %v708 = vmul.u32.u64.compose %v707, 3817748708
      %v709 = vextract.low.u32 %v708
      %v710 = vextract.high.u32 %v708
      %v711 = vshrl.u32 %v710, 4
      %v712 = vmul.u32 %v711, 18
      %v713 = vsub.s32 %v707, %v712
      %v714 = vsub.s32 0, %v713
      %v715 = vsel %vm705, %v714, %v713
      %vm716 = vcmp.lt.s32.totalorder %v450, 0
      %v717 = vsub.s32 0, %v450
      %v718 = vsel %vm716, %v717, %v450
      %v719 = vmul.u32.u64.compose %v718, 3817748708
      %v720 = vextract.low.u32 %v719
      %v721 = vextract.high.u32 %v719
      %v722 = vshrl.u32 %v721, 4
      %v723 = vmul.u32 %v722, 18
      %v724 = vsub.s32 %v718, %v723
      %v725 = vsub.s32 0, %v724
      %v726 = vsel %vm716, %v725, %v724
      %vm727 = vcmp.lt.s32.totalorder %v451, 0
      %v728 = vsub.s32 0, %v451
      %v729 = vsel %vm727, %v728, %v451
      %v730 = vmul.u32.u64.compose %v729, 3817748708
      %v731 = vextract.low.u32 %v730
      %v732 = vextract.high.u32 %v730
      %v733 = vshrl.u32 %v732, 4
      %v734 = vmul.u32 %v733, 18
      %v735 = vsub.s32 %v729, %v734
      %v736 = vsub.s32 0, %v735
      %v737 = vsel %vm727, %v736, %v735
      %vm738 = vcmp.lt.s32.totalorder %v452, 0
      %v739 = vsub.s32 0, %v452
      %v740 = vsel %vm738, %v739, %v452
      %v741 = vmul.u32.u64.compose %v740, 3817748708
      %v742 = vextract.low.u32 %v741
      %v743 = vextract.high.u32 %v741
      %v744 = vshrl.u32 %v743, 4
      %v745 = vmul.u32 %v744, 18
      %v746 = vsub.s32 %v740, %v745
      %v747 = vsub.s32 0, %v746
      %v748 = vsel %vm738, %v747, %v746
      %vm749 = vcmp.lt.s32.totalorder %v453, 0
      %v750 = vsub.s32 0, %v453
      %v751 = vsel %vm749, %v750, %v453
      %v752 = vmul.u32.u64.compose %v751, 3817748708
      %v753 = vextract.low.u32 %v752
      %v754 = vextract.high.u32 %v752
      %v755 = vshrl.u32 %v754, 4
      %v756 = vmul.u32 %v755, 18
      %v757 = vsub.s32 %v751, %v756
      %v758 = vsub.s32 0, %v757
      %v759 = vsel %vm749, %v758, %v757
      %vm760 = vcmp.lt.s32.totalorder %v454, 0
      %v761 = vsub.s32 0, %v454
      %v762 = vsel %vm760, %v761, %v454
      %v763 = vmul.u32.u64.compose %v762, 3817748708
      %v764 = vextract.low.u32 %v763
      %v765 = vextract.high.u32 %v763
      %v766 = vshrl.u32 %v765, 4
      %v767 = vmul.u32 %v766, 18
      %v768 = vsub.s32 %v762, %v767
      %v769 = vsub.s32 0, %v768
      %v770 = vsel %vm760, %v769, %v768
      %vm771 = vcmp.lt.s32.totalorder %v455, 0
      %v772 = vsub.s32 0, %v455
      %v773 = vsel %vm771, %v772, %v455
      %v774 = vmul.u32.u64.compose %v773, 3817748708
      %v775 = vextract.low.u32 %v774
      %v776 = vextract.high.u32 %v774
      %v777 = vshrl.u32 %v776, 4
      %v778 = vmul.u32 %v777, 18
      %v779 = vsub.s32 %v773, %v778
      %v780 = vsub.s32 0, %v779
      %v781 = vsel %vm771, %v780, %v779
      %vm782 = vcmp.lt.s32.totalorder %v456, 0
      %v783 = vsub.s32 0, %v456
      %v784 = vsel %vm782, %v783, %v456
      %v785 = vmul.u32.u64.compose %v784, 3817748708
      %v786 = vextract.low.u32 %v785
      %v787 = vextract.high.u32 %v785
      %v788 = vshrl.u32 %v787, 4
      %v789 = vmul.u32 %v788, 18
      %v790 = vsub.s32 %v784, %v789
      %v791 = vsub.s32 0, %v790
      %v792 = vsel %vm782, %v791, %v790
      %vm793 = vcmp.lt.s32.totalorder %v457, 0
      %v794 = vsub.s32 0, %v457
      %v795 = vsel %vm793, %v794, %v457
      %v796 = vmul.u32.u64.compose %v795, 3817748708
      %v797 = vextract.low.u32 %v796
      %v798 = vextract.high.u32 %v796
      %v799 = vshrl.u32 %v798, 4
      %v800 = vmul.u32 %v799, 18
      %v801 = vsub.s32 %v795, %v800
      %v802 = vsub.s32 0, %v801
      %v803 = vsel %vm793, %v802, %v801
      %vm804 = vcmp.lt.s32.totalorder %v458, 0
      %v805 = vsub.s32 0, %v458
      %v806 = vsel %vm804, %v805, %v458
      %v807 = vmul.u32.u64.compose %v806, 3817748708
      %v808 = vextract.low.u32 %v807
      %v809 = vextract.high.u32 %v807
      %v810 = vshrl.u32 %v809, 4
      %v811 = vmul.u32 %v810, 18
      %v812 = vsub.s32 %v806, %v811
      %v813 = vsub.s32 0, %v812
      %v814 = vsel %vm804, %v813, %v812
      %vm815 = vcmp.lt.s32.totalorder %v459, 0
      %v816 = vsub.s32 0, %v459
      %v817 = vsel %vm815, %v816, %v459
      %v818 = vmul.u32.u64.compose %v817, 3817748708
      %v819 = vextract.low.u32 %v818
      %v820 = vextract.high.u32 %v818
      %v821 = vshrl.u32 %v820, 4
      %v822 = vmul.u32 %v821, 18
      %v823 = vsub.s32 %v817, %v822
      %v824 = vsub.s32 0, %v823
      %v825 = vsel %vm815, %v824, %v823
      %vm826 = vcmp.lt.s32.totalorder %v460, 0
      %v827 = vsub.s32 0, %v460
      %v828 = vsel %vm826, %v827, %v460
      %v829 = vmul.u32.u64.compose %v828, 3817748708
      %v830 = vextract.low.u32 %v829
      %v831 = vextract.high.u32 %v829
      %v832 = vshrl.u32 %v831, 4
      %v833 = vmul.u32 %v832, 18
      %v834 = vsub.s32 %v828, %v833
      %v835 = vsub.s32 0, %v834
      %v836 = vsel %vm826, %v835, %v834
      %vm837 = vcmp.lt.s32.totalorder %v461, 0
      %v838 = vsub.s32 0, %v461
      %v839 = vsel %vm837, %v838, %v461
      %v840 = vmul.u32.u64.compose %v839, 3817748708
      %v841 = vextract.low.u32 %v840
      %v842 = vextract.high.u32 %v840
      %v843 = vshrl.u32 %v842, 4
      %v844 = vmul.u32 %v843, 18
      %v845 = vsub.s32 %v839, %v844
      %v846 = vsub.s32 0, %v845
      %v847 = vsel %vm837, %v846, %v845
      %vm848 = vcmp.lt.s32.totalorder %v462, 0
      %v849 = vsub.s32 0, %v462
      %v850 = vsel %vm848, %v849, %v462
      %v851 = vmul.u32.u64.compose %v850, 3817748708
      %v852 = vextract.low.u32 %v851
      %v853 = vextract.high.u32 %v851
      %v854 = vshrl.u32 %v853, 4
      %v855 = vmul.u32 %v854, 18
      %v856 = vsub.s32 %v850, %v855
      %v857 = vsub.s32 0, %v856
      %v858 = vsel %vm848, %v857, %v856
      %vm859 = vcmp.ne.s32.totalorder %v473, 0
      %vm860 = vcmp.ne.s32.totalorder %v484, 0
      %vm861 = vcmp.ne.s32.totalorder %v495, 0
      %vm862 = vcmp.ne.s32.totalorder %v506, 0
      %vm863 = vcmp.ne.s32.totalorder %v517, 0
      %vm864 = vcmp.ne.s32.totalorder %v528, 0
      %vm865 = vcmp.ne.s32.totalorder %v539, 0
      %vm866 = vcmp.ne.s32.totalorder %v550, 0
      %vm867 = vcmp.ne.s32.totalorder %v561, 0
      %vm868 = vcmp.ne.s32.totalorder %v572, 0
      %vm869 = vcmp.ne.s32.totalorder %v583, 0
      %vm870 = vcmp.ne.s32.totalorder %v594, 0
      %vm871 = vcmp.ne.s32.totalorder %v605, 0
      %vm872 = vcmp.ne.s32.totalorder %v616, 0
      %vm873 = vcmp.ne.s32.totalorder %v627, 0
      %vm874 = vcmp.ne.s32.totalorder %v638, 0
      %vm875 = vcmp.ne.s32.totalorder %v649, 0
      %vm876 = vcmp.ne.s32.totalorder %v660, 0
      %vm877 = vcmp.ne.s32.totalorder %v671, 0
      %vm878 = vcmp.ne.s32.totalorder %v682, 0
      %vm879 = vcmp.ne.s32.totalorder %v693, 0
      %vm880 = vcmp.ne.s32.totalorder %v704, 0
      %vm881 = vcmp.ne.s32.totalorder %v715, 0
      %vm882 = vcmp.ne.s32.totalorder %v726, 0
      %vm883 = vcmp.ne.s32.totalorder %v737, 0
      %vm884 = vcmp.ne.s32.totalorder %v748, 0
      %vm885 = vcmp.ne.s32.totalorder %v759, 0
      %vm886 = vcmp.ne.s32.totalorder %v770, 0
      %vm887 = vcmp.ne.s32.totalorder %v781, 0
      %vm888 = vcmp.ne.s32.totalorder %v792, 0
      %vm889 = vcmp.ne.s32.totalorder %v803, 0
      %vm890 = vcmp.ne.s32.totalorder %v814, 0
      %vm891 = vcmp.ne.s32.totalorder %v825, 0
      %vm892 = vcmp.ne.s32.totalorder %v836, 0
      %vm893 = vcmp.ne.s32.totalorder %v847, 0
      %vm894 = vcmp.ne.s32.totalorder %v858, 0
      %vm895 = vcmp.lt.s32.totalorder %v473, 0
      %vm896 = vcmp.lt.s32.totalorder %v484, 0
      %vm897 = vcmp.lt.s32.totalorder %v495, 0
      %vm898 = vcmp.lt.s32.totalorder %v506, 0
      %vm899 = vcmp.lt.s32.totalorder %v517, 0
      %vm900 = vcmp.lt.s32.totalorder %v528, 0
      %vm901 = vcmp.lt.s32.totalorder %v539, 0
      %vm902 = vcmp.lt.s32.totalorder %v550, 0
      %vm903 = vcmp.lt.s32.totalorder %v561, 0
      %vm904 = vcmp.lt.s32.totalorder %v572, 0
      %vm905 = vcmp.lt.s32.totalorder %v583, 0
      %vm906 = vcmp.lt.s32.totalorder %v594, 0
      %vm907 = vcmp.lt.s32.totalorder %v605, 0
      %vm908 = vcmp.lt.s32.totalorder %v616, 0
      %vm909 = vcmp.lt.s32.totalorder %v627, 0
      %vm910 = vcmp.lt.s32.totalorder %v638, 0
      %vm911 = vcmp.lt.s32.totalorder %v649, 0
      %vm912 = vcmp.lt.s32.totalorder %v660, 0
      %vm913 = vcmp.lt.s32.totalorder %v671, 0
      %vm914 = vcmp.lt.s32.totalorder %v682, 0
      %vm915 = vcmp.lt.s32.totalorder %v693, 0
      %vm916 = vcmp.lt.s32.totalorder %v704, 0
      %vm917 = vcmp.lt.s32.totalorder %v715, 0
      %vm918 = vcmp.lt.s32.totalorder %v726, 0
      %vm919 = vcmp.lt.s32.totalorder %v737, 0
      %vm920 = vcmp.lt.s32.totalorder %v748, 0
      %vm921 = vcmp.lt.s32.totalorder %v759, 0
      %vm922 = vcmp.lt.s32.totalorder %v770, 0
      %vm923 = vcmp.lt.s32.totalorder %v781, 0
      %vm924 = vcmp.lt.s32.totalorder %v792, 0
      %vm925 = vcmp.lt.s32.totalorder %v803, 0
      %vm926 = vcmp.lt.s32.totalorder %v814, 0
      %vm927 = vcmp.lt.s32.totalorder %v825, 0
      %vm928 = vcmp.lt.s32.totalorder %v836, 0
      %vm929 = vcmp.lt.s32.totalorder %v847, 0
      %vm930 = vcmp.lt.s32.totalorder %v858, 0
      %vm931 = vmand %vm895, %vm859
      %vm932 = vmand %vm896, %vm860
      %vm933 = vmand %vm897, %vm861
      %vm934 = vmand %vm898, %vm862
      %vm935 = vmand %vm899, %vm863
      %vm936 = vmand %vm900, %vm864
      %vm937 = vmand %vm901, %vm865
      %vm938 = vmand %vm902, %vm866
      %vm939 = vmand %vm903, %vm867
      %vm940 = vmand %vm904, %vm868
      %vm941 = vmand %vm905, %vm869
      %vm942 = vmand %vm906, %vm870
      %vm943 = vmand %vm907, %vm871
      %vm944 = vmand %vm908, %vm872
      %vm945 = vmand %vm909, %vm873
      %vm946 = vmand %vm910, %vm874
      %vm947 = vmand %vm911, %vm875
      %vm948 = vmand %vm912, %vm876
      %vm949 = vmand %vm913, %vm877
      %vm950 = vmand %vm914, %vm878
      %vm951 = vmand %vm915, %vm879
      %vm952 = vmand %vm916, %vm880
      %vm953 = vmand %vm917, %vm881
      %vm954 = vmand %vm918, %vm882
      %vm955 = vmand %vm919, %vm883
      %vm956 = vmand %vm920, %vm884
      %vm957 = vmand %vm921, %vm885
      %vm958 = vmand %vm922, %vm886
      %vm959 = vmand %vm923, %vm887
      %vm960 = vmand %vm924, %vm888
      %vm961 = vmand %vm925, %vm889
      %vm962 = vmand %vm926, %vm890
      %vm963 = vmand %vm927, %vm891
      %vm964 = vmand %vm928, %vm892
      %vm965 = vmand %vm929, %vm893
      %vm966 = vmand %vm930, %vm894
      %v967 = vadd.s32 %v473, 18
      %v968 = vadd.s32 %v484, 18
      %v969 = vadd.s32 %v495, 18
      %v970 = vadd.s32 %v506, 18
      %v971 = vadd.s32 %v517, 18
      %v972 = vadd.s32 %v528, 18
      %v973 = vadd.s32 %v539, 18
      %v974 = vadd.s32 %v550, 18
      %v975 = vadd.s32 %v561, 18
      %v976 = vadd.s32 %v572, 18
      %v977 = vadd.s32 %v583, 18
      %v978 = vadd.s32 %v594, 18
      %v979 = vadd.s32 %v605, 18
      %v980 = vadd.s32 %v616, 18
      %v981 = vadd.s32 %v627, 18
      %v982 = vadd.s32 %v638, 18
      %v983 = vadd.s32 %v649, 18
      %v984 = vadd.s32 %v660, 18
      %v985 = vadd.s32 %v671, 18
      %v986 = vadd.s32 %v682, 18
      %v987 = vadd.s32 %v693, 18
      %v988 = vadd.s32 %v704, 18
      %v989 = vadd.s32 %v715, 18
      %v990 = vadd.s32 %v726, 18
      %v991 = vadd.s32 %v737, 18
      %v992 = vadd.s32 %v748, 18
      %v993 = vadd.s32 %v759, 18
      %v994 = vadd.s32 %v770, 18
      %v995 = vadd.s32 %v781, 18
      %v996 = vadd.s32 %v792, 18
      %v997 = vadd.s32 %v803, 18
      %v998 = vadd.s32 %v814, 18
      %v999 = vadd.s32 %v825, 18
      %v1000 = vadd.s32 %v836, 18
      %v1001 = vadd.s32 %v847, 18
      %v1002 = vadd.s32 %v858, 18
      %v1003 = vsel %vm931, %v967, %v473
      %v1004 = vsel %vm932, %v968, %v484
      %v1005 = vsel %vm933, %v969, %v495
      %v1006 = vsel %vm934, %v970, %v506
      %v1007 = vsel %vm935, %v971, %v517
      %v1008 = vsel %vm936, %v972, %v528
      %v1009 = vsel %vm937, %v973, %v539
      %v1010 = vsel %vm938, %v974, %v550
      %v1011 = vsel %vm939, %v975, %v561
      %v1012 = vsel %vm940, %v976, %v572
      %v1013 = vsel %vm941, %v977, %v583
      %v1014 = vsel %vm942, %v978, %v594
      %v1015 = vsel %vm943, %v979, %v605
      %v1016 = vsel %vm944, %v980, %v616
      %v1017 = vsel %vm945, %v981, %v627
      %v1018 = vsel %vm946, %v982, %v638
      %v1019 = vsel %vm947, %v983, %v649
      %v1020 = vsel %vm948, %v984, %v660
      %v1021 = vsel %vm949, %v985, %v671
      %v1022 = vsel %vm950, %v986, %v682
      %v1023 = vsel %vm951, %v987, %v693
      %v1024 = vsel %vm952, %v988, %v704
      %v1025 = vsel %vm953, %v989, %v715
      %v1026 = vsel %vm954, %v990, %v726
      %v1027 = vsel %vm955, %v991, %v737
      %v1028 = vsel %vm956, %v992, %v748
      %v1029 = vsel %vm957, %v993, %v759
      %v1030 = vsel %vm958, %v994, %v770
      %v1031 = vsel %vm959, %v995, %v781
      %v1032 = vsel %vm960, %v996, %v792
      %v1033 = vsel %vm961, %v997, %v803
      %v1034 = vsel %vm962, %v998, %v814
      %v1035 = vsel %vm963, %v999, %v825
      %v1036 = vsel %vm964, %v1000, %v836
      %v1037 = vsel %vm965, %v1001, %v847
      %v1038 = vsel %vm966, %v1002, %v858
      %vm1039 = vcmp.lt.s32.totalorder %v1003, 16
      %vm1040 = vcmp.lt.s32.totalorder %v1004, 16
      %vm1041 = vcmp.lt.s32.totalorder %v1005, 16
      %vm1042 = vcmp.lt.s32.totalorder %v1006, 16
      %vm1043 = vcmp.lt.s32.totalorder %v1007, 16
      %vm1044 = vcmp.lt.s32.totalorder %v1008, 16
      %vm1045 = vcmp.lt.s32.totalorder %v1009, 16
      %vm1046 = vcmp.lt.s32.totalorder %v1010, 16
      %vm1047 = vcmp.lt.s32.totalorder %v1011, 16
      %vm1048 = vcmp.lt.s32.totalorder %v1012, 16
      %vm1049 = vcmp.lt.s32.totalorder %v1013, 16
      %vm1050 = vcmp.lt.s32.totalorder %v1014, 16
      %vm1051 = vcmp.lt.s32.totalorder %v1015, 16
      %vm1052 = vcmp.lt.s32.totalorder %v1016, 16
      %vm1053 = vcmp.lt.s32.totalorder %v1017, 16
      %vm1054 = vcmp.lt.s32.totalorder %v1018, 16
      %vm1055 = vcmp.lt.s32.totalorder %v1019, 16
      %vm1056 = vcmp.lt.s32.totalorder %v1020, 16
      %vm1057 = vcmp.lt.s32.totalorder %v1021, 16
      %vm1058 = vcmp.lt.s32.totalorder %v1022, 16
      %vm1059 = vcmp.lt.s32.totalorder %v1023, 16
      %vm1060 = vcmp.lt.s32.totalorder %v1024, 16
      %vm1061 = vcmp.lt.s32.totalorder %v1025, 16
      %vm1062 = vcmp.lt.s32.totalorder %v1026, 16
      %vm1063 = vcmp.lt.s32.totalorder %v1027, 16
      %vm1064 = vcmp.lt.s32.totalorder %v1028, 16
      %vm1065 = vcmp.lt.s32.totalorder %v1029, 16
      %vm1066 = vcmp.lt.s32.totalorder %v1030, 16
      %vm1067 = vcmp.lt.s32.totalorder %v1031, 16
      %vm1068 = vcmp.lt.s32.totalorder %v1032, 16
      %vm1069 = vcmp.lt.s32.totalorder %v1033, 16
      %vm1070 = vcmp.lt.s32.totalorder %v1034, 16
      %vm1071 = vcmp.lt.s32.totalorder %v1035, 16
      %vm1072 = vcmp.lt.s32.totalorder %v1036, 16
      %vm1073 = vcmp.lt.s32.totalorder %v1037, 16
      %vm1074 = vcmp.lt.s32.totalorder %v1038, 16
      %v1076 = vlaneseq
      %v1077 = vshrl.u32 %v1076, 7
      %v1078 = vsub.s32 0, %v1077
      %v1079 = vrot.slane %v342, %v1078
      %v1117 = vunpack.c.l.b16 %v390
      %v1118 = vunpack.c.l.b16 %v391
      %v1119 = vunpack.c.l.b16 %v392
      %v1120 = vunpack.c.l.b16 %v393
      %v1121 = vunpack.c.l.b16 %v394
      %v1122 = vunpack.c.l.b16 %v395
      %v1123 = vunpack.c.l.b16 %v396
      %v1124 = vunpack.c.l.b16 %v397
      %v1125 = vunpack.c.l.b16 %v398
      %v1126 = vunpack.c.l.b16 %v399
      %v1127 = vunpack.c.l.b16 %v400
      %v1128 = vunpack.c.l.b16 %v401
      %v1129 = vunpack.c.l.b16 %v402
      %v1130 = vunpack.c.l.b16 %v403
      %v1131 = vunpack.c.l.b16 %v404
      %v1132 = vunpack.c.l.b16 %v405
      %v1133 = vunpack.c.l.b16 %v406
      %v1134 = vunpack.c.l.b16 %v407
      %v1135 = vunpack.c.l.b16 %v408
      %v1136 = vunpack.c.l.b16 %v409
      %v1137 = vunpack.c.l.b16 %v410
      %v1138 = vunpack.c.l.b16 %v411
      %v1139 = vunpack.c.l.b16 %v412
      %v1140 = vunpack.c.l.b16 %v413
      %v1141 = vunpack.c.l.b16 %v414
      %v1142 = vunpack.c.l.b16 %v415
      %v1143 = vunpack.c.l.b16 %v416
      %v1144 = vunpack.c.l.b16 %v417
      %v1145 = vunpack.c.l.b16 %v418
      %v1146 = vunpack.c.l.b16 %v419
      %v1147 = vunpack.c.l.b16 %v420
      %v1148 = vunpack.c.l.b16 %v421
      %v1149 = vunpack.c.l.b16 %v422
      %v1150 = vunpack.c.l.b16 %v423
      %v1151 = vunpack.c.l.b16 %v424
      %v1152 = vunpack.c.l.b16 %v425
      %v1153 = vpack.c.b16 %v1118, %v1117
      %v1154 = vpack.c.b16 %v1120, %v1119
      %v1155 = vpack.c.b16 %v1122, %v1121
      %v1156 = vpack.c.b16 %v1124, %v1123
      %v1157 = vpack.c.b16 %v1126, %v1125
      %v1158 = vpack.c.b16 %v1128, %v1127
      %v1159 = vpack.c.b16 %v1130, %v1129
      %v1160 = vpack.c.b16 %v1132, %v1131
      %v1161 = vpack.c.b16 %v1134, %v1133
      %v1162 = vpack.c.b16 %v1136, %v1135
      %v1163 = vpack.c.b16 %v1138, %v1137
      %v1164 = vpack.c.b16 %v1140, %v1139
      %v1165 = vpack.c.b16 %v1142, %v1141
      %v1166 = vpack.c.b16 %v1144, %v1143
      %v1167 = vpack.c.b16 %v1146, %v1145
      %v1168 = vpack.c.b16 %v1148, %v1147
      %v1169 = vpack.c.b16 %v1150, %v1149
      %v1170 = vpack.c.b16 %v1152, %v1151
      %v1176 = vunpack.c.l.b16 %v327
      %v1177 = vunpack.c.l.b16 %v328
      %v1178 = vunpack.c.l.b16 %v329
      %v1179 = vunpack.c.l.b16 %v330
      %v1180 = vunpack.c.l.b16 %v331
      %v1181 = vpack.c.b16 %v1177, %v1176
      %v1182 = vpack.c.b16 %v1179, %v1178
      %v1183 = vpack.c.b16 %v1180, %v1180
      %vm1186 = vcmask 293888
      %v1188 = vsel %vm1186, %v1153, 0
      %v1191 = vsel %vm1186, %v1154, 0
      %v1194 = vsel %vm1186, %v1155, 0
      %v1197 = vsel %vm1186, %v1156, 0
      %v1200 = vsel %vm1186, %v1157, 0
      %v1203 = vsel %vm1186, %v1158, 0
      %v1206 = vsel %vm1186, %v1159, 0
      %v1209 = vsel %vm1186, %v1160, 0
      %v1212 = vsel %vm1186, %v1161, 0
      %v1215 = vsel %vm1186, %v1162, 0
      %v1218 = vsel %vm1186, %v1163, 0
      %v1221 = vsel %vm1186, %v1164, 0
      %v1224 = vsel %vm1186, %v1165, 0
      %v1227 = vsel %vm1186, %v1166, 0
      %v1230 = vsel %vm1186, %v1167, 0
      %v1233 = vsel %vm1186, %v1168, 0
      %v1236 = vsel %vm1186, %v1169, 0
      %v1239 = vsel %vm1186, %v1170, 0
      %vm1241 = vcmask 1041408
      %v1243 = vsel %vm1241, %v1183, 0
      %1245 = vmatprep.subr.bf16.mxu0 0
      %1246 = vmatpush1.bf16.msra.mxu0 %v1181
      %1247 = vmatprep.subr.bf16.mxu0 0
      %1248 = vmatpush1.bf16.msra.mxu0 %v1182
      %1249 = vmatprep.subr.bf16.mxu0 0
      %1250 = vmatpush1.bf16.msra.mxu0 %v1243
      %1251 = vmatprep.subr.bf16.mxu0 0
      %1252 = vmatpush1.bf16.msra.mxu0 0
      %1253 = vmatprep.subr.bf16.mxu0 0
      %1254 = vmatpush1.bf16.msra.mxu0 0
      %1255 = vmatprep.subr.bf16.mxu0 0
      %1256 = vmatpush1.bf16.msra.mxu0 0
      %1257 = vmatprep.subr.bf16.mxu0 0
      %1258 = vmatpush1.bf16.msra.mxu0 0
      %1259 = vmatprep.subr.bf16.mxu0 0
      %1260 = vmatpush1.bf16.msra.mxu0 0
      %1261 = vmatprep.subr.bf16.mxu0 0
      %1262 = vmatpush1.bf16.msra.mxu0 0
      %1263 = vmatprep.subr.bf16.mxu0 0
      %1264 = vmatpush1.bf16.msra.mxu0 0
      %1265 = vmatprep.subr.bf16.mxu0 0
      %1266 = vmatpush1.bf16.msra.mxu0 0
      %1267 = vmatprep.subr.bf16.mxu0 0
      %1268 = vmatpush1.bf16.msra.mxu0 0
      %1269 = vmatprep.subr.bf16.mxu0 0
      %1270 = vmatpush1.bf16.msra.mxu0 0
      %1271 = vmatprep.subr.bf16.mxu0 0
      %1272 = vmatpush1.bf16.msra.mxu0 0
      %1273 = vmatprep.subr.bf16.mxu0 0
      %1274 = vmatpush1.bf16.msra.mxu0 0
      %1275 = vmatprep.subr.bf16.mxu0 0
      %1276 = vmatpush1.bf16.msra.mxu0 0
      %1277 = vmatprep.mubr.bf16.mxu0 0
      %1278 = vmatmul.mubr.bf16.gmra.mrb[0].mxu0 %v1188
      %v1279 = vpop.f32.mrb[0].mxu0
      %v1280 = vadd.f32 %v1079, %v1279
      %v1281 = vpop.f32.mrb[0].mxu0
      %v1282 = vpop.f32.mrb[0].mxu0
      %v1283 = vadd.f32 %v1079, %v1282
      %v1284 = vpop.f32.mrb[0].mxu0
      %1285 = vmatprep.mubr.bf16.mxu0 0
      %1286 = vmatmul.mubr.bf16.gmra.mrb[0].mxu0 %v1191
      %v1287 = vpop.f32.mrb[0].mxu0
      %v1288 = vadd.f32 %v1079, %v1287
      %v1289 = vpop.f32.mrb[0].mxu0
      %v1290 = vpop.f32.mrb[0].mxu0
      %v1291 = vadd.f32 %v1079, %v1290
      %v1292 = vpop.f32.mrb[0].mxu0
      %1293 = vmatprep.mubr.bf16.mxu0 0
      %1294 = vmatmul.mubr.bf16.gmra.mrb[0].mxu0 %v1194
      %v1295 = vpop.f32.mrb[0].mxu0
      %v1296 = vadd.f32 %v1079, %v1295
      %v1297 = vpop.f32.mrb[0].mxu0
      %v1298 = vpop.f32.mrb[0].mxu0
      %v1299 = vadd.f32 %v1079, %v1298
      %v1300 = vpop.f32.mrb[0].mxu0
      %1301 = vmatprep.mubr.bf16.mxu0 0
      %1302 = vmatmul.mubr.bf16.gmra.mrb[0].mxu0 %v1197
      %v1303 = vpop.f32.mrb[0].mxu0
      %v1304 = vadd.f32 %v1079, %v1303
      %v1305 = vpop.f32.mrb[0].mxu0
      %v1306 = vpop.f32.mrb[0].mxu0
      %v1307 = vadd.f32 %v1079, %v1306
      %v1308 = vpop.f32.mrb[0].mxu0
      %1309 = vmatprep.mubr.bf16.mxu0 0
      %1310 = vmatmul.mubr.bf16.gmra.mrb[0].mxu0 %v1200
      %v1311 = vpop.f32.mrb[0].mxu0
      %v1312 = vadd.f32 %v1079, %v1311
      %v1313 = vpop.f32.mrb[0].mxu0
      %v1314 = vpop.f32.mrb[0].mxu0
      %v1315 = vadd.f32 %v1079, %v1314
      %v1316 = vpop.f32.mrb[0].mxu0
      %1317 = vmatprep.mubr.bf16.mxu0 0
      %1318 = vmatmul.mubr.bf16.gmra.mrb[0].mxu0 %v1203
      %v1319 = vpop.f32.mrb[0].mxu0
      %v1320 = vadd.f32 %v1079, %v1319
      %v1321 = vpop.f32.mrb[0].mxu0
      %v1322 = vpop.f32.mrb[0].mxu0
      %v1323 = vadd.f32 %v1079, %v1322
      %v1324 = vpop.f32.mrb[0].mxu0
      %1325 = vmatprep.mubr.bf16.mxu0 0
      %1326 = vmatmul.mubr.bf16.gmra.mrb[0].mxu0 %v1206
      %v1327 = vpop.f32.mrb[0].mxu0
      %v1328 = vadd.f32 %v1079, %v1327
      %v1329 = vpop.f32.mrb[0].mxu0
      %v1330 = vpop.f32.mrb[0].mxu0
      %v1331 = vadd.f32 %v1079, %v1330
      %v1332 = vpop.f32.mrb[0].mxu0
      %1333 = vmatprep.mubr.bf16.mxu0 0
      %1334 = vmatmul.mubr.bf16.gmra.mrb[0].mxu0 %v1209
      %v1335 = vpop.f32.mrb[0].mxu0
      %v1336 = vadd.f32 %v1079, %v1335
      %v1337 = vpop.f32.mrb[0].mxu0
      %v1338 = vpop.f32.mrb[0].mxu0
      %v1339 = vadd.f32 %v1079, %v1338
      %v1340 = vpop.f32.mrb[0].mxu0
      %1341 = vmatprep.mubr.bf16.mxu0 0
      %1342 = vmatmul.mubr.bf16.gmra.mrb[0].mxu0 %v1212
      %v1343 = vpop.f32.mrb[0].mxu0
      %v1344 = vadd.f32 %v1079, %v1343
      %v1345 = vpop.f32.mrb[0].mxu0
      %v1346 = vpop.f32.mrb[0].mxu0
      %v1347 = vadd.f32 %v1079, %v1346
      %v1348 = vpop.f32.mrb[0].mxu0
      %1349 = vmatprep.mubr.bf16.mxu0 0
      %1350 = vmatmul.mubr.bf16.gmra.mrb[0].mxu0 %v1215
      %v1351 = vpop.f32.mrb[0].mxu0
      %v1352 = vadd.f32 %v1079, %v1351
      %v1353 = vpop.f32.mrb[0].mxu0
      %v1354 = vpop.f32.mrb[0].mxu0
      %v1355 = vadd.f32 %v1079, %v1354
      %v1356 = vpop.f32.mrb[0].mxu0
      %1357 = vmatprep.mubr.bf16.mxu0 0
      %1358 = vmatmul.mubr.bf16.gmra.mrb[0].mxu0 %v1218
      %v1359 = vpop.f32.mrb[0].mxu0
      %v1360 = vadd.f32 %v1079, %v1359
      %v1361 = vpop.f32.mrb[0].mxu0
      %v1362 = vpop.f32.mrb[0].mxu0
      %v1363 = vadd.f32 %v1079, %v1362
      %v1364 = vpop.f32.mrb[0].mxu0
      %1365 = vmatprep.mubr.bf16.mxu0 0
      %1366 = vmatmul.mubr.bf16.gmra.mrb[0].mxu0 %v1221
      %v1367 = vpop.f32.mrb[0].mxu0
      %v1368 = vadd.f32 %v1079, %v1367
      %v1369 = vpop.f32.mrb[0].mxu0
      %v1370 = vpop.f32.mrb[0].mxu0
      %v1371 = vadd.f32 %v1079, %v1370
      %v1372 = vpop.f32.mrb[0].mxu0
      %1373 = vmatprep.mubr.bf16.mxu0 0
      %1374 = vmatmul.mubr.bf16.gmra.mrb[0].mxu0 %v1224
      %v1375 = vpop.f32.mrb[0].mxu0
      %v1376 = vadd.f32 %v1079, %v1375
      %v1377 = vpop.f32.mrb[0].mxu0
      %v1378 = vpop.f32.mrb[0].mxu0
      %v1379 = vadd.f32 %v1079, %v1378
      %v1380 = vpop.f32.mrb[0].mxu0
      %1381 = vmatprep.mubr.bf16.mxu0 0
      %1382 = vmatmul.mubr.bf16.gmra.mrb[0].mxu0 %v1227
      %v1383 = vpop.f32.mrb[0].mxu0
      %v1384 = vadd.f32 %v1079, %v1383
      %v1385 = vpop.f32.mrb[0].mxu0
      %v1386 = vpop.f32.mrb[0].mxu0
      %v1387 = vadd.f32 %v1079, %v1386
      %v1388 = vpop.f32.mrb[0].mxu0
      %1389 = vmatprep.mubr.bf16.mxu0 0
      %1390 = vmatmul.mubr.bf16.gmra.mrb[0].mxu0 %v1230
      %v1391 = vpop.f32.mrb[0].mxu0
      %v1392 = vadd.f32 %v1079, %v1391
      %v1393 = vpop.f32.mrb[0].mxu0
      %v1394 = vpop.f32.mrb[0].mxu0
      %v1395 = vadd.f32 %v1079, %v1394
      %v1396 = vpop.f32.mrb[0].mxu0
      %1397 = vmatprep.mubr.bf16.mxu0 0
      %1398 = vmatmul.mubr.bf16.gmra.mrb[0].mxu0 %v1233
      %v1399 = vpop.f32.mrb[0].mxu0
      %v1400 = vadd.f32 %v1079, %v1399
      %v1401 = vpop.f32.mrb[0].mxu0
      %v1402 = vpop.f32.mrb[0].mxu0
      %v1403 = vadd.f32 %v1079, %v1402
      %v1404 = vpop.f32.mrb[0].mxu0
      %1405 = vmatprep.mubr.bf16.mxu0 0
      %1406 = vmatmul.mubr.bf16.gmra.mrb[0].mxu0 %v1236
      %v1407 = vpop.f32.mrb[0].mxu0
      %v1408 = vadd.f32 %v1079, %v1407
      %v1409 = vpop.f32.mrb[0].mxu0
      %v1410 = vpop.f32.mrb[0].mxu0
      %v1411 = vadd.f32 %v1079, %v1410
      %v1412 = vpop.f32.mrb[0].mxu0
      %1413 = vmatprep.mubr.bf16.mxu0 0
      %1414 = vmatmul.mubr.bf16.gmra.mrb[0].mxu0 %v1239
      %v1415 = vpop.f32.mrb[0].mxu0
      %v1416 = vadd.f32 %v1079, %v1415
      %v1417 = vpop.f32.mrb[0].mxu0
      %v1418 = vpop.f32.mrb[0].mxu0
      %v1419 = vadd.f32 %v1079, %v1418
      %v1420 = vpop.f32.mrb[0].mxu0
      %1421 = vdwg.mxu0
      %v1422 = vmax.f32 %v1280, 0.0
      %v1423 = vmax.f32 %v1283, 0.0
      %v1424 = vmax.f32 %v1288, 0.0
      %v1425 = vmax.f32 %v1291, 0.0
      %v1426 = vmax.f32 %v1296, 0.0
      %v1427 = vmax.f32 %v1299, 0.0
      %v1428 = vmax.f32 %v1304, 0.0
      %v1429 = vmax.f32 %v1307, 0.0
      %v1430 = vmax.f32 %v1312, 0.0
      %v1431 = vmax.f32 %v1315, 0.0
      %v1432 = vmax.f32 %v1320, 0.0
      %v1433 = vmax.f32 %v1323, 0.0
      %v1434 = vmax.f32 %v1328, 0.0
      %v1435 = vmax.f32 %v1331, 0.0
      %v1436 = vmax.f32 %v1336, 0.0
      %v1437 = vmax.f32 %v1339, 0.0
      %v1438 = vmax.f32 %v1344, 0.0
      %v1439 = vmax.f32 %v1347, 0.0
      %v1440 = vmax.f32 %v1352, 0.0
      %v1441 = vmax.f32 %v1355, 0.0
      %v1442 = vmax.f32 %v1360, 0.0
      %v1443 = vmax.f32 %v1363, 0.0
      %v1444 = vmax.f32 %v1368, 0.0
      %v1445 = vmax.f32 %v1371, 0.0
      %v1446 = vmax.f32 %v1376, 0.0
      %v1447 = vmax.f32 %v1379, 0.0
      %v1448 = vmax.f32 %v1384, 0.0
      %v1449 = vmax.f32 %v1387, 0.0
      %v1450 = vmax.f32 %v1392, 0.0
      %v1451 = vmax.f32 %v1395, 0.0
      %v1452 = vmax.f32 %v1400, 0.0
      %v1453 = vmax.f32 %v1403, 0.0
      %v1454 = vmax.f32 %v1408, 0.0
      %v1455 = vmax.f32 %v1411, 0.0
      %v1456 = vmax.f32 %v1416, 0.0
      %v1457 = vmax.f32 %v1419, 0.0
      %v1458 = vsel %vm1039, %v1422, 0.0
      %v1459 = vsel %vm1040, %v1423, 0.0
      %v1460 = vsel %vm1041, %v1424, 0.0
      %v1461 = vsel %vm1042, %v1425, 0.0
      %v1462 = vsel %vm1043, %v1426, 0.0
      %v1463 = vsel %vm1044, %v1427, 0.0
      %v1464 = vsel %vm1045, %v1428, 0.0
      %v1465 = vsel %vm1046, %v1429, 0.0
      %v1466 = vsel %vm1047, %v1430, 0.0
      %v1467 = vsel %vm1048, %v1431, 0.0
      %v1468 = vsel %vm1049, %v1432, 0.0
      %v1469 = vsel %vm1050, %v1433, 0.0
      %v1470 = vsel %vm1051, %v1434, 0.0
      %v1471 = vsel %vm1052, %v1435, 0.0
      %v1472 = vsel %vm1053, %v1436, 0.0
      %v1473 = vsel %vm1054, %v1437, 0.0
      %v1474 = vsel %vm1055, %v1438, 0.0
      %v1475 = vsel %vm1056, %v1439, 0.0
      %v1476 = vsel %vm1057, %v1440, 0.0
      %v1477 = vsel %vm1058, %v1441, 0.0
      %v1478 = vsel %vm1059, %v1442, 0.0
      %v1479 = vsel %vm1060, %v1443, 0.0
      %v1480 = vsel %vm1061, %v1444, 0.0
      %v1481 = vsel %vm1062, %v1445, 0.0
      %v1482 = vsel %vm1063, %v1446, 0.0
      %v1483 = vsel %vm1064, %v1447, 0.0
      %v1484 = vsel %vm1065, %v1448, 0.0
      %v1485 = vsel %vm1066, %v1449, 0.0
      %v1486 = vsel %vm1067, %v1450, 0.0
      %v1487 = vsel %vm1068, %v1451, 0.0
      %v1488 = vsel %vm1069, %v1452, 0.0
      %v1489 = vsel %vm1070, %v1453, 0.0
      %v1490 = vsel %vm1071, %v1454, 0.0
      %v1491 = vsel %vm1072, %v1455, 0.0
      %v1492 = vsel %vm1073, %v1456, 0.0
      %v1493 = vsel %vm1074, %v1457, 0.0
      %v1494 = vpack.c.bf16 %v1459, %v1458
      %v1495 = vpack.c.bf16 %v1461, %v1460
      %v1496 = vpack.c.bf16 %v1463, %v1462
      %v1497 = vpack.c.bf16 %v1465, %v1464
      %v1498 = vpack.c.bf16 %v1467, %v1466
      %v1499 = vpack.c.bf16 %v1469, %v1468
      %v1500 = vpack.c.bf16 %v1471, %v1470
      %v1501 = vpack.c.bf16 %v1473, %v1472
      %v1502 = vpack.c.bf16 %v1475, %v1474
      %v1503 = vpack.c.bf16 %v1477, %v1476
      %v1504 = vpack.c.bf16 %v1479, %v1478
      %v1505 = vpack.c.bf16 %v1481, %v1480
      %v1506 = vpack.c.bf16 %v1483, %v1482
      %v1507 = vpack.c.bf16 %v1485, %v1484
      %v1508 = vpack.c.bf16 %v1487, %v1486
      %v1509 = vpack.c.bf16 %v1489, %v1488
      %v1510 = vpack.c.bf16 %v1491, %v1490
      %v1511 = vpack.c.bf16 %v1493, %v1492
      %v1530 = vunpack.c.l.b16 %v1494
      %v1531 = vunpack.c.h.b16 %v1494
      %v1532 = vunpack.c.l.b16 %v1495
      %v1533 = vunpack.c.h.b16 %v1495
      %v1534 = vunpack.c.l.b16 %v1496
      %v1535 = vunpack.c.h.b16 %v1496
      %v1536 = vunpack.c.l.b16 %v1497
      %v1537 = vunpack.c.h.b16 %v1497
      %v1538 = vunpack.c.l.b16 %v1498
      %v1539 = vunpack.c.h.b16 %v1498
      %v1540 = vunpack.c.l.b16 %v1499
      %v1541 = vunpack.c.h.b16 %v1499
      %v1542 = vunpack.c.l.b16 %v1500
      %v1543 = vunpack.c.h.b16 %v1500
      %v1544 = vunpack.c.l.b16 %v1501
      %v1545 = vunpack.c.h.b16 %v1501
      %v1546 = vunpack.c.l.b16 %v1502
      %v1547 = vunpack.c.h.b16 %v1502
      %v1548 = vunpack.c.l.b16 %v1503
      %v1549 = vunpack.c.h.b16 %v1503
      %v1550 = vunpack.c.l.b16 %v1504
      %v1551 = vunpack.c.h.b16 %v1504
      %v1552 = vunpack.c.l.b16 %v1505
      %v1553 = vunpack.c.h.b16 %v1505
      %v1554 = vunpack.c.l.b16 %v1506
      %v1555 = vunpack.c.h.b16 %v1506
      %v1556 = vunpack.c.l.b16 %v1507
      %v1557 = vunpack.c.h.b16 %v1507
      %v1558 = vunpack.c.l.b16 %v1508
      %v1559 = vunpack.c.h.b16 %v1508
      %v1560 = vunpack.c.l.b16 %v1509
      %v1561 = vunpack.c.h.b16 %v1509
      %v1562 = vunpack.c.l.b16 %v1510
      %v1563 = vunpack.c.h.b16 %v1510
      %v1564 = vunpack.c.l.b16 %v1511
      %v1565 = vunpack.c.h.b16 %v1511
      %v1566 = vpack.c.b16 %v1530, %v1530
      %v1567 = vpack.c.b16 %v1531, %v1531
      %v1568 = vpack.c.b16 %v1532, %v1532
      %v1569 = vpack.c.b16 %v1533, %v1533
      %v1570 = vpack.c.b16 %v1534, %v1534
      %v1571 = vpack.c.b16 %v1535, %v1535
      %v1572 = vpack.c.b16 %v1536, %v1536
      %v1573 = vpack.c.b16 %v1537, %v1537
      %v1574 = vpack.c.b16 %v1538, %v1538
      %v1575 = vpack.c.b16 %v1539, %v1539
      %v1576 = vpack.c.b16 %v1540, %v1540
      %v1577 = vpack.c.b16 %v1541, %v1541
      %v1578 = vpack.c.b16 %v1542, %v1542
      %v1579 = vpack.c.b16 %v1543, %v1543
      %v1580 = vpack.c.b16 %v1544, %v1544
      %v1581 = vpack.c.b16 %v1545, %v1545
      %v1582 = vpack.c.b16 %v1546, %v1546
      %v1583 = vpack.c.b16 %v1547, %v1547
      %v1584 = vpack.c.b16 %v1548, %v1548
      %v1585 = vpack.c.b16 %v1549, %v1549
      %v1586 = vpack.c.b16 %v1550, %v1550
      %v1587 = vpack.c.b16 %v1551, %v1551
      %v1588 = vpack.c.b16 %v1552, %v1552
      %v1589 = vpack.c.b16 %v1553, %v1553
      %v1590 = vpack.c.b16 %v1554, %v1554
      %v1591 = vpack.c.b16 %v1555, %v1555
      %v1592 = vpack.c.b16 %v1556, %v1556
      %v1593 = vpack.c.b16 %v1557, %v1557
      %v1594 = vpack.c.b16 %v1558, %v1558
      %v1595 = vpack.c.b16 %v1559, %v1559
      %v1596 = vpack.c.b16 %v1560, %v1560
      %v1597 = vpack.c.b16 %v1561, %v1561
      %v1598 = vpack.c.b16 %v1562, %v1562
      %v1599 = vpack.c.b16 %v1563, %v1563
      %v1600 = vpack.c.b16 %v1564, %v1564
      %v1601 = vpack.c.b16 %v1565, %v1565
      %vm1602 = vsmask.f32 1280
      %vm1603 = vsmask.f32 5392
      %vm1604 = vmor %vm1602, %vm1603
      %v1606 = vshrl.u32 %v1566, 16
      %v1608 = vrot.slane %v1606, 6
      %v1609 = vshll.u32 %v1566, 16
      %v1611 = vrot.slane %v1609, 7
      %v1612 = vor.u32 %v1608, %v1611
      %v1613 = vrot.slane %v1612, 4
      %v1615 = vshrl.u32 %v1567, 16
      %v1617 = vrot.slane %v1615, 6
      %v1618 = vshll.u32 %v1567, 16
      %v1620 = vrot.slane %v1618, 7
      %v1621 = vor.u32 %v1617, %v1620
      %v1622 = vsel %vm1604, %v1613, %v1621
      %v1623 = vrot.slane %v1621, 4
      %v1625 = vshrl.u32 %v1568, 16
      %v1627 = vrot.slane %v1625, 6
      %v1628 = vshll.u32 %v1568, 16
      %v1630 = vrot.slane %v1628, 7
      %v1631 = vor.u32 %v1627, %v1630
      %v1632 = vsel %vm1604, %v1623, %v1631
      %v1633 = vrot.slane %v1631, 4
      %v1635 = vshrl.u32 %v1569, 16
      %v1637 = vrot.slane %v1635, 6
      %v1638 = vshll.u32 %v1569, 16
      %v1640 = vrot.slane %v1638, 7
      %v1641 = vor.u32 %v1637, %v1640
      %v1642 = vsel %vm1604, %v1633, %v1641
      %v1643 = vrot.slane %v1641, 4
      %v1645 = vshrl.u32 %v1570, 16
      %v1647 = vrot.slane %v1645, 6
      %v1648 = vshll.u32 %v1570, 16
      %v1650 = vrot.slane %v1648, 7
      %v1651 = vor.u32 %v1647, %v1650
      %v1652 = vsel %vm1604, %v1643, %v1651
      %v1653 = vrot.slane %v1651, 4
      %v1655 = vshrl.u32 %v1571, 16
      %v1657 = vrot.slane %v1655, 6
      %v1658 = vshll.u32 %v1571, 16
      %v1660 = vrot.slane %v1658, 7
      %v1661 = vor.u32 %v1657, %v1660
      %v1662 = vsel %vm1604, %v1653, %v1661
      %v1663 = vrot.slane %v1661, 4
      %v1665 = vshrl.u32 %v1572, 16
      %v1667 = vrot.slane %v1665, 6
      %v1668 = vshll.u32 %v1572, 16
      %v1670 = vrot.slane %v1668, 7
      %v1671 = vor.u32 %v1667, %v1670
      %v1672 = vsel %vm1604, %v1663, %v1671
      %v1673 = vrot.slane %v1671, 4
      %v1675 = vshrl.u32 %v1573, 16
      %v1677 = vrot.slane %v1675, 6
      %v1678 = vshll.u32 %v1573, 16
      %v1680 = vrot.slane %v1678, 7
      %v1681 = vor.u32 %v1677, %v1680
      %v1682 = vsel %vm1604, %v1673, %v1681
      %v1683 = vrot.slane %v1681, 4
      %v1685 = vshrl.u32 %v1574, 16
      %v1687 = vrot.slane %v1685, 6
      %v1688 = vshll.u32 %v1574, 16
      %v1690 = vrot.slane %v1688, 7
      %v1691 = vor.u32 %v1687, %v1690
      %v1692 = vsel %vm1604, %v1683, %v1691
      %v1693 = vrot.slane %v1691, 4
      %v1695 = vshrl.u32 %v1575, 16
      %v1697 = vrot.slane %v1695, 6
      %v1698 = vshll.u32 %v1575, 16
      %v1700 = vrot.slane %v1698, 7
      %v1701 = vor.u32 %v1697, %v1700
      %v1702 = vsel %vm1604, %v1693, %v1701
      %v1703 = vrot.slane %v1701, 4
      %v1705 = vshrl.u32 %v1576, 16
      %v1707 = vrot.slane %v1705, 6
      %v1708 = vshll.u32 %v1576, 16
      %v1710 = vrot.slane %v1708, 7
      %v1711 = vor.u32 %v1707, %v1710
      %v1712 = vsel %vm1604, %v1703, %v1711
      %v1713 = vrot.slane %v1711, 4
      %v1715 = vshrl.u32 %v1577, 16
      %v1717 = vrot.slane %v1715, 6
      %v1718 = vshll.u32 %v1577, 16
      %v1720 = vrot.slane %v1718, 7
      %v1721 = vor.u32 %v1717, %v1720
      %v1722 = vsel %vm1604, %v1713, %v1721
      %v1723 = vrot.slane %v1721, 4
      %v1725 = vshrl.u32 %v1578, 16
      %v1727 = vrot.slane %v1725, 6
      %v1728 = vshll.u32 %v1578, 16
      %v1730 = vrot.slane %v1728, 7
      %v1731 = vor.u32 %v1727, %v1730
      %v1732 = vsel %vm1604, %v1723, %v1731
      %v1733 = vrot.slane %v1731, 4
      %v1735 = vshrl.u32 %v1579, 16
      %v1737 = vrot.slane %v1735, 6
      %v1738 = vshll.u32 %v1579, 16
      %v1740 = vrot.slane %v1738, 7
      %v1741 = vor.u32 %v1737, %v1740
      %v1742 = vsel %vm1604, %v1733, %v1741
      %v1743 = vrot.slane %v1741, 4
      %v1745 = vshrl.u32 %v1580, 16
      %v1747 = vrot.slane %v1745, 6
      %v1748 = vshll.u32 %v1580, 16
      %v1750 = vrot.slane %v1748, 7
      %v1751 = vor.u32 %v1747, %v1750
      %v1752 = vsel %vm1604, %v1743, %v1751
      %v1753 = vrot.slane %v1751, 4
      %v1755 = vshrl.u32 %v1581, 16
      %v1757 = vrot.slane %v1755, 6
      %v1758 = vshll.u32 %v1581, 16
      %v1760 = vrot.slane %v1758, 7
      %v1761 = vor.u32 %v1757, %v1760
      %v1762 = vsel %vm1604, %v1753, %v1761
      %v1763 = vrot.slane %v1761, 4
      %v1765 = vshrl.u32 %v1582, 16
      %v1767 = vrot.slane %v1765, 6
      %v1768 = vshll.u32 %v1582, 16
      %v1770 = vrot.slane %v1768, 7
      %v1771 = vor.u32 %v1767, %v1770
      %v1772 = vsel %vm1604, %v1763, %v1771
      %v1773 = vrot.slane %v1771, 4
      %v1775 = vshrl.u32 %v1583, 16
      %v1777 = vrot.slane %v1775, 6
      %v1778 = vshll.u32 %v1583, 16
      %v1780 = vrot.slane %v1778, 7
      %v1781 = vor.u32 %v1777, %v1780
      %v1782 = vsel %vm1604, %v1773, %v1781
      %v1783 = vrot.slane %v1781, 4
      %v1785 = vshrl.u32 %v1584, 16
      %v1787 = vrot.slane %v1785, 6
      %v1788 = vshll.u32 %v1584, 16
      %v1790 = vrot.slane %v1788, 7
      %v1791 = vor.u32 %v1787, %v1790
      %v1792 = vsel %vm1604, %v1783, %v1791
      %v1793 = vrot.slane %v1791, 4
      %v1795 = vshrl.u32 %v1585, 16
      %v1797 = vrot.slane %v1795, 6
      %v1798 = vshll.u32 %v1585, 16
      %v1800 = vrot.slane %v1798, 7
      %v1801 = vor.u32 %v1797, %v1800
      %v1802 = vsel %vm1604, %v1793, %v1801
      %v1803 = vrot.slane %v1801, 4
      %v1805 = vshrl.u32 %v1586, 16
      %v1807 = vrot.slane %v1805, 6
      %v1808 = vshll.u32 %v1586, 16
      %v1810 = vrot.slane %v1808, 7
      %v1811 = vor.u32 %v1807, %v1810
      %v1812 = vsel %vm1604, %v1803, %v1811
      %v1813 = vrot.slane %v1811, 4
      %v1815 = vshrl.u32 %v1587, 16
      %v1817 = vrot.slane %v1815, 6
      %v1818 = vshll.u32 %v1587, 16
      %v1820 = vrot.slane %v1818, 7
      %v1821 = vor.u32 %v1817, %v1820
      %v1822 = vsel %vm1604, %v1813, %v1821
      %v1823 = vrot.slane %v1821, 4
      %v1825 = vshrl.u32 %v1588, 16
      %v1827 = vrot.slane %v1825, 6
      %v1828 = vshll.u32 %v1588, 16
      %v1830 = vrot.slane %v1828, 7
      %v1831 = vor.u32 %v1827, %v1830
      %v1832 = vsel %vm1604, %v1823, %v1831
      %v1833 = vrot.slane %v1831, 4
      %v1835 = vshrl.u32 %v1589, 16
      %v1837 = vrot.slane %v1835, 6
      %v1838 = vshll.u32 %v1589, 16
      %v1840 = vrot.slane %v1838, 7
      %v1841 = vor.u32 %v1837, %v1840
      %v1842 = vsel %vm1604, %v1833, %v1841
      %v1843 = vrot.slane %v1841, 4
      %v1845 = vshrl.u32 %v1590, 16
      %v1847 = vrot.slane %v1845, 6
      %v1848 = vshll.u32 %v1590, 16
      %v1850 = vrot.slane %v1848, 7
      %v1851 = vor.u32 %v1847, %v1850
      %v1852 = vsel %vm1604, %v1843, %v1851
      %v1853 = vrot.slane %v1851, 4
      %v1855 = vshrl.u32 %v1591, 16
      %v1857 = vrot.slane %v1855, 6
      %v1858 = vshll.u32 %v1591, 16
      %v1860 = vrot.slane %v1858, 7
      %v1861 = vor.u32 %v1857, %v1860
      %v1862 = vsel %vm1604, %v1853, %v1861
      %v1863 = vrot.slane %v1861, 4
      %v1865 = vshrl.u32 %v1592, 16
      %v1867 = vrot.slane %v1865, 6
      %v1868 = vshll.u32 %v1592, 16
      %v1870 = vrot.slane %v1868, 7
      %v1871 = vor.u32 %v1867, %v1870
      %v1872 = vsel %vm1604, %v1863, %v1871
      %v1873 = vrot.slane %v1871, 4
      %v1875 = vshrl.u32 %v1593, 16
      %v1877 = vrot.slane %v1875, 6
      %v1878 = vshll.u32 %v1593, 16
      %v1880 = vrot.slane %v1878, 7
      %v1881 = vor.u32 %v1877, %v1880
      %v1882 = vsel %vm1604, %v1873, %v1881
      %v1883 = vrot.slane %v1881, 4
      %v1885 = vshrl.u32 %v1594, 16
      %v1887 = vrot.slane %v1885, 6
      %v1888 = vshll.u32 %v1594, 16
      %v1890 = vrot.slane %v1888, 7
      %v1891 = vor.u32 %v1887, %v1890
      %v1892 = vsel %vm1604, %v1883, %v1891
      %v1893 = vrot.slane %v1891, 4
      %v1895 = vshrl.u32 %v1595, 16
      %v1897 = vrot.slane %v1895, 6
      %v1898 = vshll.u32 %v1595, 16
      %v1900 = vrot.slane %v1898, 7
      %v1901 = vor.u32 %v1897, %v1900
      %v1902 = vsel %vm1604, %v1893, %v1901
      %v1903 = vrot.slane %v1901, 4
      %v1905 = vshrl.u32 %v1596, 16
      %v1907 = vrot.slane %v1905, 6
      %v1908 = vshll.u32 %v1596, 16
      %v1910 = vrot.slane %v1908, 7
      %v1911 = vor.u32 %v1907, %v1910
      %v1912 = vsel %vm1604, %v1903, %v1911
      %v1913 = vrot.slane %v1911, 4
      %v1915 = vshrl.u32 %v1597, 16
      %v1917 = vrot.slane %v1915, 6
      %v1918 = vshll.u32 %v1597, 16
      %v1920 = vrot.slane %v1918, 7
      %v1921 = vor.u32 %v1917, %v1920
      %v1922 = vsel %vm1604, %v1913, %v1921
      %v1923 = vrot.slane %v1921, 4
      %v1925 = vshrl.u32 %v1598, 16
      %v1927 = vrot.slane %v1925, 6
      %v1928 = vshll.u32 %v1598, 16
      %v1930 = vrot.slane %v1928, 7
      %v1931 = vor.u32 %v1927, %v1930
      %v1932 = vsel %vm1604, %v1923, %v1931
      %v1933 = vrot.slane %v1931, 4
      %v1935 = vshrl.u32 %v1599, 16
      %v1937 = vrot.slane %v1935, 6
      %v1938 = vshll.u32 %v1599, 16
      %v1940 = vrot.slane %v1938, 7
      %v1941 = vor.u32 %v1937, %v1940
      %v1942 = vsel %vm1604, %v1933, %v1941
      %v1943 = vrot.slane %v1941, 4
      %v1945 = vshrl.u32 %v1600, 16
      %v1947 = vrot.slane %v1945, 6
      %v1948 = vshll.u32 %v1600, 16
      %v1950 = vrot.slane %v1948, 7
      %v1951 = vor.u32 %v1947, %v1950
      %v1952 = vsel %vm1604, %v1943, %v1951
      %v1953 = vrot.slane %v1951, 4
      %v1955 = vshrl.u32 %v1601, 16
      %v1957 = vrot.slane %v1955, 6
      %v1958 = vshll.u32 %v1601, 16
      %v1960 = vrot.slane %v1958, 7
      %v1961 = vor.u32 %v1957, %v1960
      %v1962 = vsel %vm1604, %v1953, %v1961
      %v1963 = vrot.slane %v1961, 4
      %vm2001 = vcmask 60417
      %vm2002 = vsmask.f32 7942
      %vm2003 = vmand %vm2001, %vm2002
      %v2004 = vld [vmem:[#allocation2 + $0x8] sm:$0xe]
      %v2005 = vsel %vm2003, %v1612, %v2004
      %2006 = vst [vmem:[#allocation2 + $0x8] sm:$0xe] %v2005
      %2007 = vst.msk [vmem:[#allocation2 + $0xc] sm:$0xf] %vm345, %v1622
      %2008 = vst.msk [vmem:[#allocation2 + $0x10] sm:$0xf] %vm345, %v1632
      %2009 = vst.msk [vmem:[#allocation2 + $0x14] sm:$0xf] %vm345, %v1642
      %2010 = vst.msk [vmem:[#allocation2 + $0x18] sm:$0xf] %vm345, %v1652
      %2011 = vst.msk [vmem:[#allocation2 + $0x1c] sm:$0xf] %vm345, %v1662
      %2012 = vst.msk [vmem:[#allocation2 + $0x20] sm:$0xf] %vm345, %v1672
      %2013 = vst.msk [vmem:[#allocation2 + $0x24] sm:$0xf] %vm345, %v1682
      %2014 = vst.msk [vmem:[#allocation2 + $0x28] sm:$0xf] %vm345, %v1692
      %2015 = vst.msk [vmem:[#allocation2 + $0x2c] sm:$0xf] %vm345, %v1702
      %2016 = vst.msk [vmem:[#allocation2 + $0x30] sm:$0xf] %vm345, %v1712
      %2017 = vst.msk [vmem:[#allocation2 + $0x34] sm:$0xf] %vm345, %v1722
      %2018 = vst.msk [vmem:[#allocation2 + $0x38] sm:$0xf] %vm345, %v1732
      %2019 = vst.msk [vmem:[#allocation2 + $0x3c] sm:$0xf] %vm345, %v1742
      %2020 = vst.msk [vmem:[#allocation2 + $0x40] sm:$0xf] %vm345, %v1752
      %2021 = vst.msk [vmem:[#allocation2 + $0x44] sm:$0xf] %vm345, %v1762
      %2022 = vst.msk [vmem:[#allocation2 + $0x48] sm:$0xf] %vm345, %v1772
      %2023 = vst.msk [vmem:[#allocation2 + $0x4c] sm:$0xf] %vm345, %v1782
      %2024 = vst.msk [vmem:[#allocation2 + $0x50] sm:$0xf] %vm345, %v1792
      %2025 = vst.msk [vmem:[#allocation2 + $0x54] sm:$0xf] %vm345, %v1802
      %2026 = vst.msk [vmem:[#allocation2 + $0x58] sm:$0xf] %vm345, %v1812
      %2027 = vst.msk [vmem:[#allocation2 + $0x5c] sm:$0xf] %vm345, %v1822
      %2028 = vst.msk [vmem:[#allocation2 + $0x60] sm:$0xf] %vm345, %v1832
      %2029 = vst.msk [vmem:[#allocation2 + $0x64] sm:$0xf] %vm345, %v1842
      %2030 = vst.msk [vmem:[#allocation2 + $0x68] sm:$0xf] %vm345, %v1852
      %2031 = vst.msk [vmem:[#allocation2 + $0x6c] sm:$0xf] %vm345, %v1862
      %2032 = vst.msk [vmem:[#allocation2 + $0x70] sm:$0xf] %vm345, %v1872
      %2033 = vst.msk [vmem:[#allocation2 + $0x74] sm:$0xf] %vm345, %v1882
      %2034 = vst.msk [vmem:[#allocation2 + $0x78] sm:$0xf] %vm345, %v1892
      %2035 = vst.msk [vmem:[#allocation2 + $0x7c] sm:$0xf] %vm345, %v1902
      %2036 = vst.msk [vmem:[#allocation2 + $0x80] sm:$0xf] %vm345, %v1912
      %2037 = vst.msk [vmem:[#allocation2 + $0x84] sm:$0xf] %vm345, %v1922
      %2038 = vst.msk [vmem:[#allocation2 + $0x88] sm:$0xf] %vm345, %v1932
      %2039 = vst.msk [vmem:[#allocation2 + $0x8c] sm:$0xf] %vm345, %v1942
      %2040 = vst.msk [vmem:[#allocation2 + $0x90] sm:$0xf] %vm345, %v1952
      %2041 = vst.msk [vmem:[#allocation2 + $0x94] sm:$0xf] %vm345, %v1962
      %vm2042 = vcmask 58368
      %vm2043 = vmand %vm2042, %vm1602
      %v2044 = vld [vmem:[#allocation2 + $0x98] sm:$0x3]
      %v2045 = vsel %vm2043, %v1963, %v2044
      %2046 = vst [vmem:[#allocation2 + $0x98] sm:$0x3] %v2045
      %v2047 = vld [vmem:[#allocation2] sm:$0xf]
      %v2048 = vld [vmem:[#allocation2 + $0x4] sm:$0xf]
      %v2049 = vld [vmem:[#allocation2 + $0x8] sm:$0xf]
      %v2050 = vld [vmem:[#allocation2 + $0xc] sm:$0xf]
      %v2051 = vld [vmem:[#allocation2 + $0x10] sm:$0xf]
      %v2052 = vld [vmem:[#allocation2 + $0x14] sm:$0xf]
      %v2053 = vld [vmem:[#allocation2 + $0x18] sm:$0xf]
      %v2054 = vld [vmem:[#allocation2 + $0x1c] sm:$0xf]
      %v2055 = vld [vmem:[#allocation2 + $0x20] sm:$0xf]
      %v2056 = vld [vmem:[#allocation2 + $0x24] sm:$0xf]
      %v2057 = vld [vmem:[#allocation2 + $0x28] sm:$0xf]
      %v2058 = vld [vmem:[#allocation2 + $0x2c] sm:$0xf]
      %v2059 = vld [vmem:[#allocation2 + $0x30] sm:$0xf]
      %v2060 = vld [vmem:[#allocation2 + $0x34] sm:$0xf]
      %v2061 = vld [vmem:[#allocation2 + $0x38] sm:$0xf]
      %v2062 = vld [vmem:[#allocation2 + $0x3c] sm:$0xf]
      %v2063 = vld [vmem:[#allocation2 + $0x40] sm:$0xf]
      %v2064 = vld [vmem:[#allocation2 + $0x44] sm:$0xf]
      %v2065 = vld [vmem:[#allocation2 + $0x48] sm:$0xf]
      %v2066 = vld [vmem:[#allocation2 + $0x4c] sm:$0xf]
      %v2067 = vld [vmem:[#allocation2 + $0x50] sm:$0xf]
      %v2068 = vld [vmem:[#allocation2 + $0x54] sm:$0xf]
      %v2069 = vld [vmem:[#allocation2 + $0x58] sm:$0xf]
      %v2070 = vld [vmem:[#allocation2 + $0x5c] sm:$0xf]
      %v2071 = vld [vmem:[#allocation2 + $0x60] sm:$0xf]
      %v2072 = vld [vmem:[#allocation2 + $0x64] sm:$0xf]
      %v2073 = vld [vmem:[#allocation2 + $0x68] sm:$0xf]
      %v2074 = vld [vmem:[#allocation2 + $0x6c] sm:$0xf]
      %v2075 = vld [vmem:[#allocation2 + $0x70] sm:$0xf]
      %v2076 = vld [vmem:[#allocation2 + $0x74] sm:$0xf]
      %v2077 = vld [vmem:[#allocation2 + $0x78] sm:$0xf]
      %v2078 = vld [vmem:[#allocation2 + $0x7c] sm:$0xf]
      %v2079 = vld [vmem:[#allocation2 + $0x80] sm:$0xf]
      %v2080 = vld [vmem:[#allocation2 + $0x84] sm:$0xf]
      %v2081 = vld [vmem:[#allocation2 + $0x88] sm:$0xf]
      %v2082 = vld [vmem:[#allocation2 + $0x8c] sm:$0xf]
      %v2083 = vld [vmem:[#allocation2 + $0x90] sm:$0x1]
      %v2121 = vunpack.c.l.b16 %v2047
      %v2122 = vunpack.c.l.b16 %v2048
      %v2123 = vunpack.c.l.b16 %v2049
      %v2124 = vunpack.c.l.b16 %v2050
      %v2125 = vunpack.c.l.b16 %v2051
      %v2126 = vunpack.c.l.b16 %v2052
      %v2127 = vunpack.c.l.b16 %v2053
      %v2128 = vunpack.c.l.b16 %v2054
      %v2129 = vunpack.c.l.b16 %v2055
      %v2130 = vunpack.c.l.b16 %v2056
      %v2131 = vunpack.c.l.b16 %v2057
      %v2132 = vunpack.c.l.b16 %v2058
      %v2133 = vunpack.c.l.b16 %v2059
      %v2134 = vunpack.c.l.b16 %v2060
      %v2135 = vunpack.c.l.b16 %v2061
      %v2136 = vunpack.c.l.b16 %v2062
      %v2137 = vunpack.c.l.b16 %v2063
      %v2138 = vunpack.c.l.b16 %v2064
      %v2139 = vunpack.c.l.b16 %v2065
      %v2140 = vunpack.c.l.b16 %v2066
      %v2141 = vunpack.c.l.b16 %v2067
      %v2142 = vunpack.c.l.b16 %v2068
      %v2143 = vunpack.c.l.b16 %v2069
      %v2144 = vunpack.c.l.b16 %v2070
      %v2145 = vunpack.c.l.b16 %v2071
      %v2146 = vunpack.c.l.b16 %v2072
      %v2147 = vunpack.c.l.b16 %v2073
      %v2148 = vunpack.c.l.b16 %v2074
      %v2149 = vunpack.c.l.b16 %v2075
      %v2150 = vunpack.c.l.b16 %v2076
      %v2151 = vunpack.c.l.b16 %v2077
      %v2152 = vunpack.c.l.b16 %v2078
      %v2153 = vunpack.c.l.b16 %v2079
      %v2154 = vunpack.c.l.b16 %v2080
      %v2155 = vunpack.c.l.b16 %v2081
      %v2156 = vunpack.c.l.b16 %v2082
      %v2157 = vunpack.c.l.b16 %v2083
      %v2158 = vpack.c.b16 %v2122, %v2121
      %v2159 = vpack.c.b16 %v2124, %v2123
      %v2160 = vpack.c.b16 %v2126, %v2125
      %v2161 = vpack.c.b16 %v2128, %v2127
      %v2162 = vpack.c.b16 %v2130, %v2129
      %v2163 = vpack.c.b16 %v2132, %v2131
      %v2164 = vpack.c.b16 %v2134, %v2133
      %v2165 = vpack.c.b16 %v2136, %v2135
      %v2166 = vpack.c.b16 %v2138, %v2137
      %v2167 = vpack.c.b16 %v2140, %v2139
      %v2168 = vpack.c.b16 %v2142, %v2141
      %v2169 = vpack.c.b16 %v2144, %v2143
      %v2170 = vpack.c.b16 %v2146, %v2145
      %v2171 = vpack.c.b16 %v2148, %v2147
      %v2172 = vpack.c.b16 %v2150, %v2149
      %v2173 = vpack.c.b16 %v2152, %v2151
      %v2174 = vpack.c.b16 %v2154, %v2153
      %v2175 = vpack.c.b16 %v2156, %v2155
      %v2176 = vpack.c.b16 %v2157, %v2157
      %vm2177 = vsmask.f32 7424
      %v2179 = vshrl.u32 %v2158, 16
      %v2181 = vshll.u32 %v2158, 16
      %v2183 = vrot.slane %v2181, 1
      %v2184 = vor.u32 %v2179, %v2183
      %v2186 = vshll.u32 %v2159, 16
      %v2188 = vrot.slane %v2186, 1
      %v2189 = vsel %vm2177, %v2184, %v2188
      %v2190 = vshrl.u32 %v2159, 16
      %v2192 = vor.u32 %v2190, %v2188
      %v2194 = vshll.u32 %v2160, 16
      %v2196 = vrot.slane %v2194, 1
      %v2197 = vsel %vm2177, %v2192, %v2196
      %v2198 = vshrl.u32 %v2160, 16
      %v2200 = vor.u32 %v2198, %v2196
      %v2202 = vshll.u32 %v2161, 16
      %v2204 = vrot.slane %v2202, 1
      %v2205 = vsel %vm2177, %v2200, %v2204
      %v2206 = vshrl.u32 %v2161, 16
      %v2208 = vor.u32 %v2206, %v2204
      %v2210 = vshll.u32 %v2162, 16
      %v2212 = vrot.slane %v2210, 1
      %v2213 = vsel %vm2177, %v2208, %v2212
      %v2214 = vshrl.u32 %v2162, 16
      %v2216 = vor.u32 %v2214, %v2212
      %v2218 = vshll.u32 %v2163, 16
      %v2220 = vrot.slane %v2218, 1
      %v2221 = vsel %vm2177, %v2216, %v2220
      %v2222 = vshrl.u32 %v2163, 16
      %v2224 = vor.u32 %v2222, %v2220
      %v2226 = vshll.u32 %v2164, 16
      %v2228 = vrot.slane %v2226, 1
      %v2229 = vsel %vm2177, %v2224, %v2228
      %v2230 = vshrl.u32 %v2164, 16
      %v2232 = vor.u32 %v2230, %v2228
      %v2234 = vshll.u32 %v2165, 16
      %v2236 = vrot.slane %v2234, 1
      %v2237 = vsel %vm2177, %v2232, %v2236
      %v2238 = vshrl.u32 %v2165, 16
      %v2240 = vor.u32 %v2238, %v2236
      %v2242 = vshll.u32 %v2166, 16
      %v2244 = vrot.slane %v2242, 1
      %v2245 = vsel %vm2177, %v2240, %v2244
      %v2246 = vshrl.u32 %v2166, 16
      %v2248 = vor.u32 %v2246, %v2244
      %v2250 = vshll.u32 %v2167, 16
      %v2252 = vrot.slane %v2250, 1
      %v2253 = vsel %vm2177, %v2248, %v2252
      %v2254 = vshrl.u32 %v2167, 16
      %v2256 = vor.u32 %v2254, %v2252
      %v2258 = vshll.u32 %v2168, 16
      %v2260 = vrot.slane %v2258, 1
      %v2261 = vsel %vm2177, %v2256, %v2260
      %v2262 = vshrl.u32 %v2168, 16
      %v2264 = vor.u32 %v2262, %v2260
      %v2266 = vshll.u32 %v2169, 16
      %v2268 = vrot.slane %v2266, 1
      %v2269 = vsel %vm2177, %v2264, %v2268
      %v2270 = vshrl.u32 %v2169, 16
      %v2272 = vor.u32 %v2270, %v2268
      %v2274 = vshll.u32 %v2170, 16
      %v2276 = vrot.slane %v2274, 1
      %v2277 = vsel %vm2177, %v2272, %v2276
      %v2278 = vshrl.u32 %v2170, 16
      %v2280 = vor.u32 %v2278, %v2276
      %v2282 = vshll.u32 %v2171, 16
      %v2284 = vrot.slane %v2282, 1
      %v2285 = vsel %vm2177, %v2280, %v2284
      %v2286 = vshrl.u32 %v2171, 16
      %v2288 = vor.u32 %v2286, %v2284
      %v2290 = vshll.u32 %v2172, 16
      %v2292 = vrot.slane %v2290, 1
      %v2293 = vsel %vm2177, %v2288, %v2292
      %v2294 = vshrl.u32 %v2172, 16
      %v2296 = vor.u32 %v2294, %v2292
      %v2298 = vshll.u32 %v2173, 16
      %v2300 = vrot.slane %v2298, 1
      %v2301 = vsel %vm2177, %v2296, %v2300
      %v2302 = vshrl.u32 %v2173, 16
      %v2304 = vor.u32 %v2302, %v2300
      %v2306 = vshll.u32 %v2174, 16
      %v2308 = vrot.slane %v2306, 1
      %v2309 = vsel %vm2177, %v2304, %v2308
      %v2310 = vshrl.u32 %v2174, 16
      %v2312 = vor.u32 %v2310, %v2308
      %v2314 = vshll.u32 %v2175, 16
      %v2316 = vrot.slane %v2314, 1
      %v2317 = vsel %vm2177, %v2312, %v2316
      %v2318 = vshrl.u32 %v2175, 16
      %v2320 = vor.u32 %v2318, %v2316
      %v2322 = vshll.u32 %v2176, 16
      %v2324 = vrot.slane %v2322, 1
      %v2325 = vsel %vm2177, %v2320, %v2324
      %vm2326 = vcmask 64512
      %v2328 = vsel %vm2326, %v2189, 0
      %v2331 = vsel %vm2326, %v2197, 0
      %v2334 = vsel %vm2326, %v2205, 0
      %v2337 = vsel %vm2326, %v2213, 0
      %v2340 = vsel %vm2326, %v2221, 0
      %v2343 = vsel %vm2326, %v2229, 0
      %v2346 = vsel %vm2326, %v2237, 0
      %v2349 = vsel %vm2326, %v2245, 0
      %v2352 = vsel %vm2326, %v2253, 0
      %v2355 = vsel %vm2326, %v2261, 0
      %v2358 = vsel %vm2326, %v2269, 0
      %v2361 = vsel %vm2326, %v2277, 0
      %v2364 = vsel %vm2326, %v2285, 0
      %v2367 = vsel %vm2326, %v2293, 0
      %v2370 = vsel %vm2326, %v2301, 0
      %v2373 = vsel %vm2326, %v2309, 0
      %v2376 = vsel %vm2326, %v2317, 0
      %v2379 = vsel %vm2326, %v2325, 0
      %vm2381 = vcmask 1043456
      %v2383 = vsel %vm2381, %v333, 0
      %2385 = vmatprep.subr.bf16.mxu0 0
      %2386 = vmatpush1.bf16.msra.mxu0 %v2383
      %2387 = vmatprep.subr.bf16.mxu0 0
      %2388 = vmatpush1.bf16.msra.mxu0 0
      %2389 = vmatprep.subr.bf16.mxu0 0
      %2390 = vmatpush1.bf16.msra.mxu0 0
      %2391 = vmatprep.subr.bf16.mxu0 0
      %2392 = vmatpush1.bf16.msra.mxu0 0
      %2393 = vmatprep.subr.bf16.mxu0 0
      %2394 = vmatpush1.bf16.msra.mxu0 0
      %2395 = vmatprep.subr.bf16.mxu0 0
      %2396 = vmatpush1.bf16.msra.mxu0 0
      %2397 = vmatprep.subr.bf16.mxu0 0
      %2398 = vmatpush1.bf16.msra.mxu0 0
      %2399 = vmatprep.subr.bf16.mxu0 0
      %2400 = vmatpush1.bf16.msra.mxu0 0
      %2401 = vmatprep.subr.bf16.mxu0 0
      %2402 = vmatpush1.bf16.msra.mxu0 0
      %2403 = vmatprep.subr.bf16.mxu0 0
      %2404 = vmatpush1.bf16.msra.mxu0 0
      %2405 = vmatprep.subr.bf16.mxu0 0
      %2406 = vmatpush1.bf16.msra.mxu0 0
      %2407 = vmatprep.subr.bf16.mxu0 0
      %2408 = vmatpush1.bf16.msra.mxu0 0
      %2409 = vmatprep.subr.bf16.mxu0 0
      %2410 = vmatpush1.bf16.msra.mxu0 0
      %2411 = vmatprep.subr.bf16.mxu0 0
      %2412 = vmatpush1.bf16.msra.mxu0 0
      %2413 = vmatprep.subr.bf16.mxu0 0
      %2414 = vmatpush1.bf16.msra.mxu0 0
      %2415 = vmatprep.subr.bf16.mxu0 0
      %2416 = vmatpush1.bf16.msra.mxu0 0
      %2417 = vmatprep.mubr.bf16.mxu0 0
      %2418 = vmatmul.mubr.bf16.gmra.mrb[0].mxu0 %v2328
      %v2419 = vpop.f32.mrb[0].mxu0
      %v2420 = vadd.f32 0.0, %v2419
      %v2421 = vpop.f32.mrb[0].mxu0
      %v2422 = vpop.f32.mrb[0].mxu0
      %v2423 = vadd.f32 0.0, %v2422
      %v2424 = vpop.f32.mrb[0].mxu0
      %2425 = vmatprep.mubr.bf16.mxu0 0
      %2426 = vmatmul.mubr.bf16.gmra.mrb[0].mxu0 %v2331
      %v2427 = vpop.f32.mrb[0].mxu0
      %v2428 = vadd.f32 0.0, %v2427
      %v2429 = vpop.f32.mrb[0].mxu0
      %v2430 = vpop.f32.mrb[0].mxu0
      %v2431 = vadd.f32 0.0, %v2430
      %v2432 = vpop.f32.mrb[0].mxu0
      %2433 = vmatprep.mubr.bf16.mxu0 0
      %2434 = vmatmul.mubr.bf16.gmra.mrb[0].mxu0 %v2334
      %v2435 = vpop.f32.mrb[0].mxu0
      %v2436 = vadd.f32 0.0, %v2435
      %v2437 = vpop.f32.mrb[0].mxu0
      %v2438 = vpop.f32.mrb[0].mxu0
      %v2439 = vadd.f32 0.0, %v2438
      %v2440 = vpop.f32.mrb[0].mxu0
      %2441 = vmatprep.mubr.bf16.mxu0 0
      %2442 = vmatmul.mubr.bf16.gmra.mrb[0].mxu0 %v2337
      %v2443 = vpop.f32.mrb[0].mxu0
      %v2444 = vadd.f32 0.0, %v2443
      %v2445 = vpop.f32.mrb[0].mxu0
      %v2446 = vpop.f32.mrb[0].mxu0
      %v2447 = vadd.f32 0.0, %v2446
      %v2448 = vpop.f32.mrb[0].mxu0
      %2449 = vmatprep.mubr.bf16.mxu0 0
      %2450 = vmatmul.mubr.bf16.gmra.mrb[0].mxu0 %v2340
      %v2451 = vpop.f32.mrb[0].mxu0
      %v2452 = vadd.f32 0.0, %v2451
      %v2453 = vpop.f32.mrb[0].mxu0
      %v2454 = vpop.f32.mrb[0].mxu0
      %v2455 = vadd.f32 0.0, %v2454
      %v2456 = vpop.f32.mrb[0].mxu0
      %2457 = vmatprep.mubr.bf16.mxu0 0
      %2458 = vmatmul.mubr.bf16.gmra.mrb[0].mxu0 %v2343
      %v2459 = vpop.f32.mrb[0].mxu0
      %v2460 = vadd.f32 0.0, %v2459
      %v2461 = vpop.f32.mrb[0].mxu0
      %v2462 = vpop.f32.mrb[0].mxu0
      %v2463 = vadd.f32 0.0, %v2462
      %v2464 = vpop.f32.mrb[0].mxu0
      %2465 = vmatprep.mubr.bf16.mxu0 0
      %2466 = vmatmul.mubr.bf16.gmra.mrb[0].mxu0 %v2346
      %v2467 = vpop.f32.mrb[0].mxu0
      %v2468 = vadd.f32 0.0, %v2467
      %v2469 = vpop.f32.mrb[0].mxu0
      %v2470 = vpop.f32.mrb[0].mxu0
      %v2471 = vadd.f32 0.0, %v2470
      %v2472 = vpop.f32.mrb[0].mxu0
      %2473 = vmatprep.mubr.bf16.mxu0 0
      %2474 = vmatmul.mubr.bf16.gmra.mrb[0].mxu0 %v2349
      %v2475 = vpop.f32.mrb[0].mxu0
      %v2476 = vadd.f32 0.0, %v2475
      %v2477 = vpop.f32.mrb[0].mxu0
      %v2478 = vpop.f32.mrb[0].mxu0
      %v2479 = vadd.f32 0.0, %v2478
      %v2480 = vpop.f32.mrb[0].mxu0
      %2481 = vmatprep.mubr.bf16.mxu0 0
      %2482 = vmatmul.mubr.bf16.gmra.mrb[0].mxu0 %v2352
      %v2483 = vpop.f32.mrb[0].mxu0
      %v2484 = vadd.f32 0.0, %v2483
      %v2485 = vpop.f32.mrb[0].mxu0
      %v2486 = vpop.f32.mrb[0].mxu0
      %v2487 = vadd.f32 0.0, %v2486
      %v2488 = vpop.f32.mrb[0].mxu0
      %2489 = vmatprep.mubr.bf16.mxu0 0
      %2490 = vmatmul.mubr.bf16.gmra.mrb[0].mxu0 %v2355
      %v2491 = vpop.f32.mrb[0].mxu0
      %v2492 = vadd.f32 0.0, %v2491
      %v2493 = vpop.f32.mrb[0].mxu0
      %v2494 = vpop.f32.mrb[0].mxu0
      %v2495 = vadd.f32 0.0, %v2494
      %v2496 = vpop.f32.mrb[0].mxu0
      %2497 = vmatprep.mubr.bf16.mxu0 0
      %2498 = vmatmul.mubr.bf16.gmra.mrb[0].mxu0 %v2358
      %v2499 = vpop.f32.mrb[0].mxu0
      %v2500 = vadd.f32 0.0, %v2499
      %v2501 = vpop.f32.mrb[0].mxu0
      %v2502 = vpop.f32.mrb[0].mxu0
      %v2503 = vadd.f32 0.0, %v2502
      %v2504 = vpop.f32.mrb[0].mxu0
      %2505 = vmatprep.mubr.bf16.mxu0 0
      %2506 = vmatmul.mubr.bf16.gmra.mrb[0].mxu0 %v2361
      %v2507 = vpop.f32.mrb[0].mxu0
      %v2508 = vadd.f32 0.0, %v2507
      %v2509 = vpop.f32.mrb[0].mxu0
      %v2510 = vpop.f32.mrb[0].mxu0
      %v2511 = vadd.f32 0.0, %v2510
      %v2512 = vpop.f32.mrb[0].mxu0
      %2513 = vmatprep.mubr.bf16.mxu0 0
      %2514 = vmatmul.mubr.bf16.gmra.mrb[0].mxu0 %v2364
      %v2515 = vpop.f32.mrb[0].mxu0
      %v2516 = vadd.f32 0.0, %v2515
      %v2517 = vpop.f32.mrb[0].mxu0
      %v2518 = vpop.f32.mrb[0].mxu0
      %v2519 = vadd.f32 0.0, %v2518
      %v2520 = vpop.f32.mrb[0].mxu0
      %2521 = vmatprep.mubr.bf16.mxu0 0
      %2522 = vmatmul.mubr.bf16.gmra.mrb[0].mxu0 %v2367
      %v2523 = vpop.f32.mrb[0].mxu0
      %v2524 = vadd.f32 0.0, %v2523
      %v2525 = vpop.f32.mrb[0].mxu0
      %v2526 = vpop.f32.mrb[0].mxu0
      %v2527 = vadd.f32 0.0, %v2526
      %v2528 = vpop.f32.mrb[0].mxu0
      %2529 = vmatprep.mubr.bf16.mxu0 0
      %2530 = vmatmul.mubr.bf16.gmra.mrb[0].mxu0 %v2370
      %v2531 = vpop.f32.mrb[0].mxu0
      %v2532 = vadd.f32 0.0, %v2531
      %v2533 = vpop.f32.mrb[0].mxu0
      %v2534 = vpop.f32.mrb[0].mxu0
      %v2535 = vadd.f32 0.0, %v2534
      %v2536 = vpop.f32.mrb[0].mxu0
      %2537 = vmatprep.mubr.bf16.mxu0 0
      %2538 = vmatmul.mubr.bf16.gmra.mrb[0].mxu0 %v2373
      %v2539 = vpop.f32.mrb[0].mxu0
      %v2540 = vadd.f32 0.0, %v2539
      %v2541 = vpop.f32.mrb[0].mxu0
      %v2542 = vpop.f32.mrb[0].mxu0
      %v2543 = vadd.f32 0.0, %v2542
      %v2544 = vpop.f32.mrb[0].mxu0
      %2545 = vmatprep.mubr.bf16.mxu0 0
      %2546 = vmatmul.mubr.bf16.gmra.mrb[0].mxu0 %v2376
      %v2547 = vpop.f32.mrb[0].mxu0
      %v2548 = vadd.f32 0.0, %v2547
      %v2549 = vpop.f32.mrb[0].mxu0
      %v2550 = vpop.f32.mrb[0].mxu0
      %v2551 = vadd.f32 0.0, %v2550
      %v2552 = vpop.f32.mrb[0].mxu0
      %2553 = vmatprep.mubr.bf16.mxu0 0
      %2554 = vmatmul.mubr.bf16.gmra.mrb[0].mxu0 %v2379
      %v2555 = vpop.f32.mrb[0].mxu0
      %v2556 = vadd.f32 0.0, %v2555
      %v2557 = vpop.f32.mrb[0].mxu0
      %v2558 = vpop.f32.mrb[0].mxu0
      %v2559 = vadd.f32 0.0, %v2558
      %v2560 = vpop.f32.mrb[0].mxu0
      %2561 = vdwg.mxu0
      %v2562 = vsel %vm2326, %v2158, 0
      %v2564 = vsel %vm2326, %v2159, 0
      %v2566 = vsel %vm2326, %v2160, 0
      %v2568 = vsel %vm2326, %v2161, 0
      %v2570 = vsel %vm2326, %v2162, 0
      %v2572 = vsel %vm2326, %v2163, 0
      %v2574 = vsel %vm2326, %v2164, 0
      %v2576 = vsel %vm2326, %v2165, 0
      %v2578 = vsel %vm2326, %v2166, 0
      %v2580 = vsel %vm2326, %v2167, 0
      %v2582 = vsel %vm2326, %v2168, 0
      %v2584 = vsel %vm2326, %v2169, 0
      %v2586 = vsel %vm2326, %v2170, 0
      %v2588 = vsel %vm2326, %v2171, 0
      %v2590 = vsel %vm2326, %v2172, 0
      %v2592 = vsel %vm2326, %v2173, 0
      %v2594 = vsel %vm2326, %v2174, 0
      %v2596 = vsel %vm2326, %v2175, 0
      %v2599 = vsel %vm2381, %v332, 0
      %2601 = vmatprep.subr.bf16.mxu0 0
      %2602 = vmatpush1.bf16.msra.mxu0 %v2599
      %2603 = vmatprep.subr.bf16.mxu0 0
      %2604 = vmatpush1.bf16.msra.mxu0 0
      %2605 = vmatprep.subr.bf16.mxu0 0
      %2606 = vmatpush1.bf16.msra.mxu0 0
      %2607 = vmatprep.subr.bf16.mxu0 0
      %2608 = vmatpush1.bf16.msra.mxu0 0
      %2609 = vmatprep.subr.bf16.mxu0 0
      %2610 = vmatpush1.bf16.msra.mxu0 0
      %2611 = vmatprep.subr.bf16.mxu0 0
      %2612 = vmatpush1.bf16.msra.mxu0 0
      %2613 = vmatprep.subr.bf16.mxu0 0
      %2614 = vmatpush1.bf16.msra.mxu0 0
      %2615 = vmatprep.subr.bf16.mxu0 0
      %2616 = vmatpush1.bf16.msra.mxu0 0
      %2617 = vmatprep.subr.bf16.mxu0 0
      %2618 = vmatpush1.bf16.msra.mxu0 0
      %2619 = vmatprep.subr.bf16.mxu0 0
      %2620 = vmatpush1.bf16.msra.mxu0 0
      %2621 = vmatprep.subr.bf16.mxu0 0
      %2622 = vmatpush1.bf16.msra.mxu0 0
      %2623 = vmatprep.subr.bf16.mxu0 0
      %2624 = vmatpush1.bf16.msra.mxu0 0
      %2625 = vmatprep.subr.bf16.mxu0 0
      %2626 = vmatpush1.bf16.msra.mxu0 0
      %2627 = vmatprep.subr.bf16.mxu0 0
      %2628 = vmatpush1.bf16.msra.mxu0 0
      %2629 = vmatprep.subr.bf16.mxu0 0
      %2630 = vmatpush1.bf16.msra.mxu0 0
      %2631 = vmatprep.subr.bf16.mxu0 0
      %2632 = vmatpush1.bf16.msra.mxu0 0
      %2633 = vmatprep.mubr.bf16.mxu0 0
      %2634 = vmatmul.mubr.bf16.gmra.mrb[0].mxu0 %v2562
      %v2635 = vpop.f32.mrb[0].mxu0
      %v2636 = vadd.f32 %v2420, %v2635
      %v2637 = vpop.f32.mrb[0].mxu0
      %v2638 = vpop.f32.mrb[0].mxu0
      %v2639 = vadd.f32 %v2423, %v2638
      %v2640 = vpop.f32.mrb[0].mxu0
      %2641 = vmatprep.mubr.bf16.mxu0 0
      %2642 = vmatmul.mubr.bf16.gmra.mrb[0].mxu0 %v2564
      %v2643 = vpop.f32.mrb[0].mxu0
      %v2644 = vadd.f32 %v2428, %v2643
      %v2645 = vpop.f32.mrb[0].mxu0
      %v2646 = vpop.f32.mrb[0].mxu0
      %v2647 = vadd.f32 %v2431, %v2646
      %v2648 = vpop.f32.mrb[0].mxu0
      %2649 = vmatprep.mubr.bf16.mxu0 0
      %2650 = vmatmul.mubr.bf16.gmra.mrb[0].mxu0 %v2566
      %v2651 = vpop.f32.mrb[0].mxu0
      %v2652 = vadd.f32 %v2436, %v2651
      %v2653 = vpop.f32.mrb[0].mxu0
      %v2654 = vpop.f32.mrb[0].mxu0
      %v2655 = vadd.f32 %v2439, %v2654
      %v2656 = vpop.f32.mrb[0].mxu0
      %2657 = vmatprep.mubr.bf16.mxu0 0
      %2658 = vmatmul.mubr.bf16.gmra.mrb[0].mxu0 %v2568
      %v2659 = vpop.f32.mrb[0].mxu0
      %v2660 = vadd.f32 %v2444, %v2659
      %v2661 = vpop.f32.mrb[0].mxu0
      %v2662 = vpop.f32.mrb[0].mxu0
      %v2663 = vadd.f32 %v2447, %v2662
      %v2664 = vpop.f32.mrb[0].mxu0
      %2665 = vmatprep.mubr.bf16.mxu0 0
      %2666 = vmatmul.mubr.bf16.gmra.mrb[0].mxu0 %v2570
      %v2667 = vpop.f32.mrb[0].mxu0
      %v2668 = vadd.f32 %v2452, %v2667
      %v2669 = vpop.f32.mrb[0].mxu0
      %v2670 = vpop.f32.mrb[0].mxu0
      %v2671 = vadd.f32 %v2455, %v2670
      %v2672 = vpop.f32.mrb[0].mxu0
      %2673 = vmatprep.mubr.bf16.mxu0 0
      %2674 = vmatmul.mubr.bf16.gmra.mrb[0].mxu0 %v2572
      %v2675 = vpop.f32.mrb[0].mxu0
      %v2676 = vadd.f32 %v2460, %v2675
      %v2677 = vpop.f32.mrb[0].mxu0
      %v2678 = vpop.f32.mrb[0].mxu0
      %v2679 = vadd.f32 %v2463, %v2678
      %v2680 = vpop.f32.mrb[0].mxu0
      %2681 = vmatprep.mubr.bf16.mxu0 0
      %2682 = vmatmul.mubr.bf16.gmra.mrb[0].mxu0 %v2574
      %v2683 = vpop.f32.mrb[0].mxu0
      %v2684 = vadd.f32 %v2468, %v2683
      %v2685 = vpop.f32.mrb[0].mxu0
      %v2686 = vpop.f32.mrb[0].mxu0
      %v2687 = vadd.f32 %v2471, %v2686
      %v2688 = vpop.f32.mrb[0].mxu0
      %2689 = vmatprep.mubr.bf16.mxu0 0
      %2690 = vmatmul.mubr.bf16.gmra.mrb[0].mxu0 %v2576
      %v2691 = vpop.f32.mrb[0].mxu0
      %v2692 = vadd.f32 %v2476, %v2691
      %v2693 = vpop.f32.mrb[0].mxu0
      %v2694 = vpop.f32.mrb[0].mxu0
      %v2695 = vadd.f32 %v2479, %v2694
      %v2696 = vpop.f32.mrb[0].mxu0
      %2697 = vmatprep.mubr.bf16.mxu0 0
      %2698 = vmatmul.mubr.bf16.gmra.mrb[0].mxu0 %v2578
      %v2699 = vpop.f32.mrb[0].mxu0
      %v2700 = vadd.f32 %v2484, %v2699
      %v2701 = vpop.f32.mrb[0].mxu0
      %v2702 = vpop.f32.mrb[0].mxu0
      %v2703 = vadd.f32 %v2487, %v2702
      %v2704 = vpop.f32.mrb[0].mxu0
      %2705 = vmatprep.mubr.bf16.mxu0 0
      %2706 = vmatmul.mubr.bf16.gmra.mrb[0].mxu0 %v2580
      %v2707 = vpop.f32.mrb[0].mxu0
      %v2708 = vadd.f32 %v2492, %v2707
      %v2709 = vpop.f32.mrb[0].mxu0
      %v2710 = vpop.f32.mrb[0].mxu0
      %v2711 = vadd.f32 %v2495, %v2710
      %v2712 = vpop.f32.mrb[0].mxu0
      %2713 = vmatprep.mubr.bf16.mxu0 0
      %2714 = vmatmul.mubr.bf16.gmra.mrb[0].mxu0 %v2582
      %v2715 = vpop.f32.mrb[0].mxu0
      %v2716 = vadd.f32 %v2500, %v2715
      %v2717 = vpop.f32.mrb[0].mxu0
      %v2718 = vpop.f32.mrb[0].mxu0
      %v2719 = vadd.f32 %v2503, %v2718
      %v2720 = vpop.f32.mrb[0].mxu0
      %2721 = vmatprep.mubr.bf16.mxu0 0
      %2722 = vmatmul.mubr.bf16.gmra.mrb[0].mxu0 %v2584
      %v2723 = vpop.f32.mrb[0].mxu0
      %v2724 = vadd.f32 %v2508, %v2723
      %v2725 = vpop.f32.mrb[0].mxu0
      %v2726 = vpop.f32.mrb[0].mxu0
      %v2727 = vadd.f32 %v2511, %v2726
      %v2728 = vpop.f32.mrb[0].mxu0
      %2729 = vmatprep.mubr.bf16.mxu0 0
      %2730 = vmatmul.mubr.bf16.gmra.mrb[0].mxu0 %v2586
      %v2731 = vpop.f32.mrb[0].mxu0
      %v2732 = vadd.f32 %v2516, %v2731
      %v2733 = vpop.f32.mrb[0].mxu0
      %v2734 = vpop.f32.mrb[0].mxu0
      %v2735 = vadd.f32 %v2519, %v2734
      %v2736 = vpop.f32.mrb[0].mxu0
      %2737 = vmatprep.mubr.bf16.mxu0 0
      %2738 = vmatmul.mubr.bf16.gmra.mrb[0].mxu0 %v2588
      %v2739 = vpop.f32.mrb[0].mxu0
      %v2740 = vadd.f32 %v2524, %v2739
      %v2741 = vpop.f32.mrb[0].mxu0
      %v2742 = vpop.f32.mrb[0].mxu0
      %v2743 = vadd.f32 %v2527, %v2742
      %v2744 = vpop.f32.mrb[0].mxu0
      %2745 = vmatprep.mubr.bf16.mxu0 0
      %2746 = vmatmul.mubr.bf16.gmra.mrb[0].mxu0 %v2590
      %v2747 = vpop.f32.mrb[0].mxu0
      %v2748 = vadd.f32 %v2532, %v2747
      %v2749 = vpop.f32.mrb[0].mxu0
      %v2750 = vpop.f32.mrb[0].mxu0
      %v2751 = vadd.f32 %v2535, %v2750
      %v2752 = vpop.f32.mrb[0].mxu0
      %2753 = vmatprep.mubr.bf16.mxu0 0
      %2754 = vmatmul.mubr.bf16.gmra.mrb[0].mxu0 %v2592
      %v2755 = vpop.f32.mrb[0].mxu0
      %v2756 = vadd.f32 %v2540, %v2755
      %v2757 = vpop.f32.mrb[0].mxu0
      %v2758 = vpop.f32.mrb[0].mxu0
      %v2759 = vadd.f32 %v2543, %v2758
      %v2760 = vpop.f32.mrb[0].mxu0
      %2761 = vmatprep.mubr.bf16.mxu0 0
      %2762 = vmatmul.mubr.bf16.gmra.mrb[0].mxu0 %v2594
      %v2763 = vpop.f32.mrb[0].mxu0
      %v2764 = vadd.f32 %v2548, %v2763
      %v2765 = vpop.f32.mrb[0].mxu0
      %v2766 = vpop.f32.mrb[0].mxu0
      %v2767 = vadd.f32 %v2551, %v2766
      %v2768 = vpop.f32.mrb[0].mxu0
      %2769 = vmatprep.mubr.bf16.mxu0 0
      %2770 = vmatmul.mubr.bf16.gmra.mrb[0].mxu0 %v2596
      %v2771 = vpop.f32.mrb[0].mxu0
      %v2772 = vadd.f32 %v2556, %v2771
      %v2773 = vpop.f32.mrb[0].mxu0
      %v2774 = vpop.f32.mrb[0].mxu0
      %v2775 = vadd.f32 %v2559, %v2774
      %v2776 = vpop.f32.mrb[0].mxu0
      %2777 = vdwg.mxu0
      %v2778 = vld [vmem:[#allocation2] sm:$0xe]
      %v2780 = vunpack.c.l.b16 %v2778
      %v2781 = vpack.c.b16 %v2122, %v2780
      %vm2782 = vcmask 1046528
      %v2783 = vrot.slane %v2781, 1
      %v2784 = vrot.slane %v2159, 1
      %v2785 = vsel %vm2782, %v2783, %v2784
      %v2786 = vrot.slane %v2160, 1
      %v2787 = vsel %vm2782, %v2784, %v2786
      %v2788 = vrot.slane %v2161, 1
      %v2789 = vsel %vm2782, %v2786, %v2788
      %v2790 = vrot.slane %v2162, 1
      %v2791 = vsel %vm2782, %v2788, %v2790
      %v2792 = vrot.slane %v2163, 1
      %v2793 = vsel %vm2782, %v2790, %v2792
      %v2794 = vrot.slane %v2164, 1
      %v2795 = vsel %vm2782, %v2792, %v2794
      %v2796 = vrot.slane %v2165, 1
      %v2797 = vsel %vm2782, %v2794, %v2796
      %v2798 = vrot.slane %v2166, 1
      %v2799 = vsel %vm2782, %v2796, %v2798
      %v2800 = vrot.slane %v2167, 1
      %v2801 = vsel %vm2782, %v2798, %v2800
      %v2802 = vrot.slane %v2168, 1
      %v2803 = vsel %vm2782, %v2800, %v2802
      %v2804 = vrot.slane %v2169, 1
      %v2805 = vsel %vm2782, %v2802, %v2804
      %v2806 = vrot.slane %v2170, 1
      %v2807 = vsel %vm2782, %v2804, %v2806
      %v2808 = vrot.slane %v2171, 1
      %v2809 = vsel %vm2782, %v2806, %v2808
      %v2810 = vrot.slane %v2172, 1
      %v2811 = vsel %vm2782, %v2808, %v2810
      %v2812 = vrot.slane %v2173, 1
      %v2813 = vsel %vm2782, %v2810, %v2812
      %v2814 = vrot.slane %v2174, 1
      %v2815 = vsel %vm2782, %v2812, %v2814
      %v2816 = vrot.slane %v2175, 1
      %v2817 = vsel %vm2782, %v2814, %v2816
      %v2818 = vrot.slane %v2176, 1
      %v2819 = vsel %vm2782, %v2816, %v2818
      %v2821 = vsel %vm2326, %v2785, 0
      %v2824 = vsel %vm2326, %v2787, 0
      %v2827 = vsel %vm2326, %v2789, 0
      %v2830 = vsel %vm2326, %v2791, 0
      %v2833 = vsel %vm2326, %v2793, 0
      %v2836 = vsel %vm2326, %v2795, 0
      %v2839 = vsel %vm2326, %v2797, 0
      %v2842 = vsel %vm2326, %v2799, 0
      %v2845 = vsel %vm2326, %v2801, 0
      %v2848 = vsel %vm2326, %v2803, 0
      %v2851 = vsel %vm2326, %v2805, 0
      %v2854 = vsel %vm2326, %v2807, 0
      %v2857 = vsel %vm2326, %v2809, 0
      %v2860 = vsel %vm2326, %v2811, 0
      %v2863 = vsel %vm2326, %v2813, 0
      %v2866 = vsel %vm2326, %v2815, 0
      %v2869 = vsel %vm2326, %v2817, 0
      %v2872 = vsel %vm2326, %v2819, 0
      %v2875 = vsel %vm2381, %v334, 0
      %2877 = vmatprep.subr.bf16.mxu0 0
      %2878 = vmatpush1.bf16.msra.mxu0 %v2875
      %2879 = vmatprep.subr.bf16.mxu0 0
      %2880 = vmatpush1.bf16.msra.mxu0 0
      %2881 = vmatprep.subr.bf16.mxu0 0
      %2882 = vmatpush1.bf16.msra.mxu0 0
      %2883 = vmatprep.subr.bf16.mxu0 0
      %2884 = vmatpush1.bf16.msra.mxu0 0
      %2885 = vmatprep.subr.bf16.mxu0 0
      %2886 = vmatpush1.bf16.msra.mxu0 0
      %2887 = vmatprep.subr.bf16.mxu0 0
      %2888 = vmatpush1.bf16.msra.mxu0 0
      %2889 = vmatprep.subr.bf16.mxu0 0
      %2890 = vmatpush1.bf16.msra.mxu0 0
      %2891 = vmatprep.subr.bf16.mxu0 0
      %2892 = vmatpush1.bf16.msra.mxu0 0
      %2893 = vmatprep.subr.bf16.mxu0 0
      %2894 = vmatpush1.bf16.msra.mxu0 0
      %2895 = vmatprep.subr.bf16.mxu0 0
      %2896 = vmatpush1.bf16.msra.mxu0 0
      %2897 = vmatprep.subr.bf16.mxu0 0
      %2898 = vmatpush1.bf16.msra.mxu0 0
      %2899 = vmatprep.subr.bf16.mxu0 0
      %2900 = vmatpush1.bf16.msra.mxu0 0
      %2901 = vmatprep.subr.bf16.mxu0 0
      %2902 = vmatpush1.bf16.msra.mxu0 0
      %2903 = vmatprep.subr.bf16.mxu0 0
      %2904 = vmatpush1.bf16.msra.mxu0 0
      %2905 = vmatprep.subr.bf16.mxu0 0
      %2906 = vmatpush1.bf16.msra.mxu0 0
      %2907 = vmatprep.subr.bf16.mxu0 0
      %2908 = vmatpush1.bf16.msra.mxu0 0
      %2909 = vmatprep.mubr.bf16.mxu0 0
      %2910 = vmatmul.mubr.bf16.gmra.mrb[0].mxu0 %v2821
      %v2911 = vpop.f32.mrb[0].mxu0
      %v2912 = vadd.f32 0.0, %v2911
      %v2913 = vpop.f32.mrb[0].mxu0
      %v2914 = vpop.f32.mrb[0].mxu0
      %v2915 = vadd.f32 0.0, %v2914
      %v2916 = vpop.f32.mrb[0].mxu0
      %2917 = vmatprep.mubr.bf16.mxu0 0
      %2918 = vmatmul.mubr.bf16.gmra.mrb[0].mxu0 %v2824
      %v2919 = vpop.f32.mrb[0].mxu0
      %v2920 = vadd.f32 0.0, %v2919
      %v2921 = vpop.f32.mrb[0].mxu0
      %v2922 = vpop.f32.mrb[0].mxu0
      %v2923 = vadd.f32 0.0, %v2922
      %v2924 = vpop.f32.mrb[0].mxu0
      %2925 = vmatprep.mubr.bf16.mxu0 0
      %2926 = vmatmul.mubr.bf16.gmra.mrb[0].mxu0 %v2827
      %v2927 = vpop.f32.mrb[0].mxu0
      %v2928 = vadd.f32 0.0, %v2927
      %v2929 = vpop.f32.mrb[0].mxu0
      %v2930 = vpop.f32.mrb[0].mxu0
      %v2931 = vadd.f32 0.0, %v2930
      %v2932 = vpop.f32.mrb[0].mxu0
      %2933 = vmatprep.mubr.bf16.mxu0 0
      %2934 = vmatmul.mubr.bf16.gmra.mrb[0].mxu0 %v2830
      %v2935 = vpop.f32.mrb[0].mxu0
      %v2936 = vadd.f32 0.0, %v2935
      %v2937 = vpop.f32.mrb[0].mxu0
      %v2938 = vpop.f32.mrb[0].mxu0
      %v2939 = vadd.f32 0.0, %v2938
      %v2940 = vpop.f32.mrb[0].mxu0
      %2941 = vmatprep.mubr.bf16.mxu0 0
      %2942 = vmatmul.mubr.bf16.gmra.mrb[0].mxu0 %v2833
      %v2943 = vpop.f32.mrb[0].mxu0
      %v2944 = vadd.f32 0.0, %v2943
      %v2945 = vpop.f32.mrb[0].mxu0
      %v2946 = vpop.f32.mrb[0].mxu0
      %v2947 = vadd.f32 0.0, %v2946
      %v2948 = vpop.f32.mrb[0].mxu0
      %2949 = vmatprep.mubr.bf16.mxu0 0
      %2950 = vmatmul.mubr.bf16.gmra.mrb[0].mxu0 %v2836
      %v2951 = vpop.f32.mrb[0].mxu0
      %v2952 = vadd.f32 0.0, %v2951
      %v2953 = vpop.f32.mrb[0].mxu0
      %v2954 = vpop.f32.mrb[0].mxu0
      %v2955 = vadd.f32 0.0, %v2954
      %v2956 = vpop.f32.mrb[0].mxu0
      %2957 = vmatprep.mubr.bf16.mxu0 0
      %2958 = vmatmul.mubr.bf16.gmra.mrb[0].mxu0 %v2839
      %v2959 = vpop.f32.mrb[0].mxu0
      %v2960 = vadd.f32 0.0, %v2959
      %v2961 = vpop.f32.mrb[0].mxu0
      %v2962 = vpop.f32.mrb[0].mxu0
      %v2963 = vadd.f32 0.0, %v2962
      %v2964 = vpop.f32.mrb[0].mxu0
      %2965 = vmatprep.mubr.bf16.mxu0 0
      %2966 = vmatmul.mubr.bf16.gmra.mrb[0].mxu0 %v2842
      %v2967 = vpop.f32.mrb[0].mxu0
      %v2968 = vadd.f32 0.0, %v2967
      %v2969 = vpop.f32.mrb[0].mxu0
      %v2970 = vpop.f32.mrb[0].mxu0
      %v2971 = vadd.f32 0.0, %v2970
      %v2972 = vpop.f32.mrb[0].mxu0
      %2973 = vmatprep.mubr.bf16.mxu0 0
      %2974 = vmatmul.mubr.bf16.gmra.mrb[0].mxu0 %v2845
      %v2975 = vpop.f32.mrb[0].mxu0
      %v2976 = vadd.f32 0.0, %v2975
      %v2977 = vpop.f32.mrb[0].mxu0
      %v2978 = vpop.f32.mrb[0].mxu0
      %v2979 = vadd.f32 0.0, %v2978
      %v2980 = vpop.f32.mrb[0].mxu0
      %2981 = vmatprep.mubr.bf16.mxu0 0
      %2982 = vmatmul.mubr.bf16.gmra.mrb[0].mxu0 %v2848
      %v2983 = vpop.f32.mrb[0].mxu0
      %v2984 = vadd.f32 0.0, %v2983
      %v2985 = vpop.f32.mrb[0].mxu0
      %v2986 = vpop.f32.mrb[0].mxu0
      %v2987 = vadd.f32 0.0, %v2986
      %v2988 = vpop.f32.mrb[0].mxu0
      %2989 = vmatprep.mubr.bf16.mxu0 0
      %2990 = vmatmul.mubr.bf16.gmra.mrb[0].mxu0 %v2851
      %v2991 = vpop.f32.mrb[0].mxu0
      %v2992 = vadd.f32 0.0, %v2991
      %v2993 = vpop.f32.mrb[0].mxu0
      %v2994 = vpop.f32.mrb[0].mxu0
      %v2995 = vadd.f32 0.0, %v2994
      %v2996 = vpop.f32.mrb[0].mxu0
      %2997 = vmatprep.mubr.bf16.mxu0 0
      %2998 = vmatmul.mubr.bf16.gmra.mrb[0].mxu0 %v2854
      %v2999 = vpop.f32.mrb[0].mxu0
      %v3000 = vadd.f32 0.0, %v2999
      %v3001 = vpop.f32.mrb[0].mxu0
      %v3002 = vpop.f32.mrb[0].mxu0
      %v3003 = vadd.f32 0.0, %v3002
      %v3004 = vpop.f32.mrb[0].mxu0
      %3005 = vmatprep.mubr.bf16.mxu0 0
      %3006 = vmatmul.mubr.bf16.gmra.mrb[0].mxu0 %v2857
      %v3007 = vpop.f32.mrb[0].mxu0
      %v3008 = vadd.f32 0.0, %v3007
      %v3009 = vpop.f32.mrb[0].mxu0
      %v3010 = vpop.f32.mrb[0].mxu0
      %v3011 = vadd.f32 0.0, %v3010
      %v3012 = vpop.f32.mrb[0].mxu0
      %3013 = vmatprep.mubr.bf16.mxu0 0
      %3014 = vmatmul.mubr.bf16.gmra.mrb[0].mxu0 %v2860
      %v3015 = vpop.f32.mrb[0].mxu0
      %v3016 = vadd.f32 0.0, %v3015
      %v3017 = vpop.f32.mrb[0].mxu0
      %v3018 = vpop.f32.mrb[0].mxu0
      %v3019 = vadd.f32 0.0, %v3018
      %v3020 = vpop.f32.mrb[0].mxu0
      %3021 = vmatprep.mubr.bf16.mxu0 0
      %3022 = vmatmul.mubr.bf16.gmra.mrb[0].mxu0 %v2863
      %v3023 = vpop.f32.mrb[0].mxu0
      %v3024 = vadd.f32 0.0, %v3023
      %v3025 = vpop.f32.mrb[0].mxu0
      %v3026 = vpop.f32.mrb[0].mxu0
      %v3027 = vadd.f32 0.0, %v3026
      %v3028 = vpop.f32.mrb[0].mxu0
      %3029 = vmatprep.mubr.bf16.mxu0 0
      %3030 = vmatmul.mubr.bf16.gmra.mrb[0].mxu0 %v2866
      %v3031 = vpop.f32.mrb[0].mxu0
      %v3032 = vadd.f32 0.0, %v3031
      %v3033 = vpop.f32.mrb[0].mxu0
      %v3034 = vpop.f32.mrb[0].mxu0
      %v3035 = vadd.f32 0.0, %v3034
      %v3036 = vpop.f32.mrb[0].mxu0
      %3037 = vmatprep.mubr.bf16.mxu0 0
      %3038 = vmatmul.mubr.bf16.gmra.mrb[0].mxu0 %v2869
      %v3039 = vpop.f32.mrb[0].mxu0
      %v3040 = vadd.f32 0.0, %v3039
      %v3041 = vpop.f32.mrb[0].mxu0
      %v3042 = vpop.f32.mrb[0].mxu0
      %v3043 = vadd.f32 0.0, %v3042
      %v3044 = vpop.f32.mrb[0].mxu0
      %3045 = vmatprep.mubr.bf16.mxu0 0
      %3046 = vmatmul.mubr.bf16.gmra.mrb[0].mxu0 %v2872
      %v3047 = vpop.f32.mrb[0].mxu0
      %v3048 = vadd.f32 0.0, %v3047
      %v3049 = vpop.f32.mrb[0].mxu0
      %v3050 = vpop.f32.mrb[0].mxu0
      %v3051 = vadd.f32 0.0, %v3050
      %v3052 = vpop.f32.mrb[0].mxu0
      %3053 = vdwg.mxu0
      %v3054 = vadd.f32 %v2636, %v2912
      %v3055 = vadd.f32 %v2639, %v2915
      %v3056 = vadd.f32 %v2644, %v2920
      %v3057 = vadd.f32 %v2647, %v2923
      %v3058 = vadd.f32 %v2652, %v2928
      %v3059 = vadd.f32 %v2655, %v2931
      %v3060 = vadd.f32 %v2660, %v2936
      %v3061 = vadd.f32 %v2663, %v2939
      %v3062 = vadd.f32 %v2668, %v2944
      %v3063 = vadd.f32 %v2671, %v2947
      %v3064 = vadd.f32 %v2676, %v2952
      %v3065 = vadd.f32 %v2679, %v2955
      %v3066 = vadd.f32 %v2684, %v2960
      %v3067 = vadd.f32 %v2687, %v2963
      %v3068 = vadd.f32 %v2692, %v2968
      %v3069 = vadd.f32 %v2695, %v2971
      %v3070 = vadd.f32 %v2700, %v2976
      %v3071 = vadd.f32 %v2703, %v2979
      %v3072 = vadd.f32 %v2708, %v2984
      %v3073 = vadd.f32 %v2711, %v2987
      %v3074 = vadd.f32 %v2716, %v2992
      %v3075 = vadd.f32 %v2719, %v2995
      %v3076 = vadd.f32 %v2724, %v3000
      %v3077 = vadd.f32 %v2727, %v3003
      %v3078 = vadd.f32 %v2732, %v3008
      %v3079 = vadd.f32 %v2735, %v3011
      %v3080 = vadd.f32 %v2740, %v3016
      %v3081 = vadd.f32 %v2743, %v3019
      %v3082 = vadd.f32 %v2748, %v3024
      %v3083 = vadd.f32 %v2751, %v3027
      %v3084 = vadd.f32 %v2756, %v3032
      %v3085 = vadd.f32 %v2759, %v3035
      %v3086 = vadd.f32 %v2764, %v3040
      %v3087 = vadd.f32 %v2767, %v3043
      %v3088 = vadd.f32 %v2772, %v3048
      %v3089 = vadd.f32 %v2775, %v3051
      %v3090 = vld [vmem:[#allocation2 + $0x8] sm:$0xe]
      %v3091 = vld [vmem:[#allocation2 + $0xc] sm:$0xf]
      %v3092 = vld [vmem:[#allocation2 + $0x10] sm:$0xf]
      %v3093 = vld [vmem:[#allocation2 + $0x14] sm:$0xf]
      %v3094 = vld [vmem:[#allocation2 + $0x18] sm:$0xf]
      %v3095 = vld [vmem:[#allocation2 + $0x1c] sm:$0xf]
      %v3096 = vld [vmem:[#allocation2 + $0x20] sm:$0xf]
      %v3097 = vld [vmem:[#allocation2 + $0x24] sm:$0xf]
      %v3098 = vld [vmem:[#allocation2 + $0x28] sm:$0xf]
      %v3099 = vld [vmem:[#allocation2 + $0x2c] sm:$0xf]
      %v3100 = vld [vmem:[#allocation2 + $0x30] sm:$0xf]
      %v3101 = vld [vmem:[#allocation2 + $0x34] sm:$0xf]
      %v3102 = vld [vmem:[#allocation2 + $0x38] sm:$0xf]
      %v3103 = vld [vmem:[#allocation2 + $0x3c] sm:$0xf]
      %v3104 = vld [vmem:[#allocation2 + $0x40] sm:$0xf]
      %v3105 = vld [vmem:[#allocation2 + $0x44] sm:$0xf]
      %v3106 = vld [vmem:[#allocation2 + $0x48] sm:$0xf]
      %v3107 = vld [vmem:[#allocation2 + $0x4c] sm:$0xf]
      %v3108 = vld [vmem:[#allocation2 + $0x50] sm:$0xf]
      %v3109 = vld [vmem:[#allocation2 + $0x54] sm:$0xf]
      %v3110 = vld [vmem:[#allocation2 + $0x58] sm:$0xf]
      %v3111 = vld [vmem:[#allocation2 + $0x5c] sm:$0xf]
      %v3112 = vld [vmem:[#allocation2 + $0x60] sm:$0xf]
      %v3113 = vld [vmem:[#allocation2 + $0x64] sm:$0xf]
      %v3114 = vld [vmem:[#allocation2 + $0x68] sm:$0xf]
      %v3115 = vld [vmem:[#allocation2 + $0x6c] sm:$0xf]
      %v3116 = vld [vmem:[#allocation2 + $0x70] sm:$0xf]
      %v3117 = vld [vmem:[#allocation2 + $0x74] sm:$0xf]
      %v3118 = vld [vmem:[#allocation2 + $0x78] sm:$0xf]
      %v3119 = vld [vmem:[#allocation2 + $0x7c] sm:$0xf]
      %v3120 = vld [vmem:[#allocation2 + $0x80] sm:$0xf]
      %v3121 = vld [vmem:[#allocation2 + $0x84] sm:$0xf]
      %v3122 = vld [vmem:[#allocation2 + $0x88] sm:$0xf]
      %v3123 = vld [vmem:[#allocation2 + $0x8c] sm:$0xf]
      %v3124 = vld [vmem:[#allocation2 + $0x90] sm:$0xf]
      %v3125 = vld [vmem:[#allocation2 + $0x94] sm:$0xf]
      %v3126 = vld [vmem:[#allocation2 + $0x98] sm:$0x1]
      %v3164 = vunpack.c.l.b16 %v3090
      %v3165 = vunpack.c.l.b16 %v3091
      %v3166 = vunpack.c.l.b16 %v3092
      %v3167 = vunpack.c.l.b16 %v3093
      %v3168 = vunpack.c.l.b16 %v3094
      %v3169 = vunpack.c.l.b16 %v3095
      %v3170 = vunpack.c.l.b16 %v3096
      %v3171 = vunpack.c.l.b16 %v3097
      %v3172 = vunpack.c.l.b16 %v3098
      %v3173 = vunpack.c.l.b16 %v3099
      %v3174 = vunpack.c.l.b16 %v3100
      %v3175 = vunpack.c.l.b16 %v3101
      %v3176 = vunpack.c.l.b16 %v3102
      %v3177 = vunpack.c.l.b16 %v3103
      %v3178 = vunpack.c.l.b16 %v3104
      %v3179 = vunpack.c.l.b16 %v3105
      %v3180 = vunpack.c.l.b16 %v3106
      %v3181 = vunpack.c.l.b16 %v3107
      %v3182 = vunpack.c.l.b16 %v3108
      %v3183 = vunpack.c.l.b16 %v3109
      %v3184 = vunpack.c.l.b16 %v3110
      %v3185 = vunpack.c.l.b16 %v3111
      %v3186 = vunpack.c.l.b16 %v3112
      %v3187 = vunpack.c.l.b16 %v3113
      %v3188 = vunpack.c.l.b16 %v3114
      %v3189 = vunpack.c.l.b16 %v3115
      %v3190 = vunpack.c.l.b16 %v3116
      %v3191 = vunpack.c.l.b16 %v3117
      %v3192 = vunpack.c.l.b16 %v3118
      %v3193 = vunpack.c.l.b16 %v3119
      %v3194 = vunpack.c.l.b16 %v3120
      %v3195 = vunpack.c.l.b16 %v3121
      %v3196 = vunpack.c.l.b16 %v3122
      %v3197 = vunpack.c.l.b16 %v3123
      %v3198 = vunpack.c.l.b16 %v3124
      %v3199 = vunpack.c.l.b16 %v3125
      %v3200 = vunpack.c.l.b16 %v3126
      %v3201 = vpack.c.b16 %v3165, %v3164
      %v3202 = vpack.c.b16 %v3167, %v3166
      %v3203 = vpack.c.b16 %v3169, %v3168
      %v3204 = vpack.c.b16 %v3171, %v3170
      %v3205 = vpack.c.b16 %v3173, %v3172
      %v3206 = vpack.c.b16 %v3175, %v3174
      %v3207 = vpack.c.b16 %v3177, %v3176
      %v3208 = vpack.c.b16 %v3179, %v3178
      %v3209 = vpack.c.b16 %v3181, %v3180
      %v3210 = vpack.c.b16 %v3183, %v3182
      %v3211 = vpack.c.b16 %v3185, %v3184
      %v3212 = vpack.c.b16 %v3187, %v3186
      %v3213 = vpack.c.b16 %v3189, %v3188
      %v3214 = vpack.c.b16 %v3191, %v3190
      %v3215 = vpack.c.b16 %v3193, %v3192
      %v3216 = vpack.c.b16 %v3195, %v3194
      %v3217 = vpack.c.b16 %v3197, %v3196
      %v3218 = vpack.c.b16 %v3199, %v3198
      %v3219 = vpack.c.b16 %v3200, %v3200
      %v3220 = vrot.slane %v3201, 1
      %v3221 = vrot.slane %v3202, 1
      %v3222 = vsel %vm2782, %v3220, %v3221
      %v3223 = vrot.slane %v3203, 1
      %v3224 = vsel %vm2782, %v3221, %v3223
      %v3225 = vrot.slane %v3204, 1
      %v3226 = vsel %vm2782, %v3223, %v3225
      %v3227 = vrot.slane %v3205, 1
      %v3228 = vsel %vm2782, %v3225, %v3227
      %v3229 = vrot.slane %v3206, 1
      %v3230 = vsel %vm2782, %v3227, %v3229
      %v3231 = vrot.slane %v3207, 1
      %v3232 = vsel %vm2782, %v3229, %v3231
      %v3233 = vrot.slane %v3208, 1
      %v3234 = vsel %vm2782, %v3231, %v3233
      %v3235 = vrot.slane %v3209, 1
      %v3236 = vsel %vm2782, %v3233, %v3235
      %v3237 = vrot.slane %v3210, 1
      %v3238 = vsel %vm2782, %v3235, %v3237
      %v3239 = vrot.slane %v3211, 1
      %v3240 = vsel %vm2782, %v3237, %v3239
      %v3241 = vrot.slane %v3212, 1
      %v3242 = vsel %vm2782, %v3239, %v3241
      %v3243 = vrot.slane %v3213, 1
      %v3244 = vsel %vm2782, %v3241, %v3243
      %v3245 = vrot.slane %v3214, 1
      %v3246 = vsel %vm2782, %v3243, %v3245
      %v3247 = vrot.slane %v3215, 1
      %v3248 = vsel %vm2782, %v3245, %v3247
      %v3249 = vrot.slane %v3216, 1
      %v3250 = vsel %vm2782, %v3247, %v3249
      %v3251 = vrot.slane %v3217, 1
      %v3252 = vsel %vm2782, %v3249, %v3251
      %v3253 = vrot.slane %v3218, 1
      %v3254 = vsel %vm2782, %v3251, %v3253
      %v3255 = vrot.slane %v3219, 1
      %v3256 = vsel %vm2782, %v3253, %v3255
      %v3258 = vsel %vm2326, %v3222, 0
      %v3261 = vsel %vm2326, %v3224, 0
      %v3264 = vsel %vm2326, %v3226, 0
      %v3267 = vsel %vm2326, %v3228, 0
      %v3270 = vsel %vm2326, %v3230, 0
      %v3273 = vsel %vm2326, %v3232, 0
      %v3276 = vsel %vm2326, %v3234, 0
      %v3279 = vsel %vm2326, %v3236, 0
      %v3282 = vsel %vm2326, %v3238, 0
      %v3285 = vsel %vm2326, %v3240, 0
      %v3288 = vsel %vm2326, %v3242, 0
      %v3291 = vsel %vm2326, %v3244, 0
      %v3294 = vsel %vm2326, %v3246, 0
      %v3297 = vsel %vm2326, %v3248, 0
      %v3300 = vsel %vm2326, %v3250, 0
      %v3303 = vsel %vm2326, %v3252, 0
      %v3306 = vsel %vm2326, %v3254, 0
      %v3309 = vsel %vm2326, %v3256, 0
      %v3312 = vsel %vm2381, %v335, 0
      %3314 = vmatprep.subr.bf16.mxu0 0
      %3315 = vmatpush1.bf16.msra.mxu0 %v3312
      %3316 = vmatprep.subr.bf16.mxu0 0
      %3317 = vmatpush1.bf16.msra.mxu0 0
      %3318 = vmatprep.subr.bf16.mxu0 0
      %3319 = vmatpush1.bf16.msra.mxu0 0
      %3320 = vmatprep.subr.bf16.mxu0 0
      %3321 = vmatpush1.bf16.msra.mxu0 0
      %3322 = vmatprep.subr.bf16.mxu0 0
      %3323 = vmatpush1.bf16.msra.mxu0 0
      %3324 = vmatprep.subr.bf16.mxu0 0
      %3325 = vmatpush1.bf16.msra.mxu0 0
      %3326 = vmatprep.subr.bf16.mxu0 0
      %3327 = vmatpush1.bf16.msra.mxu0 0
      %3328 = vmatprep.subr.bf16.mxu0 0
      %3329 = vmatpush1.bf16.msra.mxu0 0
      %3330 = vmatprep.subr.bf16.mxu0 0
      %3331 = vmatpush1.bf16.msra.mxu0 0
      %3332 = vmatprep.subr.bf16.mxu0 0
      %3333 = vmatpush1.bf16.msra.mxu0 0
      %3334 = vmatprep.subr.bf16.mxu0 0
      %3335 = vmatpush1.bf16.msra.mxu0 0
      %3336 = vmatprep.subr.bf16.mxu0 0
      %3337 = vmatpush1.bf16.msra.mxu0 0
      %3338 = vmatprep.subr.bf16.mxu0 0
      %3339 = vmatpush1.bf16.msra.mxu0 0
      %3340 = vmatprep.subr.bf16.mxu0 0
      %3341 = vmatpush1.bf16.msra.mxu0 0
      %3342 = vmatprep.subr.bf16.mxu0 0
      %3343 = vmatpush1.bf16.msra.mxu0 0
      %3344 = vmatprep.subr.bf16.mxu0 0
      %3345 = vmatpush1.bf16.msra.mxu0 0
      %3346 = vmatprep.mubr.bf16.mxu0 0
      %3347 = vmatmul.mubr.bf16.gmra.mrb[0].mxu0 %v3258
      %v3348 = vpop.f32.mrb[0].mxu0
      %v3349 = vadd.f32 0.0, %v3348
      %v3350 = vpop.f32.mrb[0].mxu0
      %v3351 = vpop.f32.mrb[0].mxu0
      %v3352 = vadd.f32 0.0, %v3351
      %v3353 = vpop.f32.mrb[0].mxu0
      %3354 = vmatprep.mubr.bf16.mxu0 0
      %3355 = vmatmul.mubr.bf16.gmra.mrb[0].mxu0 %v3261
      %v3356 = vpop.f32.mrb[0].mxu0
      %v3357 = vadd.f32 0.0, %v3356
      %v3358 = vpop.f32.mrb[0].mxu0
      %v3359 = vpop.f32.mrb[0].mxu0
      %v3360 = vadd.f32 0.0, %v3359
      %v3361 = vpop.f32.mrb[0].mxu0
      %3362 = vmatprep.mubr.bf16.mxu0 0
      %3363 = vmatmul.mubr.bf16.gmra.mrb[0].mxu0 %v3264
      %v3364 = vpop.f32.mrb[0].mxu0
      %v3365 = vadd.f32 0.0, %v3364
      %v3366 = vpop.f32.mrb[0].mxu0
      %v3367 = vpop.f32.mrb[0].mxu0
      %v3368 = vadd.f32 0.0, %v3367
      %v3369 = vpop.f32.mrb[0].mxu0
      %3370 = vmatprep.mubr.bf16.mxu0 0
      %3371 = vmatmul.mubr.bf16.gmra.mrb[0].mxu0 %v3267
      %v3372 = vpop.f32.mrb[0].mxu0
      %v3373 = vadd.f32 0.0, %v3372
      %v3374 = vpop.f32.mrb[0].mxu0
      %v3375 = vpop.f32.mrb[0].mxu0
      %v3376 = vadd.f32 0.0, %v3375
      %v3377 = vpop.f32.mrb[0].mxu0
      %3378 = vmatprep.mubr.bf16.mxu0 0
      %3379 = vmatmul.mubr.bf16.gmra.mrb[0].mxu0 %v3270
      %v3380 = vpop.f32.mrb[0].mxu0
      %v3381 = vadd.f32 0.0, %v3380
      %v3382 = vpop.f32.mrb[0].mxu0
      %v3383 = vpop.f32.mrb[0].mxu0
      %v3384 = vadd.f32 0.0, %v3383
      %v3385 = vpop.f32.mrb[0].mxu0
      %3386 = vmatprep.mubr.bf16.mxu0 0
      %3387 = vmatmul.mubr.bf16.gmra.mrb[0].mxu0 %v3273
      %v3388 = vpop.f32.mrb[0].mxu0
      %v3389 = vadd.f32 0.0, %v3388
      %v3390 = vpop.f32.mrb[0].mxu0
      %v3391 = vpop.f32.mrb[0].mxu0
      %v3392 = vadd.f32 0.0, %v3391
      %v3393 = vpop.f32.mrb[0].mxu0
      %3394 = vmatprep.mubr.bf16.mxu0 0
      %3395 = vmatmul.mubr.bf16.gmra.mrb[0].mxu0 %v3276
      %v3396 = vpop.f32.mrb[0].mxu0
      %v3397 = vadd.f32 0.0, %v3396
      %v3398 = vpop.f32.mrb[0].mxu0
      %v3399 = vpop.f32.mrb[0].mxu0
      %v3400 = vadd.f32 0.0, %v3399
      %v3401 = vpop.f32.mrb[0].mxu0
      %3402 = vmatprep.mubr.bf16.mxu0 0
      %3403 = vmatmul.mubr.bf16.gmra.mrb[0].mxu0 %v3279
      %v3404 = vpop.f32.mrb[0].mxu0
      %v3405 = vadd.f32 0.0, %v3404
      %v3406 = vpop.f32.mrb[0].mxu0
      %v3407 = vpop.f32.mrb[0].mxu0
      %v3408 = vadd.f32 0.0, %v3407
      %v3409 = vpop.f32.mrb[0].mxu0
      %3410 = vmatprep.mubr.bf16.mxu0 0
      %3411 = vmatmul.mubr.bf16.gmra.mrb[0].mxu0 %v3282
      %v3412 = vpop.f32.mrb[0].mxu0
      %v3413 = vadd.f32 0.0, %v3412
      %v3414 = vpop.f32.mrb[0].mxu0
      %v3415 = vpop.f32.mrb[0].mxu0
      %v3416 = vadd.f32 0.0, %v3415
      %v3417 = vpop.f32.mrb[0].mxu0
      %3418 = vmatprep.mubr.bf16.mxu0 0
      %3419 = vmatmul.mubr.bf16.gmra.mrb[0].mxu0 %v3285
      %v3420 = vpop.f32.mrb[0].mxu0
      %v3421 = vadd.f32 0.0, %v3420
      %v3422 = vpop.f32.mrb[0].mxu0
      %v3423 = vpop.f32.mrb[0].mxu0
      %v3424 = vadd.f32 0.0, %v3423
      %v3425 = vpop.f32.mrb[0].mxu0
      %3426 = vmatprep.mubr.bf16.mxu0 0
      %3427 = vmatmul.mubr.bf16.gmra.mrb[0].mxu0 %v3288
      %v3428 = vpop.f32.mrb[0].mxu0
      %v3429 = vadd.f32 0.0, %v3428
      %v3430 = vpop.f32.mrb[0].mxu0
      %v3431 = vpop.f32.mrb[0].mxu0
      %v3432 = vadd.f32 0.0, %v3431
      %v3433 = vpop.f32.mrb[0].mxu0
      %3434 = vmatprep.mubr.bf16.mxu0 0
      %3435 = vmatmul.mubr.bf16.gmra.mrb[0].mxu0 %v3291
      %v3436 = vpop.f32.mrb[0].mxu0
      %v3437 = vadd.f32 0.0, %v3436
      %v3438 = vpop.f32.mrb[0].mxu0
      %v3439 = vpop.f32.mrb[0].mxu0
      %v3440 = vadd.f32 0.0, %v3439
      %v3441 = vpop.f32.mrb[0].mxu0
      %3442 = vmatprep.mubr.bf16.mxu0 0
      %3443 = vmatmul.mubr.bf16.gmra.mrb[0].mxu0 %v3294
      %v3444 = vpop.f32.mrb[0].mxu0
      %v3445 = vadd.f32 0.0, %v3444
      %v3446 = vpop.f32.mrb[0].mxu0
      %v3447 = vpop.f32.mrb[0].mxu0
      %v3448 = vadd.f32 0.0, %v3447
      %v3449 = vpop.f32.mrb[0].mxu0
      %3450 = vmatprep.mubr.bf16.mxu0 0
      %3451 = vmatmul.mubr.bf16.gmra.mrb[0].mxu0 %v3297
      %v3452 = vpop.f32.mrb[0].mxu0
      %v3453 = vadd.f32 0.0, %v3452
      %v3454 = vpop.f32.mrb[0].mxu0
      %v3455 = vpop.f32.mrb[0].mxu0
      %v3456 = vadd.f32 0.0, %v3455
      %v3457 = vpop.f32.mrb[0].mxu0
      %3458 = vmatprep.mubr.bf16.mxu0 0
      %3459 = vmatmul.mubr.bf16.gmra.mrb[0].mxu0 %v3300
      %v3460 = vpop.f32.mrb[0].mxu0
      %v3461 = vadd.f32 0.0, %v3460
      %v3462 = vpop.f32.mrb[0].mxu0
      %v3463 = vpop.f32.mrb[0].mxu0
      %v3464 = vadd.f32 0.0, %v3463
      %v3465 = vpop.f32.mrb[0].mxu0
      %3466 = vmatprep.mubr.bf16.mxu0 0
      %3467 = vmatmul.mubr.bf16.gmra.mrb[0].mxu0 %v3303
      %v3468 = vpop.f32.mrb[0].mxu0
      %v3469 = vadd.f32 0.0, %v3468
      %v3470 = vpop.f32.mrb[0].mxu0
      %v3471 = vpop.f32.mrb[0].mxu0
      %v3472 = vadd.f32 0.0, %v3471
      %v3473 = vpop.f32.mrb[0].mxu0
      %3474 = vmatprep.mubr.bf16.mxu0 0
      %3475 = vmatmul.mubr.bf16.gmra.mrb[0].mxu0 %v3306
      %v3476 = vpop.f32.mrb[0].mxu0
      %v3477 = vadd.f32 0.0, %v3476
      %v3478 = vpop.f32.mrb[0].mxu0
      %v3479 = vpop.f32.mrb[0].mxu0
      %v3480 = vadd.f32 0.0, %v3479
      %v3481 = vpop.f32.mrb[0].mxu0
      %3482 = vmatprep.mubr.bf16.mxu0 0
      %3483 = vmatmul.mubr.bf16.gmra.mrb[0].mxu0 %v3309
      %v3484 = vpop.f32.mrb[0].mxu0
      %v3485 = vadd.f32 0.0, %v3484
      %v3486 = vpop.f32.mrb[0].mxu0
      %v3487 = vpop.f32.mrb[0].mxu0
      %v3488 = vadd.f32 0.0, %v3487
      %v3489 = vpop.f32.mrb[0].mxu0
      %3490 = vdwg.mxu0
      %v3491 = vadd.f32 %v3054, %v3349
      %v3492 = vadd.f32 %v3055, %v3352
      %v3493 = vadd.f32 %v3056, %v3357
      %v3494 = vadd.f32 %v3057, %v3360
      %v3495 = vadd.f32 %v3058, %v3365
      %v3496 = vadd.f32 %v3059, %v3368
      %v3497 = vadd.f32 %v3060, %v3373
      %v3498 = vadd.f32 %v3061, %v3376
      %v3499 = vadd.f32 %v3062, %v3381
      %v3500 = vadd.f32 %v3063, %v3384
      %v3501 = vadd.f32 %v3064, %v3389
      %v3502 = vadd.f32 %v3065, %v3392
      %v3503 = vadd.f32 %v3066, %v3397
      %v3504 = vadd.f32 %v3067, %v3400
      %v3505 = vadd.f32 %v3068, %v3405
      %v3506 = vadd.f32 %v3069, %v3408
      %v3507 = vadd.f32 %v3070, %v3413
      %v3508 = vadd.f32 %v3071, %v3416
      %v3509 = vadd.f32 %v3072, %v3421
      %v3510 = vadd.f32 %v3073, %v3424
      %v3511 = vadd.f32 %v3074, %v3429
      %v3512 = vadd.f32 %v3075, %v3432
      %v3513 = vadd.f32 %v3076, %v3437
      %v3514 = vadd.f32 %v3077, %v3440
      %v3515 = vadd.f32 %v3078, %v3445
      %v3516 = vadd.f32 %v3079, %v3448
      %v3517 = vadd.f32 %v3080, %v3453
      %v3518 = vadd.f32 %v3081, %v3456
      %v3519 = vadd.f32 %v3082, %v3461
      %v3520 = vadd.f32 %v3083, %v3464
      %v3521 = vadd.f32 %v3084, %v3469
      %v3522 = vadd.f32 %v3085, %v3472
      %v3523 = vadd.f32 %v3086, %v3477
      %v3524 = vadd.f32 %v3087, %v3480
      %v3525 = vadd.f32 %v3088, %v3485
      %v3526 = vadd.f32 %v3089, %v3488
      %v3527 = vld [vmem:[#allocation2 + $0x98] sm:$0x3]
      %v3529 = vunpack.c.l.b16 %v3527
      %v3530 = vpack.c.b16 %v3529, %v3529
      %vm3531 = vsmask.f32 6400
      %v3533 = vshrl.u32 %v3201, 16
      %v3535 = vrot.slane %v3533, 1
      %v3536 = vshll.u32 %v3201, 16
      %v3538 = vrot.slane %v3536, 2
      %v3539 = vor.u32 %v3535, %v3538
      %v3541 = vshrl.u32 %v3202, 16
      %v3543 = vrot.slane %v3541, 1
      %v3544 = vshll.u32 %v3202, 16
      %v3546 = vrot.slane %v3544, 2
      %v3547 = vor.u32 %v3543, %v3546
      %v3548 = vsel %vm3531, %v3539, %v3547
      %v3550 = vshrl.u32 %v3203, 16
      %v3552 = vrot.slane %v3550, 1
      %v3553 = vshll.u32 %v3203, 16
      %v3555 = vrot.slane %v3553, 2
      %v3556 = vor.u32 %v3552, %v3555
      %v3557 = vsel %vm3531, %v3547, %v3556
      %v3559 = vshrl.u32 %v3204, 16
      %v3561 = vrot.slane %v3559, 1
      %v3562 = vshll.u32 %v3204, 16
      %v3564 = vrot.slane %v3562, 2
      %v3565 = vor.u32 %v3561, %v3564
      %v3566 = vsel %vm3531, %v3556, %v3565
      %v3568 = vshrl.u32 %v3205, 16
      %v3570 = vrot.slane %v3568, 1
      %v3571 = vshll.u32 %v3205, 16
      %v3573 = vrot.slane %v3571, 2
      %v3574 = vor.u32 %v3570, %v3573
      %v3575 = vsel %vm3531, %v3565, %v3574
      %v3577 = vshrl.u32 %v3206, 16
      %v3579 = vrot.slane %v3577, 1
      %v3580 = vshll.u32 %v3206, 16
      %v3582 = vrot.slane %v3580, 2
      %v3583 = vor.u32 %v3579, %v3582
      %v3584 = vsel %vm3531, %v3574, %v3583
      %v3586 = vshrl.u32 %v3207, 16
      %v3588 = vrot.slane %v3586, 1
      %v3589 = vshll.u32 %v3207, 16
      %v3591 = vrot.slane %v3589, 2
      %v3592 = vor.u32 %v3588, %v3591
      %v3593 = vsel %vm3531, %v3583, %v3592
      %v3595 = vshrl.u32 %v3208, 16
      %v3597 = vrot.slane %v3595, 1
      %v3598 = vshll.u32 %v3208, 16
      %v3600 = vrot.slane %v3598, 2
      %v3601 = vor.u32 %v3597, %v3600
      %v3602 = vsel %vm3531, %v3592, %v3601
      %v3604 = vshrl.u32 %v3209, 16
      %v3606 = vrot.slane %v3604, 1
      %v3607 = vshll.u32 %v3209, 16
      %v3609 = vrot.slane %v3607, 2
      %v3610 = vor.u32 %v3606, %v3609
      %v3611 = vsel %vm3531, %v3601, %v3610
      %v3613 = vshrl.u32 %v3210, 16
      %v3615 = vrot.slane %v3613, 1
      %v3616 = vshll.u32 %v3210, 16
      %v3618 = vrot.slane %v3616, 2
      %v3619 = vor.u32 %v3615, %v3618
      %v3620 = vsel %vm3531, %v3610, %v3619
      %v3622 = vshrl.u32 %v3211, 16
      %v3624 = vrot.slane %v3622, 1
      %v3625 = vshll.u32 %v3211, 16
      %v3627 = vrot.slane %v3625, 2
      %v3628 = vor.u32 %v3624, %v3627
      %v3629 = vsel %vm3531, %v3619, %v3628
      %v3631 = vshrl.u32 %v3212, 16
      %v3633 = vrot.slane %v3631, 1
      %v3634 = vshll.u32 %v3212, 16
      %v3636 = vrot.slane %v3634, 2
      %v3637 = vor.u32 %v3633, %v3636
      %v3638 = vsel %vm3531, %v3628, %v3637
      %v3640 = vshrl.u32 %v3213, 16
      %v3642 = vrot.slane %v3640, 1
      %v3643 = vshll.u32 %v3213, 16
      %v3645 = vrot.slane %v3643, 2
      %v3646 = vor.u32 %v3642, %v3645
      %v3647 = vsel %vm3531, %v3637, %v3646
      %v3649 = vshrl.u32 %v3214, 16
      %v3651 = vrot.slane %v3649, 1
      %v3652 = vshll.u32 %v3214, 16
      %v3654 = vrot.slane %v3652, 2
      %v3655 = vor.u32 %v3651, %v3654
      %v3656 = vsel %vm3531, %v3646, %v3655
      %v3658 = vshrl.u32 %v3215, 16
      %v3660 = vrot.slane %v3658, 1
      %v3661 = vshll.u32 %v3215, 16
      %v3663 = vrot.slane %v3661, 2
      %v3664 = vor.u32 %v3660, %v3663
      %v3665 = vsel %vm3531, %v3655, %v3664
      %v3667 = vshrl.u32 %v3216, 16
      %v3669 = vrot.slane %v3667, 1
      %v3670 = vshll.u32 %v3216, 16
      %v3672 = vrot.slane %v3670, 2
      %v3673 = vor.u32 %v3669, %v3672
      %v3674 = vsel %vm3531, %v3664, %v3673
      %v3676 = vshrl.u32 %v3217, 16
      %v3678 = vrot.slane %v3676, 1
      %v3679 = vshll.u32 %v3217, 16
      %v3681 = vrot.slane %v3679, 2
      %v3682 = vor.u32 %v3678, %v3681
      %v3683 = vsel %vm3531, %v3673, %v3682
      %v3685 = vshrl.u32 %v3218, 16
      %v3687 = vrot.slane %v3685, 1
      %v3688 = vshll.u32 %v3218, 16
      %v3690 = vrot.slane %v3688, 2
      %v3691 = vor.u32 %v3687, %v3690
      %v3692 = vsel %vm3531, %v3682, %v3691
      %v3694 = vshrl.u32 %v3530, 16
      %v3696 = vrot.slane %v3694, 1
      %v3697 = vshll.u32 %v3530, 16
      %v3699 = vrot.slane %v3697, 2
      %v3700 = vor.u32 %v3696, %v3699
      %v3701 = vsel %vm3531, %v3691, %v3700
      %v3703 = vsel %vm2326, %v3548, 0
      %v3706 = vsel %vm2326, %v3557, 0
      %v3709 = vsel %vm2326, %v3566, 0
      %v3712 = vsel %vm2326, %v3575, 0
      %v3715 = vsel %vm2326, %v3584, 0
      %v3718 = vsel %vm2326, %v3593, 0
      %v3721 = vsel %vm2326, %v3602, 0
      %v3724 = vsel %vm2326, %v3611, 0
      %v3727 = vsel %vm2326, %v3620, 0
      %v3730 = vsel %vm2326, %v3629, 0
      %v3733 = vsel %vm2326, %v3638, 0
      %v3736 = vsel %vm2326, %v3647, 0
      %v3739 = vsel %vm2326, %v3656, 0
      %v3742 = vsel %vm2326, %v3665, 0
      %v3745 = vsel %vm2326, %v3674, 0
      %v3748 = vsel %vm2326, %v3683, 0
      %v3751 = vsel %vm2326, %v3692, 0
      %v3754 = vsel %vm2326, %v3701, 0
      %v3757 = vsel %vm2381, %v336, 0
      %3759 = vmatprep.subr.bf16.mxu0 0
      %3760 = vmatpush1.bf16.msra.mxu0 %v3757
      %3761 = vmatprep.subr.bf16.mxu0 0
      %3762 = vmatpush1.bf16.msra.mxu0 0
      %3763 = vmatprep.subr.bf16.mxu0 0
      %3764 = vmatpush1.bf16.msra.mxu0 0
      %3765 = vmatprep.subr.bf16.mxu0 0
      %3766 = vmatpush1.bf16.msra.mxu0 0
      %3767 = vmatprep.subr.bf16.mxu0 0
      %3768 = vmatpush1.bf16.msra.mxu0 0
      %3769 = vmatprep.subr.bf16.mxu0 0
      %3770 = vmatpush1.bf16.msra.mxu0 0
      %3771 = vmatprep.subr.bf16.mxu0 0
      %3772 = vmatpush1.bf16.msra.mxu0 0
      %3773 = vmatprep.subr.bf16.mxu0 0
      %3774 = vmatpush1.bf16.msra.mxu0 0
      %3775 = vmatprep.subr.bf16.mxu0 0
      %3776 = vmatpush1.bf16.msra.mxu0 0
      %3777 = vmatprep.subr.bf16.mxu0 0
      %3778 = vmatpush1.bf16.msra.mxu0 0
      %3779 = vmatprep.subr.bf16.mxu0 0
      %3780 = vmatpush1.bf16.msra.mxu0 0
      %3781 = vmatprep.subr.bf16.mxu0 0
      %3782 = vmatpush1.bf16.msra.mxu0 0
      %3783 = vmatprep.subr.bf16.mxu0 0
      %3784 = vmatpush1.bf16.msra.mxu0 0
      %3785 = vmatprep.subr.bf16.mxu0 0
      %3786 = vmatpush1.bf16.msra.mxu0 0
      %3787 = vmatprep.subr.bf16.mxu0 0
      %3788 = vmatpush1.bf16.msra.mxu0 0
      %3789 = vmatprep.subr.bf16.mxu0 0
      %3790 = vmatpush1.bf16.msra.mxu0 0
      %3791 = vmatprep.mubr.bf16.mxu0 0
      %3792 = vmatmul.mubr.bf16.gmra.mrb[0].mxu0 %v3703
      %v3793 = vpop.f32.mrb[0].mxu0
      %v3794 = vadd.f32 0.0, %v3793
      %v3795 = vpop.f32.mrb[0].mxu0
      %v3796 = vpop.f32.mrb[0].mxu0
      %v3797 = vadd.f32 0.0, %v3796
      %v3798 = vpop.f32.mrb[0].mxu0
      %3799 = vmatprep.mubr.bf16.mxu0 0
      %3800 = vmatmul.mubr.bf16.gmra.mrb[0].mxu0 %v3706
      %v3801 = vpop.f32.mrb[0].mxu0
      %v3802 = vadd.f32 0.0, %v3801
      %v3803 = vpop.f32.mrb[0].mxu0
      %v3804 = vpop.f32.mrb[0].mxu0
      %v3805 = vadd.f32 0.0, %v3804
      %v3806 = vpop.f32.mrb[0].mxu0
      %3807 = vmatprep.mubr.bf16.mxu0 0
      %3808 = vmatmul.mubr.bf16.gmra.mrb[0].mxu0 %v3709
      %v3809 = vpop.f32.mrb[0].mxu0
      %v3810 = vadd.f32 0.0, %v3809
      %v3811 = vpop.f32.mrb[0].mxu0
      %v3812 = vpop.f32.mrb[0].mxu0
      %v3813 = vadd.f32 0.0, %v3812
      %v3814 = vpop.f32.mrb[0].mxu0
      %3815 = vmatprep.mubr.bf16.mxu0 0
      %3816 = vmatmul.mubr.bf16.gmra.mrb[0].mxu0 %v3712
      %v3817 = vpop.f32.mrb[0].mxu0
      %v3818 = vadd.f32 0.0, %v3817
      %v3819 = vpop.f32.mrb[0].mxu0
      %v3820 = vpop.f32.mrb[0].mxu0
      %v3821 = vadd.f32 0.0, %v3820
      %v3822 = vpop.f32.mrb[0].mxu0
      %3823 = vmatprep.mubr.bf16.mxu0 0
      %3824 = vmatmul.mubr.bf16.gmra.mrb[0].mxu0 %v3715
      %v3825 = vpop.f32.mrb[0].mxu0
      %v3826 = vadd.f32 0.0, %v3825
      %v3827 = vpop.f32.mrb[0].mxu0
      %v3828 = vpop.f32.mrb[0].mxu0
      %v3829 = vadd.f32 0.0, %v3828
      %v3830 = vpop.f32.mrb[0].mxu0
      %3831 = vmatprep.mubr.bf16.mxu0 0
      %3832 = vmatmul.mubr.bf16.gmra.mrb[0].mxu0 %v3718
      %v3833 = vpop.f32.mrb[0].mxu0
      %v3834 = vadd.f32 0.0, %v3833
      %v3835 = vpop.f32.mrb[0].mxu0
      %v3836 = vpop.f32.mrb[0].mxu0
      %v3837 = vadd.f32 0.0, %v3836
      %v3838 = vpop.f32.mrb[0].mxu0
      %3839 = vmatprep.mubr.bf16.mxu0 0
      %3840 = vmatmul.mubr.bf16.gmra.mrb[0].mxu0 %v3721
      %v3841 = vpop.f32.mrb[0].mxu0
      %v3842 = vadd.f32 0.0, %v3841
      %v3843 = vpop.f32.mrb[0].mxu0
      %v3844 = vpop.f32.mrb[0].mxu0
      %v3845 = vadd.f32 0.0, %v3844
      %v3846 = vpop.f32.mrb[0].mxu0
      %3847 = vmatprep.mubr.bf16.mxu0 0
      %3848 = vmatmul.mubr.bf16.gmra.mrb[0].mxu0 %v3724
      %v3849 = vpop.f32.mrb[0].mxu0
      %v3850 = vadd.f32 0.0, %v3849
      %v3851 = vpop.f32.mrb[0].mxu0
      %v3852 = vpop.f32.mrb[0].mxu0
      %v3853 = vadd.f32 0.0, %v3852
      %v3854 = vpop.f32.mrb[0].mxu0
      %3855 = vmatprep.mubr.bf16.mxu0 0
      %3856 = vmatmul.mubr.bf16.gmra.mrb[0].mxu0 %v3727
      %v3857 = vpop.f32.mrb[0].mxu0
      %v3858 = vadd.f32 0.0, %v3857
      %v3859 = vpop.f32.mrb[0].mxu0
      %v3860 = vpop.f32.mrb[0].mxu0
      %v3861 = vadd.f32 0.0, %v3860
      %v3862 = vpop.f32.mrb[0].mxu0
      %3863 = vmatprep.mubr.bf16.mxu0 0
      %3864 = vmatmul.mubr.bf16.gmra.mrb[0].mxu0 %v3730
      %v3865 = vpop.f32.mrb[0].mxu0
      %v3866 = vadd.f32 0.0, %v3865
      %v3867 = vpop.f32.mrb[0].mxu0
      %v3868 = vpop.f32.mrb[0].mxu0
      %v3869 = vadd.f32 0.0, %v3868
      %v3870 = vpop.f32.mrb[0].mxu0
      %3871 = vmatprep.mubr.bf16.mxu0 0
      %3872 = vmatmul.mubr.bf16.gmra.mrb[0].mxu0 %v3733
      %v3873 = vpop.f32.mrb[0].mxu0
      %v3874 = vadd.f32 0.0, %v3873
      %v3875 = vpop.f32.mrb[0].mxu0
      %v3876 = vpop.f32.mrb[0].mxu0
      %v3877 = vadd.f32 0.0, %v3876
      %v3878 = vpop.f32.mrb[0].mxu0
      %3879 = vmatprep.mubr.bf16.mxu0 0
      %3880 = vmatmul.mubr.bf16.gmra.mrb[0].mxu0 %v3736
      %v3881 = vpop.f32.mrb[0].mxu0
      %v3882 = vadd.f32 0.0, %v3881
      %v3883 = vpop.f32.mrb[0].mxu0
      %v3884 = vpop.f32.mrb[0].mxu0
      %v3885 = vadd.f32 0.0, %v3884
      %v3886 = vpop.f32.mrb[0].mxu0
      %3887 = vmatprep.mubr.bf16.mxu0 0
      %3888 = vmatmul.mubr.bf16.gmra.mrb[0].mxu0 %v3739
      %v3889 = vpop.f32.mrb[0].mxu0
      %v3890 = vadd.f32 0.0, %v3889
      %v3891 = vpop.f32.mrb[0].mxu0
      %v3892 = vpop.f32.mrb[0].mxu0
      %v3893 = vadd.f32 0.0, %v3892
      %v3894 = vpop.f32.mrb[0].mxu0
      %3895 = vmatprep.mubr.bf16.mxu0 0
      %3896 = vmatmul.mubr.bf16.gmra.mrb[0].mxu0 %v3742
      %v3897 = vpop.f32.mrb[0].mxu0
      %v3898 = vadd.f32 0.0, %v3897
      %v3899 = vpop.f32.mrb[0].mxu0
      %v3900 = vpop.f32.mrb[0].mxu0
      %v3901 = vadd.f32 0.0, %v3900
      %v3902 = vpop.f32.mrb[0].mxu0
      %3903 = vmatprep.mubr.bf16.mxu0 0
      %3904 = vmatmul.mubr.bf16.gmra.mrb[0].mxu0 %v3745
      %v3905 = vpop.f32.mrb[0].mxu0
      %v3906 = vadd.f32 0.0, %v3905
      %v3907 = vpop.f32.mrb[0].mxu0
      %v3908 = vpop.f32.mrb[0].mxu0
      %v3909 = vadd.f32 0.0, %v3908
      %v3910 = vpop.f32.mrb[0].mxu0
      %3911 = vmatprep.mubr.bf16.mxu0 0
      %3912 = vmatmul.mubr.bf16.gmra.mrb[0].mxu0 %v3748
      %v3913 = vpop.f32.mrb[0].mxu0
      %v3914 = vadd.f32 0.0, %v3913
      %v3915 = vpop.f32.mrb[0].mxu0
      %v3916 = vpop.f32.mrb[0].mxu0
      %v3917 = vadd.f32 0.0, %v3916
      %v3918 = vpop.f32.mrb[0].mxu0
      %3919 = vmatprep.mubr.bf16.mxu0 0
      %3920 = vmatmul.mubr.bf16.gmra.mrb[0].mxu0 %v3751
      %v3921 = vpop.f32.mrb[0].mxu0
      %v3922 = vadd.f32 0.0, %v3921
      %v3923 = vpop.f32.mrb[0].mxu0
      %v3924 = vpop.f32.mrb[0].mxu0
      %v3925 = vadd.f32 0.0, %v3924
      %v3926 = vpop.f32.mrb[0].mxu0
      %3927 = vmatprep.mubr.bf16.mxu0 0
      %3928 = vmatmul.mubr.bf16.gmra.mrb[0].mxu0 %v3754
      %v3929 = vpop.f32.mrb[0].mxu0
      %v3930 = vadd.f32 0.0, %v3929
      %v3931 = vpop.f32.mrb[0].mxu0
      %v3932 = vpop.f32.mrb[0].mxu0
      %v3933 = vadd.f32 0.0, %v3932
      %v3934 = vpop.f32.mrb[0].mxu0
      %3935 = vdwg.mxu0
      %v3936 = vadd.f32 %v3491, %v3794
      %v3937 = vadd.f32 %v3492, %v3797
      %v3938 = vadd.f32 %v3493, %v3802
      %v3939 = vadd.f32 %v3494, %v3805
      %v3940 = vadd.f32 %v3495, %v3810
      %v3941 = vadd.f32 %v3496, %v3813
      %v3942 = vadd.f32 %v3497, %v3818
      %v3943 = vadd.f32 %v3498, %v3821
      %v3944 = vadd.f32 %v3499, %v3826
      %v3945 = vadd.f32 %v3500, %v3829
      %v3946 = vadd.f32 %v3501, %v3834
      %v3947 = vadd.f32 %v3502, %v3837
      %v3948 = vadd.f32 %v3503, %v3842
      %v3949 = vadd.f32 %v3504, %v3845
      %v3950 = vadd.f32 %v3505, %v3850
      %v3951 = vadd.f32 %v3506, %v3853
      %v3952 = vadd.f32 %v3507, %v3858
      %v3953 = vadd.f32 %v3508, %v3861
      %v3954 = vadd.f32 %v3509, %v3866
      %v3955 = vadd.f32 %v3510, %v3869
      %v3956 = vadd.f32 %v3511, %v3874
      %v3957 = vadd.f32 %v3512, %v3877
      %v3958 = vadd.f32 %v3513, %v3882
      %v3959 = vadd.f32 %v3514, %v3885
      %v3960 = vadd.f32 %v3515, %v3890
      %v3961 = vadd.f32 %v3516, %v3893
      %v3962 = vadd.f32 %v3517, %v3898
      %v3963 = vadd.f32 %v3518, %v3901
      %v3964 = vadd.f32 %v3519, %v3906
      %v3965 = vadd.f32 %v3520, %v3909
      %v3966 = vadd.f32 %v3521, %v3914
      %v3967 = vadd.f32 %v3522, %v3917
      %v3968 = vadd.f32 %v3523, %v3922
      %v3969 = vadd.f32 %v3524, %v3925
      %v3970 = vadd.f32 %v3525, %v3930
      %v3971 = vadd.f32 %v3526, %v3933
      %v3972 = vld [vmem:[#allocation2 + $0x8] sm:$0xc]
      %v3974 = vunpack.c.l.b16 %v3972
      %v3975 = vpack.c.b16 %v3165, %v3974
      %vm3976 = vcmask 1045504
      %v3977 = vrot.slane %v3975, 2
      %v3978 = vrot.slane %v3202, 2
      %v3979 = vsel %vm3976, %v3977, %v3978
      %v3980 = vrot.slane %v3203, 2
      %v3981 = vsel %vm3976, %v3978, %v3980
      %v3982 = vrot.slane %v3204, 2
      %v3983 = vsel %vm3976, %v3980, %v3982
      %v3984 = vrot.slane %v3205, 2
      %v3985 = vsel %vm3976, %v3982, %v3984
      %v3986 = vrot.slane %v3206, 2
      %v3987 = vsel %vm3976, %v3984, %v3986
      %v3988 = vrot.slane %v3207, 2
      %v3989 = vsel %vm3976, %v3986, %v3988
      %v3990 = vrot.slane %v3208, 2
      %v3991 = vsel %vm3976, %v3988, %v3990
      %v3992 = vrot.slane %v3209, 2
      %v3993 = vsel %vm3976, %v3990, %v3992
      %v3994 = vrot.slane %v3210, 2
      %v3995 = vsel %vm3976, %v3992, %v3994
      %v3996 = vrot.slane %v3211, 2
      %v3997 = vsel %vm3976, %v3994, %v3996
      %v3998 = vrot.slane %v3212, 2
      %v3999 = vsel %vm3976, %v3996, %v3998
      %v4000 = vrot.slane %v3213, 2
      %v4001 = vsel %vm3976, %v3998, %v4000
      %v4002 = vrot.slane %v3214, 2
      %v4003 = vsel %vm3976, %v4000, %v4002
      %v4004 = vrot.slane %v3215, 2
      %v4005 = vsel %vm3976, %v4002, %v4004
      %v4006 = vrot.slane %v3216, 2
      %v4007 = vsel %vm3976, %v4004, %v4006
      %v4008 = vrot.slane %v3217, 2
      %v4009 = vsel %vm3976, %v4006, %v4008
      %v4010 = vrot.slane %v3218, 2
      %v4011 = vsel %vm3976, %v4008, %v4010
      %v4012 = vrot.slane %v3530, 2
      %v4013 = vsel %vm3976, %v4010, %v4012
      %v4015 = vsel %vm2326, %v3979, 0
      %v4018 = vsel %vm2326, %v3981, 0
      %v4021 = vsel %vm2326, %v3983, 0
      %v4024 = vsel %vm2326, %v3985, 0
      %v4027 = vsel %vm2326, %v3987, 0
      %v4030 = vsel %vm2326, %v3989, 0
      %v4033 = vsel %vm2326, %v3991, 0
      %v4036 = vsel %vm2326, %v3993, 0
      %v4039 = vsel %vm2326, %v3995, 0
      %v4042 = vsel %vm2326, %v3997, 0
      %v4045 = vsel %vm2326, %v3999, 0
      %v4048 = vsel %vm2326, %v4001, 0
      %v4051 = vsel %vm2326, %v4003, 0
      %v4054 = vsel %vm2326, %v4005, 0
      %v4057 = vsel %vm2326, %v4007, 0
      %v4060 = vsel %vm2326, %v4009, 0
      %v4063 = vsel %vm2326, %v4011, 0
      %v4066 = vsel %vm2326, %v4013, 0
      %v4069 = vsel %vm2381, %v337, 0
      %4071 = vmatprep.subr.bf16.mxu0 0
      %4072 = vmatpush1.bf16.msra.mxu0 %v4069
      %4073 = vmatprep.subr.bf16.mxu0 0
      %4074 = vmatpush1.bf16.msra.mxu0 0
      %4075 = vmatprep.subr.bf16.mxu0 0
      %4076 = vmatpush1.bf16.msra.mxu0 0
      %4077 = vmatprep.subr.bf16.mxu0 0
      %4078 = vmatpush1.bf16.msra.mxu0 0
      %4079 = vmatprep.subr.bf16.mxu0 0
      %4080 = vmatpush1.bf16.msra.mxu0 0
      %4081 = vmatprep.subr.bf16.mxu0 0
      %4082 = vmatpush1.bf16.msra.mxu0 0
      %4083 = vmatprep.subr.bf16.mxu0 0
      %4084 = vmatpush1.bf16.msra.mxu0 0
      %4085 = vmatprep.subr.bf16.mxu0 0
      %4086 = vmatpush1.bf16.msra.mxu0 0
      %4087 = vmatprep.subr.bf16.mxu0 0
      %4088 = vmatpush1.bf16.msra.mxu0 0
      %4089 = vmatprep.subr.bf16.mxu0 0
      %4090 = vmatpush1.bf16.msra.mxu0 0
      %4091 = vmatprep.subr.bf16.mxu0 0
      %4092 = vmatpush1.bf16.msra.mxu0 0
      %4093 = vmatprep.subr.bf16.mxu0 0
      %4094 = vmatpush1.bf16.msra.mxu0 0
      %4095 = vmatprep.subr.bf16.mxu0 0
      %4096 = vmatpush1.bf16.msra.mxu0 0
      %4097 = vmatprep.subr.bf16.mxu0 0
      %4098 = vmatpush1.bf16.msra.mxu0 0
      %4099 = vmatprep.subr.bf16.mxu0 0
      %4100 = vmatpush1.bf16.msra.mxu0 0
      %4101 = vmatprep.subr.bf16.mxu0 0
      %4102 = vmatpush1.bf16.msra.mxu0 0
      %4103 = vmatprep.mubr.bf16.mxu0 0
      %4104 = vmatmul.mubr.bf16.gmra.mrb[0].mxu0 %v4015
      %v4105 = vpop.f32.mrb[0].mxu0
      %v4106 = vadd.f32 0.0, %v4105
      %v4107 = vpop.f32.mrb[0].mxu0
      %v4108 = vpop.f32.mrb[0].mxu0
      %v4109 = vadd.f32 0.0, %v4108
      %v4110 = vpop.f32.mrb[0].mxu0
      %4111 = vmatprep.mubr.bf16.mxu0 0
      %4112 = vmatmul.mubr.bf16.gmra.mrb[0].mxu0 %v4018
      %v4113 = vpop.f32.mrb[0].mxu0
      %v4114 = vadd.f32 0.0, %v4113
      %v4115 = vpop.f32.mrb[0].mxu0
      %v4116 = vpop.f32.mrb[0].mxu0
      %v4117 = vadd.f32 0.0, %v4116
      %v4118 = vpop.f32.mrb[0].mxu0
      %4119 = vmatprep.mubr.bf16.mxu0 0
      %4120 = vmatmul.mubr.bf16.gmra.mrb[0].mxu0 %v4021
      %v4121 = vpop.f32.mrb[0].mxu0
      %v4122 = vadd.f32 0.0, %v4121
      %v4123 = vpop.f32.mrb[0].mxu0
      %v4124 = vpop.f32.mrb[0].mxu0
      %v4125 = vadd.f32 0.0, %v4124
      %v4126 = vpop.f32.mrb[0].mxu0
      %4127 = vmatprep.mubr.bf16.mxu0 0
      %4128 = vmatmul.mubr.bf16.gmra.mrb[0].mxu0 %v4024
      %v4129 = vpop.f32.mrb[0].mxu0
      %v4130 = vadd.f32 0.0, %v4129
      %v4131 = vpop.f32.mrb[0].mxu0
      %v4132 = vpop.f32.mrb[0].mxu0
      %v4133 = vadd.f32 0.0, %v4132
      %v4134 = vpop.f32.mrb[0].mxu0
      %4135 = vmatprep.mubr.bf16.mxu0 0
      %4136 = vmatmul.mubr.bf16.gmra.mrb[0].mxu0 %v4027
      %v4137 = vpop.f32.mrb[0].mxu0
      %v4138 = vadd.f32 0.0, %v4137
      %v4139 = vpop.f32.mrb[0].mxu0
      %v4140 = vpop.f32.mrb[0].mxu0
      %v4141 = vadd.f32 0.0, %v4140
      %v4142 = vpop.f32.mrb[0].mxu0
      %4143 = vmatprep.mubr.bf16.mxu0 0
      %4144 = vmatmul.mubr.bf16.gmra.mrb[0].mxu0 %v4030
      %v4145 = vpop.f32.mrb[0].mxu0
      %v4146 = vadd.f32 0.0, %v4145
      %v4147 = vpop.f32.mrb[0].mxu0
      %v4148 = vpop.f32.mrb[0].mxu0
      %v4149 = vadd.f32 0.0, %v4148
      %v4150 = vpop.f32.mrb[0].mxu0
      %4151 = vmatprep.mubr.bf16.mxu0 0
      %4152 = vmatmul.mubr.bf16.gmra.mrb[0].mxu0 %v4033
      %v4153 = vpop.f32.mrb[0].mxu0
      %v4154 = vadd.f32 0.0, %v4153
      %v4155 = vpop.f32.mrb[0].mxu0
      %v4156 = vpop.f32.mrb[0].mxu0
      %v4157 = vadd.f32 0.0, %v4156
      %v4158 = vpop.f32.mrb[0].mxu0
      %4159 = vmatprep.mubr.bf16.mxu0 0
      %4160 = vmatmul.mubr.bf16.gmra.mrb[0].mxu0 %v4036
      %v4161 = vpop.f32.mrb[0].mxu0
      %v4162 = vadd.f32 0.0, %v4161
      %v4163 = vpop.f32.mrb[0].mxu0
      %v4164 = vpop.f32.mrb[0].mxu0
      %v4165 = vadd.f32 0.0, %v4164
      %v4166 = vpop.f32.mrb[0].mxu0
      %4167 = vmatprep.mubr.bf16.mxu0 0
      %4168 = vmatmul.mubr.bf16.gmra.mrb[0].mxu0 %v4039
      %v4169 = vpop.f32.mrb[0].mxu0
      %v4170 = vadd.f32 0.0, %v4169
      %v4171 = vpop.f32.mrb[0].mxu0
      %v4172 = vpop.f32.mrb[0].mxu0
      %v4173 = vadd.f32 0.0, %v4172
      %v4174 = vpop.f32.mrb[0].mxu0
      %4175 = vmatprep.mubr.bf16.mxu0 0
      %4176 = vmatmul.mubr.bf16.gmra.mrb[0].mxu0 %v4042
      %v4177 = vpop.f32.mrb[0].mxu0
      %v4178 = vadd.f32 0.0, %v4177
      %v4179 = vpop.f32.mrb[0].mxu0
      %v4180 = vpop.f32.mrb[0].mxu0
      %v4181 = vadd.f32 0.0, %v4180
      %v4182 = vpop.f32.mrb[0].mxu0
      %4183 = vmatprep.mubr.bf16.mxu0 0
      %4184 = vmatmul.mubr.bf16.gmra.mrb[0].mxu0 %v4045
      %v4185 = vpop.f32.mrb[0].mxu0
      %v4186 = vadd.f32 0.0, %v4185
      %v4187 = vpop.f32.mrb[0].mxu0
      %v4188 = vpop.f32.mrb[0].mxu0
      %v4189 = vadd.f32 0.0, %v4188
      %v4190 = vpop.f32.mrb[0].mxu0
      %4191 = vmatprep.mubr.bf16.mxu0 0
      %4192 = vmatmul.mubr.bf16.gmra.mrb[0].mxu0 %v4048
      %v4193 = vpop.f32.mrb[0].mxu0
      %v4194 = vadd.f32 0.0, %v4193
      %v4195 = vpop.f32.mrb[0].mxu0
      %v4196 = vpop.f32.mrb[0].mxu0
      %v4197 = vadd.f32 0.0, %v4196
      %v4198 = vpop.f32.mrb[0].mxu0
      %4199 = vmatprep.mubr.bf16.mxu0 0
      %4200 = vmatmul.mubr.bf16.gmra.mrb[0].mxu0 %v4051
      %v4201 = vpop.f32.mrb[0].mxu0
      %v4202 = vadd.f32 0.0, %v4201
      %v4203 = vpop.f32.mrb[0].mxu0
      %v4204 = vpop.f32.mrb[0].mxu0
      %v4205 = vadd.f32 0.0, %v4204
      %v4206 = vpop.f32.mrb[0].mxu0
      %4207 = vmatprep.mubr.bf16.mxu0 0
      %4208 = vmatmul.mubr.bf16.gmra.mrb[0].mxu0 %v4054
      %v4209 = vpop.f32.mrb[0].mxu0
      %v4210 = vadd.f32 0.0, %v4209
      %v4211 = vpop.f32.mrb[0].mxu0
      %v4212 = vpop.f32.mrb[0].mxu0
      %v4213 = vadd.f32 0.0, %v4212
      %v4214 = vpop.f32.mrb[0].mxu0
      %4215 = vmatprep.mubr.bf16.mxu0 0
      %4216 = vmatmul.mubr.bf16.gmra.mrb[0].mxu0 %v4057
      %v4217 = vpop.f32.mrb[0].mxu0
      %v4218 = vadd.f32 0.0, %v4217
      %v4219 = vpop.f32.mrb[0].mxu0
      %v4220 = vpop.f32.mrb[0].mxu0
      %v4221 = vadd.f32 0.0, %v4220
      %v4222 = vpop.f32.mrb[0].mxu0
      %4223 = vmatprep.mubr.bf16.mxu0 0
      %4224 = vmatmul.mubr.bf16.gmra.mrb[0].mxu0 %v4060
      %v4225 = vpop.f32.mrb[0].mxu0
      %v4226 = vadd.f32 0.0, %v4225
      %v4227 = vpop.f32.mrb[0].mxu0
      %v4228 = vpop.f32.mrb[0].mxu0
      %v4229 = vadd.f32 0.0, %v4228
      %v4230 = vpop.f32.mrb[0].mxu0
      %4231 = vmatprep.mubr.bf16.mxu0 0
      %4232 = vmatmul.mubr.bf16.gmra.mrb[0].mxu0 %v4063
      %v4233 = vpop.f32.mrb[0].mxu0
      %v4234 = vadd.f32 0.0, %v4233
      %v4235 = vpop.f32.mrb[0].mxu0
      %v4236 = vpop.f32.mrb[0].mxu0
      %v4237 = vadd.f32 0.0, %v4236
      %v4238 = vpop.f32.mrb[0].mxu0
      %4239 = vmatprep.mubr.bf16.mxu0 0
      %4240 = vmatmul.mubr.bf16.gmra.mrb[0].mxu0 %v4066
      %v4241 = vpop.f32.mrb[0].mxu0
      %v4242 = vadd.f32 0.0, %v4241
      %v4243 = vpop.f32.mrb[0].mxu0
      %v4244 = vpop.f32.mrb[0].mxu0
      %v4245 = vadd.f32 0.0, %v4244
      %v4246 = vpop.f32.mrb[0].mxu0
      %4247 = vdwg.mxu0
      %v4248 = vadd.f32 %v3936, %v4106
      %v4249 = vadd.f32 %v3937, %v4109
      %v4250 = vadd.f32 %v3938, %v4114
      %v4251 = vadd.f32 %v3939, %v4117
      %v4252 = vadd.f32 %v3940, %v4122
      %v4253 = vadd.f32 %v3941, %v4125
      %v4254 = vadd.f32 %v3942, %v4130
      %v4255 = vadd.f32 %v3943, %v4133
      %v4256 = vadd.f32 %v3944, %v4138
      %v4257 = vadd.f32 %v3945, %v4141
      %v4258 = vadd.f32 %v3946, %v4146
      %v4259 = vadd.f32 %v3947, %v4149
      %v4260 = vadd.f32 %v3948, %v4154
      %v4261 = vadd.f32 %v3949, %v4157
      %v4262 = vadd.f32 %v3950, %v4162
      %v4263 = vadd.f32 %v3951, %v4165
      %v4264 = vadd.f32 %v3952, %v4170
      %v4265 = vadd.f32 %v3953, %v4173
      %v4266 = vadd.f32 %v3954, %v4178
      %v4267 = vadd.f32 %v3955, %v4181
      %v4268 = vadd.f32 %v3956, %v4186
      %v4269 = vadd.f32 %v3957, %v4189
      %v4270 = vadd.f32 %v3958, %v4194
      %v4271 = vadd.f32 %v3959, %v4197
      %v4272 = vadd.f32 %v3960, %v4202
      %v4273 = vadd.f32 %v3961, %v4205
      %v4274 = vadd.f32 %v3962, %v4210
      %v4275 = vadd.f32 %v3963, %v4213
      %v4276 = vadd.f32 %v3964, %v4218
      %v4277 = vadd.f32 %v3965, %v4221
      %v4278 = vadd.f32 %v3966, %v4226
      %v4279 = vadd.f32 %v3967, %v4229
      %v4280 = vadd.f32 %v3968, %v4234
      %v4281 = vadd.f32 %v3969, %v4237
      %v4282 = vadd.f32 %v3970, %v4242
      %v4283 = vadd.f32 %v3971, %v4245
      %v4284 = vld [vmem:[#allocation2 + $0x10] sm:$0xc]
      %v4285 = vld [vmem:[#allocation2 + $0x14] sm:$0xf]
      %v4286 = vld [vmem:[#allocation2 + $0x18] sm:$0xf]
      %v4287 = vld [vmem:[#allocation2 + $0x1c] sm:$0xf]
      %v4288 = vld [vmem:[#allocation2 + $0x20] sm:$0xf]
      %v4289 = vld [vmem:[#allocation2 + $0x24] sm:$0xf]
      %v4290 = vld [vmem:[#allocation2 + $0x28] sm:$0xf]
      %v4291 = vld [vmem:[#allocation2 + $0x2c] sm:$0xf]
      %v4292 = vld [vmem:[#allocation2 + $0x30] sm:$0xf]
      %v4293 = vld [vmem:[#allocation2 + $0x34] sm:$0xf]
      %v4294 = vld [vmem:[#allocation2 + $0x38] sm:$0xf]
      %v4295 = vld [vmem:[#allocation2 + $0x3c] sm:$0xf]
      %v4296 = vld [vmem:[#allocation2 + $0x40] sm:$0xf]
      %v4297 = vld [vmem:[#allocation2 + $0x44] sm:$0xf]
      %v4298 = vld [vmem:[#allocation2 + $0x48] sm:$0xf]
      %v4299 = vld [vmem:[#allocation2 + $0x4c] sm:$0xf]
      %v4300 = vld [vmem:[#allocation2 + $0x50] sm:$0xf]
      %v4301 = vld [vmem:[#allocation2 + $0x54] sm:$0xf]
      %v4302 = vld [vmem:[#allocation2 + $0x58] sm:$0xf]
      %v4303 = vld [vmem:[#allocation2 + $0x5c] sm:$0xf]
      %v4304 = vld [vmem:[#allocation2 + $0x60] sm:$0xf]
      %v4305 = vld [vmem:[#allocation2 + $0x64] sm:$0xf]
      %v4306 = vld [vmem:[#allocation2 + $0x68] sm:$0xf]
      %v4307 = vld [vmem:[#allocation2 + $0x6c] sm:$0xf]
      %v4308 = vld [vmem:[#allocation2 + $0x70] sm:$0xf]
      %v4309 = vld [vmem:[#allocation2 + $0x74] sm:$0xf]
      %v4310 = vld [vmem:[#allocation2 + $0x78] sm:$0xf]
      %v4311 = vld [vmem:[#allocation2 + $0x7c] sm:$0xf]
      %v4312 = vld [vmem:[#allocation2 + $0x80] sm:$0xf]
      %v4313 = vld [vmem:[#allocation2 + $0x84] sm:$0xf]
      %v4314 = vld [vmem:[#allocation2 + $0x88] sm:$0xf]
      %v4315 = vld [vmem:[#allocation2 + $0x8c] sm:$0xf]
      %v4316 = vld [vmem:[#allocation2 + $0x90] sm:$0xf]
      %v4317 = vld [vmem:[#allocation2 + $0x94] sm:$0xf]
      %v4318 = vld [vmem:[#allocation2 + $0x98] sm:$0xf]
      %v4319 = vld [vmem:[#allocation2 + $0x9c] sm:$0xf]
      %v4320 = vld [vmem:[#allocation2 + $0xa0] sm:$0x3]
      %v4358 = vunpack.c.l.b16 %v4284
      %v4359 = vunpack.c.l.b16 %v4285
      %v4360 = vunpack.c.l.b16 %v4286
      %v4361 = vunpack.c.l.b16 %v4287
      %v4362 = vunpack.c.l.b16 %v4288
      %v4363 = vunpack.c.l.b16 %v4289
      %v4364 = vunpack.c.l.b16 %v4290
      %v4365 = vunpack.c.l.b16 %v4291
      %v4366 = vunpack.c.l.b16 %v4292
      %v4367 = vunpack.c.l.b16 %v4293
      %v4368 = vunpack.c.l.b16 %v4294
      %v4369 = vunpack.c.l.b16 %v4295
      %v4370 = vunpack.c.l.b16 %v4296
      %v4371 = vunpack.c.l.b16 %v4297
      %v4372 = vunpack.c.l.b16 %v4298
      %v4373 = vunpack.c.l.b16 %v4299
      %v4374 = vunpack.c.l.b16 %v4300
      %v4375 = vunpack.c.l.b16 %v4301
      %v4376 = vunpack.c.l.b16 %v4302
      %v4377 = vunpack.c.l.b16 %v4303
      %v4378 = vunpack.c.l.b16 %v4304
      %v4379 = vunpack.c.l.b16 %v4305
      %v4380 = vunpack.c.l.b16 %v4306
      %v4381 = vunpack.c.l.b16 %v4307
      %v4382 = vunpack.c.l.b16 %v4308
      %v4383 = vunpack.c.l.b16 %v4309
      %v4384 = vunpack.c.l.b16 %v4310
      %v4385 = vunpack.c.l.b16 %v4311
      %v4386 = vunpack.c.l.b16 %v4312
      %v4387 = vunpack.c.l.b16 %v4313
      %v4388 = vunpack.c.l.b16 %v4314
      %v4389 = vunpack.c.l.b16 %v4315
      %v4390 = vunpack.c.l.b16 %v4316
      %v4391 = vunpack.c.l.b16 %v4317
      %v4392 = vunpack.c.l.b16 %v4318
      %v4393 = vunpack.c.l.b16 %v4319
      %v4394 = vunpack.c.l.b16 %v4320
      %v4395 = vpack.c.b16 %v4359, %v4358
      %v4396 = vpack.c.b16 %v4361, %v4360
      %v4397 = vpack.c.b16 %v4363, %v4362
      %v4398 = vpack.c.b16 %v4365, %v4364
      %v4399 = vpack.c.b16 %v4367, %v4366
      %v4400 = vpack.c.b16 %v4369, %v4368
      %v4401 = vpack.c.b16 %v4371, %v4370
      %v4402 = vpack.c.b16 %v4373, %v4372
      %v4403 = vpack.c.b16 %v4375, %v4374
      %v4404 = vpack.c.b16 %v4377, %v4376
      %v4405 = vpack.c.b16 %v4379, %v4378
      %v4406 = vpack.c.b16 %v4381, %v4380
      %v4407 = vpack.c.b16 %v4383, %v4382
      %v4408 = vpack.c.b16 %v4385, %v4384
      %v4409 = vpack.c.b16 %v4387, %v4386
      %v4410 = vpack.c.b16 %v4389, %v4388
      %v4411 = vpack.c.b16 %v4391, %v4390
      %v4412 = vpack.c.b16 %v4393, %v4392
      %v4413 = vpack.c.b16 %v4394, %v4394
      %v4414 = vrot.slane %v4395, 2
      %v4415 = vrot.slane %v4396, 2
      %v4416 = vsel %vm3976, %v4414, %v4415
      %v4417 = vrot.slane %v4397, 2
      %v4418 = vsel %vm3976, %v4415, %v4417
      %v4419 = vrot.slane %v4398, 2
      %v4420 = vsel %vm3976, %v4417, %v4419
      %v4421 = vrot.slane %v4399, 2
      %v4422 = vsel %vm3976, %v4419, %v4421
      %v4423 = vrot.slane %v4400, 2
      %v4424 = vsel %vm3976, %v4421, %v4423
      %v4425 = vrot.slane %v4401, 2
      %v4426 = vsel %vm3976, %v4423, %v4425
      %v4427 = vrot.slane %v4402, 2
      %v4428 = vsel %vm3976, %v4425, %v4427
      %v4429 = vrot.slane %v4403, 2
      %v4430 = vsel %vm3976, %v4427, %v4429
      %v4431 = vrot.slane %v4404, 2
      %v4432 = vsel %vm3976, %v4429, %v4431
      %v4433 = vrot.slane %v4405, 2
      %v4434 = vsel %vm3976, %v4431, %v4433
      %v4435 = vrot.slane %v4406, 2
      %v4436 = vsel %vm3976, %v4433, %v4435
      %v4437 = vrot.slane %v4407, 2
      %v4438 = vsel %vm3976, %v4435, %v4437
      %v4439 = vrot.slane %v4408, 2
      %v4440 = vsel %vm3976, %v4437, %v4439
      %v4441 = vrot.slane %v4409, 2
      %v4442 = vsel %vm3976, %v4439, %v4441
      %v4443 = vrot.slane %v4410, 2
      %v4444 = vsel %vm3976, %v4441, %v4443
      %v4445 = vrot.slane %v4411, 2
      %v4446 = vsel %vm3976, %v4443, %v4445
      %v4447 = vrot.slane %v4412, 2
      %v4448 = vsel %vm3976, %v4445, %v4447
      %v4449 = vrot.slane %v4413, 2
      %v4450 = vsel %vm3976, %v4447, %v4449
      %v4452 = vsel %vm2326, %v4416, 0
      %v4455 = vsel %vm2326, %v4418, 0
      %v4458 = vsel %vm2326, %v4420, 0
      %v4461 = vsel %vm2326, %v4422, 0
      %v4464 = vsel %vm2326, %v4424, 0
      %v4467 = vsel %vm2326, %v4426, 0
      %v4470 = vsel %vm2326, %v4428, 0
      %v4473 = vsel %vm2326, %v4430, 0
      %v4476 = vsel %vm2326, %v4432, 0
      %v4479 = vsel %vm2326, %v4434, 0
      %v4482 = vsel %vm2326, %v4436, 0
      %v4485 = vsel %vm2326, %v4438, 0
      %v4488 = vsel %vm2326, %v4440, 0
      %v4491 = vsel %vm2326, %v4442, 0
      %v4494 = vsel %vm2326, %v4444, 0
      %v4497 = vsel %vm2326, %v4446, 0
      %v4500 = vsel %vm2326, %v4448, 0
      %v4503 = vsel %vm2326, %v4450, 0
      %v4506 = vsel %vm2381, %v338, 0
      %4508 = vmatprep.subr.bf16.mxu0 0
      %4509 = vmatpush1.bf16.msra.mxu0 %v4506
      %4510 = vmatprep.subr.bf16.mxu0 0
      %4511 = vmatpush1.bf16.msra.mxu0 0
      %4512 = vmatprep.subr.bf16.mxu0 0
      %4513 = vmatpush1.bf16.msra.mxu0 0
      %4514 = vmatprep.subr.bf16.mxu0 0
      %4515 = vmatpush1.bf16.msra.mxu0 0
      %4516 = vmatprep.subr.bf16.mxu0 0
      %4517 = vmatpush1.bf16.msra.mxu0 0
      %4518 = vmatprep.subr.bf16.mxu0 0
      %4519 = vmatpush1.bf16.msra.mxu0 0
      %4520 = vmatprep.subr.bf16.mxu0 0
      %4521 = vmatpush1.bf16.msra.mxu0 0
      %4522 = vmatprep.subr.bf16.mxu0 0
      %4523 = vmatpush1.bf16.msra.mxu0 0
      %4524 = vmatprep.subr.bf16.mxu0 0
      %4525 = vmatpush1.bf16.msra.mxu0 0
      %4526 = vmatprep.subr.bf16.mxu0 0
      %4527 = vmatpush1.bf16.msra.mxu0 0
      %4528 = vmatprep.subr.bf16.mxu0 0
      %4529 = vmatpush1.bf16.msra.mxu0 0
      %4530 = vmatprep.subr.bf16.mxu0 0
      %4531 = vmatpush1.bf16.msra.mxu0 0
      %4532 = vmatprep.subr.bf16.mxu0 0
      %4533 = vmatpush1.bf16.msra.mxu0 0
      %4534 = vmatprep.subr.bf16.mxu0 0
      %4535 = vmatpush1.bf16.msra.mxu0 0
      %4536 = vmatprep.subr.bf16.mxu0 0
      %4537 = vmatpush1.bf16.msra.mxu0 0
      %4538 = vmatprep.subr.bf16.mxu0 0
      %4539 = vmatpush1.bf16.msra.mxu0 0
      %4540 = vmatprep.mubr.bf16.mxu0 0
      %4541 = vmatmul.mubr.bf16.gmra.mrb[0].mxu0 %v4452
      %v4542 = vpop.f32.mrb[0].mxu0
      %v4543 = vadd.f32 0.0, %v4542
      %v4544 = vpop.f32.mrb[0].mxu0
      %v4545 = vpop.f32.mrb[0].mxu0
      %v4546 = vadd.f32 0.0, %v4545
      %v4547 = vpop.f32.mrb[0].mxu0
      %4548 = vmatprep.mubr.bf16.mxu0 0
      %4549 = vmatmul.mubr.bf16.gmra.mrb[0].mxu0 %v4455
      %v4550 = vpop.f32.mrb[0].mxu0
      %v4551 = vadd.f32 0.0, %v4550
      %v4552 = vpop.f32.mrb[0].mxu0
      %v4553 = vpop.f32.mrb[0].mxu0
      %v4554 = vadd.f32 0.0, %v4553
      %v4555 = vpop.f32.mrb[0].mxu0
      %4556 = vmatprep.mubr.bf16.mxu0 0
      %4557 = vmatmul.mubr.bf16.gmra.mrb[0].mxu0 %v4458
      %v4558 = vpop.f32.mrb[0].mxu0
      %v4559 = vadd.f32 0.0, %v4558
      %v4560 = vpop.f32.mrb[0].mxu0
      %v4561 = vpop.f32.mrb[0].mxu0
      %v4562 = vadd.f32 0.0, %v4561
      %v4563 = vpop.f32.mrb[0].mxu0
      %4564 = vmatprep.mubr.bf16.mxu0 0
      %4565 = vmatmul.mubr.bf16.gmra.mrb[0].mxu0 %v4461
      %v4566 = vpop.f32.mrb[0].mxu0
      %v4567 = vadd.f32 0.0, %v4566
      %v4568 = vpop.f32.mrb[0].mxu0
      %v4569 = vpop.f32.mrb[0].mxu0
      %v4570 = vadd.f32 0.0, %v4569
      %v4571 = vpop.f32.mrb[0].mxu0
      %4572 = vmatprep.mubr.bf16.mxu0 0
      %4573 = vmatmul.mubr.bf16.gmra.mrb[0].mxu0 %v4464
      %v4574 = vpop.f32.mrb[0].mxu0
      %v4575 = vadd.f32 0.0, %v4574
      %v4576 = vpop.f32.mrb[0].mxu0
      %v4577 = vpop.f32.mrb[0].mxu0
      %v4578 = vadd.f32 0.0, %v4577
      %v4579 = vpop.f32.mrb[0].mxu0
      %4580 = vmatprep.mubr.bf16.mxu0 0
      %4581 = vmatmul.mubr.bf16.gmra.mrb[0].mxu0 %v4467
      %v4582 = vpop.f32.mrb[0].mxu0
      %v4583 = vadd.f32 0.0, %v4582
      %v4584 = vpop.f32.mrb[0].mxu0
      %v4585 = vpop.f32.mrb[0].mxu0
      %v4586 = vadd.f32 0.0, %v4585
      %v4587 = vpop.f32.mrb[0].mxu0
      %4588 = vmatprep.mubr.bf16.mxu0 0
      %4589 = vmatmul.mubr.bf16.gmra.mrb[0].mxu0 %v4470
      %v4590 = vpop.f32.mrb[0].mxu0
      %v4591 = vadd.f32 0.0, %v4590
      %v4592 = vpop.f32.mrb[0].mxu0
      %v4593 = vpop.f32.mrb[0].mxu0
      %v4594 = vadd.f32 0.0, %v4593
      %v4595 = vpop.f32.mrb[0].mxu0
      %4596 = vmatprep.mubr.bf16.mxu0 0
      %4597 = vmatmul.mubr.bf16.gmra.mrb[0].mxu0 %v4473
      %v4598 = vpop.f32.mrb[0].mxu0
      %v4599 = vadd.f32 0.0, %v4598
      %v4600 = vpop.f32.mrb[0].mxu0
      %v4601 = vpop.f32.mrb[0].mxu0
      %v4602 = vadd.f32 0.0, %v4601
      %v4603 = vpop.f32.mrb[0].mxu0
      %4604 = vmatprep.mubr.bf16.mxu0 0
      %4605 = vmatmul.mubr.bf16.gmra.mrb[0].mxu0 %v4476
      %v4606 = vpop.f32.mrb[0].mxu0
      %v4607 = vadd.f32 0.0, %v4606
      %v4608 = vpop.f32.mrb[0].mxu0
      %v4609 = vpop.f32.mrb[0].mxu0
      %v4610 = vadd.f32 0.0, %v4609
      %v4611 = vpop.f32.mrb[0].mxu0
      %4612 = vmatprep.mubr.bf16.mxu0 0
      %4613 = vmatmul.mubr.bf16.gmra.mrb[0].mxu0 %v4479
      %v4614 = vpop.f32.mrb[0].mxu0
      %v4615 = vadd.f32 0.0, %v4614
      %v4616 = vpop.f32.mrb[0].mxu0
      %v4617 = vpop.f32.mrb[0].mxu0
      %v4618 = vadd.f32 0.0, %v4617
      %v4619 = vpop.f32.mrb[0].mxu0
      %4620 = vmatprep.mubr.bf16.mxu0 0
      %4621 = vmatmul.mubr.bf16.gmra.mrb[0].mxu0 %v4482
      %v4622 = vpop.f32.mrb[0].mxu0
      %v4623 = vadd.f32 0.0, %v4622
      %v4624 = vpop.f32.mrb[0].mxu0
      %v4625 = vpop.f32.mrb[0].mxu0
      %v4626 = vadd.f32 0.0, %v4625
      %v4627 = vpop.f32.mrb[0].mxu0
      %4628 = vmatprep.mubr.bf16.mxu0 0
      %4629 = vmatmul.mubr.bf16.gmra.mrb[0].mxu0 %v4485
      %v4630 = vpop.f32.mrb[0].mxu0
      %v4631 = vadd.f32 0.0, %v4630
      %v4632 = vpop.f32.mrb[0].mxu0
      %v4633 = vpop.f32.mrb[0].mxu0
      %v4634 = vadd.f32 0.0, %v4633
      %v4635 = vpop.f32.mrb[0].mxu0
      %4636 = vmatprep.mubr.bf16.mxu0 0
      %4637 = vmatmul.mubr.bf16.gmra.mrb[0].mxu0 %v4488
      %v4638 = vpop.f32.mrb[0].mxu0
      %v4639 = vadd.f32 0.0, %v4638
      %v4640 = vpop.f32.mrb[0].mxu0
      %v4641 = vpop.f32.mrb[0].mxu0
      %v4642 = vadd.f32 0.0, %v4641
      %v4643 = vpop.f32.mrb[0].mxu0
      %4644 = vmatprep.mubr.bf16.mxu0 0
      %4645 = vmatmul.mubr.bf16.gmra.mrb[0].mxu0 %v4491
      %v4646 = vpop.f32.mrb[0].mxu0
      %v4647 = vadd.f32 0.0, %v4646
      %v4648 = vpop.f32.mrb[0].mxu0
      %v4649 = vpop.f32.mrb[0].mxu0
      %v4650 = vadd.f32 0.0, %v4649
      %v4651 = vpop.f32.mrb[0].mxu0
      %4652 = vmatprep.mubr.bf16.mxu0 0
      %4653 = vmatmul.mubr.bf16.gmra.mrb[0].mxu0 %v4494
      %v4654 = vpop.f32.mrb[0].mxu0
      %v4655 = vadd.f32 0.0, %v4654
      %v4656 = vpop.f32.mrb[0].mxu0
      %v4657 = vpop.f32.mrb[0].mxu0
      %v4658 = vadd.f32 0.0, %v4657
      %v4659 = vpop.f32.mrb[0].mxu0
      %4660 = vmatprep.mubr.bf16.mxu0 0
      %4661 = vmatmul.mubr.bf16.gmra.mrb[0].mxu0 %v4497
      %v4662 = vpop.f32.mrb[0].mxu0
      %v4663 = vadd.f32 0.0, %v4662
      %v4664 = vpop.f32.mrb[0].mxu0
      %v4665 = vpop.f32.mrb[0].mxu0
      %v4666 = vadd.f32 0.0, %v4665
      %v4667 = vpop.f32.mrb[0].mxu0
      %4668 = vmatprep.mubr.bf16.mxu0 0
      %4669 = vmatmul.mubr.bf16.gmra.mrb[0].mxu0 %v4500
      %v4670 = vpop.f32.mrb[0].mxu0
      %v4671 = vadd.f32 0.0, %v4670
      %v4672 = vpop.f32.mrb[0].mxu0
      %v4673 = vpop.f32.mrb[0].mxu0
      %v4674 = vadd.f32 0.0, %v4673
      %v4675 = vpop.f32.mrb[0].mxu0
      %4676 = vmatprep.mubr.bf16.mxu0 0
      %4677 = vmatmul.mubr.bf16.gmra.mrb[0].mxu0 %v4503
      %v4678 = vpop.f32.mrb[0].mxu0
      %v4679 = vadd.f32 0.0, %v4678
      %v4680 = vpop.f32.mrb[0].mxu0
      %v4681 = vpop.f32.mrb[0].mxu0
      %v4682 = vadd.f32 0.0, %v4681
      %v4683 = vpop.f32.mrb[0].mxu0
      %4684 = vdwg.mxu0
      %v4685 = vadd.f32 %v4248, %v4543
      %v4686 = vadd.f32 %v4249, %v4546
      %v4687 = vadd.f32 %v4250, %v4551
      %v4688 = vadd.f32 %v4251, %v4554
      %v4689 = vadd.f32 %v4252, %v4559
      %v4690 = vadd.f32 %v4253, %v4562
      %v4691 = vadd.f32 %v4254, %v4567
      %v4692 = vadd.f32 %v4255, %v4570
      %v4693 = vadd.f32 %v4256, %v4575
      %v4694 = vadd.f32 %v4257, %v4578
      %v4695 = vadd.f32 %v4258, %v4583
      %v4696 = vadd.f32 %v4259, %v4586
      %v4697 = vadd.f32 %v4260, %v4591
      %v4698 = vadd.f32 %v4261, %v4594
      %v4699 = vadd.f32 %v4262, %v4599
      %v4700 = vadd.f32 %v4263, %v4602
      %v4701 = vadd.f32 %v4264, %v4607
      %v4702 = vadd.f32 %v4265, %v4610
      %v4703 = vadd.f32 %v4266, %v4615
      %v4704 = vadd.f32 %v4267, %v4618
      %v4705 = vadd.f32 %v4268, %v4623
      %v4706 = vadd.f32 %v4269, %v4626
      %v4707 = vadd.f32 %v4270, %v4631
      %v4708 = vadd.f32 %v4271, %v4634
      %v4709 = vadd.f32 %v4272, %v4639
      %v4710 = vadd.f32 %v4273, %v4642
      %v4711 = vadd.f32 %v4274, %v4647
      %v4712 = vadd.f32 %v4275, %v4650
      %v4713 = vadd.f32 %v4276, %v4655
      %v4714 = vadd.f32 %v4277, %v4658
      %v4715 = vadd.f32 %v4278, %v4663
      %v4716 = vadd.f32 %v4279, %v4666
      %v4717 = vadd.f32 %v4280, %v4671
      %v4718 = vadd.f32 %v4281, %v4674
      %v4719 = vadd.f32 %v4282, %v4679
      %v4720 = vadd.f32 %v4283, %v4682
      %v4721 = vld [vmem:[#allocation2 + $0xa0] sm:$0x7]
      %v4723 = vunpack.c.l.b16 %v4721
      %v4724 = vpack.c.b16 %v4723, %v4723
      %vm4725 = vsmask.f32 5376
      %v4727 = vshrl.u32 %v4395, 16
      %v4729 = vrot.slane %v4727, 2
      %v4730 = vshll.u32 %v4395, 16
      %v4732 = vrot.slane %v4730, 3
      %v4733 = vor.u32 %v4729, %v4732
      %v4735 = vshrl.u32 %v4396, 16
      %v4737 = vrot.slane %v4735, 2
      %v4738 = vshll.u32 %v4396, 16
      %v4740 = vrot.slane %v4738, 3
      %v4741 = vor.u32 %v4737, %v4740
      %v4742 = vsel %vm4725, %v4733, %v4741
      %v4744 = vshrl.u32 %v4397, 16
      %v4746 = vrot.slane %v4744, 2
      %v4747 = vshll.u32 %v4397, 16
      %v4749 = vrot.slane %v4747, 3
      %v4750 = vor.u32 %v4746, %v4749
      %v4751 = vsel %vm4725, %v4741, %v4750
      %v4753 = vshrl.u32 %v4398, 16
      %v4755 = vrot.slane %v4753, 2
      %v4756 = vshll.u32 %v4398, 16
      %v4758 = vrot.slane %v4756, 3
      %v4759 = vor.u32 %v4755, %v4758
      %v4760 = vsel %vm4725, %v4750, %v4759
      %v4762 = vshrl.u32 %v4399, 16
      %v4764 = vrot.slane %v4762, 2
      %v4765 = vshll.u32 %v4399, 16
      %v4767 = vrot.slane %v4765, 3
      %v4768 = vor.u32 %v4764, %v4767
      %v4769 = vsel %vm4725, %v4759, %v4768
      %v4771 = vshrl.u32 %v4400, 16
      %v4773 = vrot.slane %v4771, 2
      %v4774 = vshll.u32 %v4400, 16
      %v4776 = vrot.slane %v4774, 3
      %v4777 = vor.u32 %v4773, %v4776
      %v4778 = vsel %vm4725, %v4768, %v4777
      %v4780 = vshrl.u32 %v4401, 16
      %v4782 = vrot.slane %v4780, 2
      %v4783 = vshll.u32 %v4401, 16
      %v4785 = vrot.slane %v4783, 3
      %v4786 = vor.u32 %v4782, %v4785
      %v4787 = vsel %vm4725, %v4777, %v4786
      %v4789 = vshrl.u32 %v4402, 16
      %v4791 = vrot.slane %v4789, 2
      %v4792 = vshll.u32 %v4402, 16
      %v4794 = vrot.slane %v4792, 3
      %v4795 = vor.u32 %v4791, %v4794
      %v4796 = vsel %vm4725, %v4786, %v4795
      %v4798 = vshrl.u32 %v4403, 16
      %v4800 = vrot.slane %v4798, 2
      %v4801 = vshll.u32 %v4403, 16
      %v4803 = vrot.slane %v4801, 3
      %v4804 = vor.u32 %v4800, %v4803
      %v4805 = vsel %vm4725, %v4795, %v4804
      %v4807 = vshrl.u32 %v4404, 16
      %v4809 = vrot.slane %v4807, 2
      %v4810 = vshll.u32 %v4404, 16
      %v4812 = vrot.slane %v4810, 3
      %v4813 = vor.u32 %v4809, %v4812
      %v4814 = vsel %vm4725, %v4804, %v4813
      %v4816 = vshrl.u32 %v4405, 16
      %v4818 = vrot.slane %v4816, 2
      %v4819 = vshll.u32 %v4405, 16
      %v4821 = vrot.slane %v4819, 3
      %v4822 = vor.u32 %v4818, %v4821
      %v4823 = vsel %vm4725, %v4813, %v4822
      %v4825 = vshrl.u32 %v4406, 16
      %v4827 = vrot.slane %v4825, 2
      %v4828 = vshll.u32 %v4406, 16
      %v4830 = vrot.slane %v4828, 3
      %v4831 = vor.u32 %v4827, %v4830
      %v4832 = vsel %vm4725, %v4822, %v4831
      %v4834 = vshrl.u32 %v4407, 16
      %v4836 = vrot.slane %v4834, 2
      %v4837 = vshll.u32 %v4407, 16
      %v4839 = vrot.slane %v4837, 3
      %v4840 = vor.u32 %v4836, %v4839
      %v4841 = vsel %vm4725, %v4831, %v4840
      %v4843 = vshrl.u32 %v4408, 16
      %v4845 = vrot.slane %v4843, 2
      %v4846 = vshll.u32 %v4408, 16
      %v4848 = vrot.slane %v4846, 3
      %v4849 = vor.u32 %v4845, %v4848
      %v4850 = vsel %vm4725, %v4840, %v4849
      %v4852 = vshrl.u32 %v4409, 16
      %v4854 = vrot.slane %v4852, 2
      %v4855 = vshll.u32 %v4409, 16
      %v4857 = vrot.slane %v4855, 3
      %v4858 = vor.u32 %v4854, %v4857
      %v4859 = vsel %vm4725, %v4849, %v4858
      %v4861 = vshrl.u32 %v4410, 16
      %v4863 = vrot.slane %v4861, 2
      %v4864 = vshll.u32 %v4410, 16
      %v4866 = vrot.slane %v4864, 3
      %v4867 = vor.u32 %v4863, %v4866
      %v4868 = vsel %vm4725, %v4858, %v4867
      %v4870 = vshrl.u32 %v4411, 16
      %v4872 = vrot.slane %v4870, 2
      %v4873 = vshll.u32 %v4411, 16
      %v4875 = vrot.slane %v4873, 3
      %v4876 = vor.u32 %v4872, %v4875
      %v4877 = vsel %vm4725, %v4867, %v4876
      %v4879 = vshrl.u32 %v4412, 16
      %v4881 = vrot.slane %v4879, 2
      %v4882 = vshll.u32 %v4412, 16
      %v4884 = vrot.slane %v4882, 3
      %v4885 = vor.u32 %v4881, %v4884
      %v4886 = vsel %vm4725, %v4876, %v4885
      %v4888 = vshrl.u32 %v4724, 16
      %v4890 = vrot.slane %v4888, 2
      %v4891 = vshll.u32 %v4724, 16
      %v4893 = vrot.slane %v4891, 3
      %v4894 = vor.u32 %v4890, %v4893
      %v4895 = vsel %vm4725, %v4885, %v4894
      %v4897 = vsel %vm2326, %v4742, 0
      %v4900 = vsel %vm2326, %v4751, 0
      %v4903 = vsel %vm2326, %v4760, 0
      %v4906 = vsel %vm2326, %v4769, 0
      %v4909 = vsel %vm2326, %v4778, 0
      %v4912 = vsel %vm2326, %v4787, 0
      %v4915 = vsel %vm2326, %v4796, 0
      %v4918 = vsel %vm2326, %v4805, 0
      %v4921 = vsel %vm2326, %v4814, 0
      %v4924 = vsel %vm2326, %v4823, 0
      %v4927 = vsel %vm2326, %v4832, 0
      %v4930 = vsel %vm2326, %v4841, 0
      %v4933 = vsel %vm2326, %v4850, 0
      %v4936 = vsel %vm2326, %v4859, 0
      %v4939 = vsel %vm2326, %v4868, 0
      %v4942 = vsel %vm2326, %v4877, 0
      %v4945 = vsel %vm2326, %v4886, 0
      %v4948 = vsel %vm2326, %v4895, 0
      %v4951 = vsel %vm2381, %v339, 0
      %4953 = vmatprep.subr.bf16.mxu0 0
      %4954 = vmatpush1.bf16.msra.mxu0 %v4951
      %4955 = vmatprep.subr.bf16.mxu0 0
      %4956 = vmatpush1.bf16.msra.mxu0 0
      %4957 = vmatprep.subr.bf16.mxu0 0
      %4958 = vmatpush1.bf16.msra.mxu0 0
      %4959 = vmatprep.subr.bf16.mxu0 0
      %4960 = vmatpush1.bf16.msra.mxu0 0
      %4961 = vmatprep.subr.bf16.mxu0 0
      %4962 = vmatpush1.bf16.msra.mxu0 0
      %4963 = vmatprep.subr.bf16.mxu0 0
      %4964 = vmatpush1.bf16.msra.mxu0 0
      %4965 = vmatprep.subr.bf16.mxu0 0
      %4966 = vmatpush1.bf16.msra.mxu0 0
      %4967 = vmatprep.subr.bf16.mxu0 0
      %4968 = vmatpush1.bf16.msra.mxu0 0
      %4969 = vmatprep.subr.bf16.mxu0 0
      %4970 = vmatpush1.bf16.msra.mxu0 0
      %4971 = vmatprep.subr.bf16.mxu0 0
      %4972 = vmatpush1.bf16.msra.mxu0 0
      %4973 = vmatprep.subr.bf16.mxu0 0
      %4974 = vmatpush1.bf16.msra.mxu0 0
      %4975 = vmatprep.subr.bf16.mxu0 0
      %4976 = vmatpush1.bf16.msra.mxu0 0
      %4977 = vmatprep.subr.bf16.mxu0 0
      %4978 = vmatpush1.bf16.msra.mxu0 0
      %4979 = vmatprep.subr.bf16.mxu0 0
      %4980 = vmatpush1.bf16.msra.mxu0 0
      %4981 = vmatprep.subr.bf16.mxu0 0
      %4982 = vmatpush1.bf16.msra.mxu0 0
      %4983 = vmatprep.subr.bf16.mxu0 0
      %4984 = vmatpush1.bf16.msra.mxu0 0
      %4985 = vmatprep.mubr.bf16.mxu0 0
      %4986 = vmatmul.mubr.bf16.gmra.mrb[0].mxu0 %v4897
      %v4987 = vpop.f32.mrb[0].mxu0
      %v4988 = vadd.f32 0.0, %v4987
      %v4989 = vpop.f32.mrb[0].mxu0
      %v4990 = vpop.f32.mrb[0].mxu0
      %v4991 = vadd.f32 0.0, %v4990
      %v4992 = vpop.f32.mrb[0].mxu0
      %4993 = vmatprep.mubr.bf16.mxu0 0
      %4994 = vmatmul.mubr.bf16.gmra.mrb[0].mxu0 %v4900
      %v4995 = vpop.f32.mrb[0].mxu0
      %v4996 = vadd.f32 0.0, %v4995
      %v4997 = vpop.f32.mrb[0].mxu0
      %v4998 = vpop.f32.mrb[0].mxu0
      %v4999 = vadd.f32 0.0, %v4998
      %v5000 = vpop.f32.mrb[0].mxu0
      %5001 = vmatprep.mubr.bf16.mxu0 0
      %5002 = vmatmul.mubr.bf16.gmra.mrb[0].mxu0 %v4903
      %v5003 = vpop.f32.mrb[0].mxu0
      %v5004 = vadd.f32 0.0, %v5003
      %v5005 = vpop.f32.mrb[0].mxu0
      %v5006 = vpop.f32.mrb[0].mxu0
      %v5007 = vadd.f32 0.0, %v5006
      %v5008 = vpop.f32.mrb[0].mxu0
      %5009 = vmatprep.mubr.bf16.mxu0 0
      %5010 = vmatmul.mubr.bf16.gmra.mrb[0].mxu0 %v4906
      %v5011 = vpop.f32.mrb[0].mxu0
      %v5012 = vadd.f32 0.0, %v5011
      %v5013 = vpop.f32.mrb[0].mxu0
      %v5014 = vpop.f32.mrb[0].mxu0
      %v5015 = vadd.f32 0.0, %v5014
      %v5016 = vpop.f32.mrb[0].mxu0
      %5017 = vmatprep.mubr.bf16.mxu0 0
      %5018 = vmatmul.mubr.bf16.gmra.mrb[0].mxu0 %v4909
      %v5019 = vpop.f32.mrb[0].mxu0
      %v5020 = vadd.f32 0.0, %v5019
      %v5021 = vpop.f32.mrb[0].mxu0
      %v5022 = vpop.f32.mrb[0].mxu0
      %v5023 = vadd.f32 0.0, %v5022
      %v5024 = vpop.f32.mrb[0].mxu0
      %5025 = vmatprep.mubr.bf16.mxu0 0
      %5026 = vmatmul.mubr.bf16.gmra.mrb[0].mxu0 %v4912
      %v5027 = vpop.f32.mrb[0].mxu0
      %v5028 = vadd.f32 0.0, %v5027
      %v5029 = vpop.f32.mrb[0].mxu0
      %v5030 = vpop.f32.mrb[0].mxu0
      %v5031 = vadd.f32 0.0, %v5030
      %v5032 = vpop.f32.mrb[0].mxu0
      %5033 = vmatprep.mubr.bf16.mxu0 0
      %5034 = vmatmul.mubr.bf16.gmra.mrb[0].mxu0 %v4915
      %v5035 = vpop.f32.mrb[0].mxu0
      %v5036 = vadd.f32 0.0, %v5035
      %v5037 = vpop.f32.mrb[0].mxu0
      %v5038 = vpop.f32.mrb[0].mxu0
      %v5039 = vadd.f32 0.0, %v5038
      %v5040 = vpop.f32.mrb[0].mxu0
      %5041 = vmatprep.mubr.bf16.mxu0 0
      %5042 = vmatmul.mubr.bf16.gmra.mrb[0].mxu0 %v4918
      %v5043 = vpop.f32.mrb[0].mxu0
      %v5044 = vadd.f32 0.0, %v5043
      %v5045 = vpop.f32.mrb[0].mxu0
      %v5046 = vpop.f32.mrb[0].mxu0
      %v5047 = vadd.f32 0.0, %v5046
      %v5048 = vpop.f32.mrb[0].mxu0
      %5049 = vmatprep.mubr.bf16.mxu0 0
      %5050 = vmatmul.mubr.bf16.gmra.mrb[0].mxu0 %v4921
      %v5051 = vpop.f32.mrb[0].mxu0
      %v5052 = vadd.f32 0.0, %v5051
      %v5053 = vpop.f32.mrb[0].mxu0
      %v5054 = vpop.f32.mrb[0].mxu0
      %v5055 = vadd.f32 0.0, %v5054
      %v5056 = vpop.f32.mrb[0].mxu0
      %5057 = vmatprep.mubr.bf16.mxu0 0
      %5058 = vmatmul.mubr.bf16.gmra.mrb[0].mxu0 %v4924
      %v5059 = vpop.f32.mrb[0].mxu0
      %v5060 = vadd.f32 0.0, %v5059
      %v5061 = vpop.f32.mrb[0].mxu0
      %v5062 = vpop.f32.mrb[0].mxu0
      %v5063 = vadd.f32 0.0, %v5062
      %v5064 = vpop.f32.mrb[0].mxu0
      %5065 = vmatprep.mubr.bf16.mxu0 0
      %5066 = vmatmul.mubr.bf16.gmra.mrb[0].mxu0 %v4927
      %v5067 = vpop.f32.mrb[0].mxu0
      %v5068 = vadd.f32 0.0, %v5067
      %v5069 = vpop.f32.mrb[0].mxu0
      %v5070 = vpop.f32.mrb[0].mxu0
      %v5071 = vadd.f32 0.0, %v5070
      %v5072 = vpop.f32.mrb[0].mxu0
      %5073 = vmatprep.mubr.bf16.mxu0 0
      %5074 = vmatmul.mubr.bf16.gmra.mrb[0].mxu0 %v4930
      %v5075 = vpop.f32.mrb[0].mxu0
      %v5076 = vadd.f32 0.0, %v5075
      %v5077 = vpop.f32.mrb[0].mxu0
      %v5078 = vpop.f32.mrb[0].mxu0
      %v5079 = vadd.f32 0.0, %v5078
      %v5080 = vpop.f32.mrb[0].mxu0
      %5081 = vmatprep.mubr.bf16.mxu0 0
      %5082 = vmatmul.mubr.bf16.gmra.mrb[0].mxu0 %v4933
      %v5083 = vpop.f32.mrb[0].mxu0
      %v5084 = vadd.f32 0.0, %v5083
      %v5085 = vpop.f32.mrb[0].mxu0
      %v5086 = vpop.f32.mrb[0].mxu0
      %v5087 = vadd.f32 0.0, %v5086
      %v5088 = vpop.f32.mrb[0].mxu0
      %5089 = vmatprep.mubr.bf16.mxu0 0
      %5090 = vmatmul.mubr.bf16.gmra.mrb[0].mxu0 %v4936
      %v5091 = vpop.f32.mrb[0].mxu0
      %v5092 = vadd.f32 0.0, %v5091
      %v5093 = vpop.f32.mrb[0].mxu0
      %v5094 = vpop.f32.mrb[0].mxu0
      %v5095 = vadd.f32 0.0, %v5094
      %v5096 = vpop.f32.mrb[0].mxu0
      %5097 = vmatprep.mubr.bf16.mxu0 0
      %5098 = vmatmul.mubr.bf16.gmra.mrb[0].mxu0 %v4939
      %v5099 = vpop.f32.mrb[0].mxu0
      %v5100 = vadd.f32 0.0, %v5099
      %v5101 = vpop.f32.mrb[0].mxu0
      %v5102 = vpop.f32.mrb[0].mxu0
      %v5103 = vadd.f32 0.0, %v5102
      %v5104 = vpop.f32.mrb[0].mxu0
      %5105 = vmatprep.mubr.bf16.mxu0 0
      %5106 = vmatmul.mubr.bf16.gmra.mrb[0].mxu0 %v4942
      %v5107 = vpop.f32.mrb[0].mxu0
      %v5108 = vadd.f32 0.0, %v5107
      %v5109 = vpop.f32.mrb[0].mxu0
      %v5110 = vpop.f32.mrb[0].mxu0
      %v5111 = vadd.f32 0.0, %v5110
      %v5112 = vpop.f32.mrb[0].mxu0
      %5113 = vmatprep.mubr.bf16.mxu0 0
      %5114 = vmatmul.mubr.bf16.gmra.mrb[0].mxu0 %v4945
      %v5115 = vpop.f32.mrb[0].mxu0
      %v5116 = vadd.f32 0.0, %v5115
      %v5117 = vpop.f32.mrb[0].mxu0
      %v5118 = vpop.f32.mrb[0].mxu0
      %v5119 = vadd.f32 0.0, %v5118
      %v5120 = vpop.f32.mrb[0].mxu0
      %5121 = vmatprep.mubr.bf16.mxu0 0
      %5122 = vmatmul.mubr.bf16.gmra.mrb[0].mxu0 %v4948
      %v5123 = vpop.f32.mrb[0].mxu0
      %v5124 = vadd.f32 0.0, %v5123
      %v5125 = vpop.f32.mrb[0].mxu0
      %v5126 = vpop.f32.mrb[0].mxu0
      %v5127 = vadd.f32 0.0, %v5126
      %v5128 = vpop.f32.mrb[0].mxu0
      %5129 = vdwg.mxu0
      %v5130 = vadd.f32 %v4685, %v4988
      %v5131 = vadd.f32 %v4686, %v4991
      %v5132 = vadd.f32 %v4687, %v4996
      %v5133 = vadd.f32 %v4688, %v4999
      %v5134 = vadd.f32 %v4689, %v5004
      %v5135 = vadd.f32 %v4690, %v5007
      %v5136 = vadd.f32 %v4691, %v5012
      %v5137 = vadd.f32 %v4692, %v5015
      %v5138 = vadd.f32 %v4693, %v5020
      %v5139 = vadd.f32 %v4694, %v5023
      %v5140 = vadd.f32 %v4695, %v5028
      %v5141 = vadd.f32 %v4696, %v5031
      %v5142 = vadd.f32 %v4697, %v5036
      %v5143 = vadd.f32 %v4698, %v5039
      %v5144 = vadd.f32 %v4699, %v5044
      %v5145 = vadd.f32 %v4700, %v5047
      %v5146 = vadd.f32 %v4701, %v5052
      %v5147 = vadd.f32 %v4702, %v5055
      %v5148 = vadd.f32 %v4703, %v5060
      %v5149 = vadd.f32 %v4704, %v5063
      %v5150 = vadd.f32 %v4705, %v5068
      %v5151 = vadd.f32 %v4706, %v5071
      %v5152 = vadd.f32 %v4707, %v5076
      %v5153 = vadd.f32 %v4708, %v5079
      %v5154 = vadd.f32 %v4709, %v5084
      %v5155 = vadd.f32 %v4710, %v5087
      %v5156 = vadd.f32 %v4711, %v5092
      %v5157 = vadd.f32 %v4712, %v5095
      %v5158 = vadd.f32 %v4713, %v5100
      %v5159 = vadd.f32 %v4714, %v5103
      %v5160 = vadd.f32 %v4715, %v5108
      %v5161 = vadd.f32 %v4716, %v5111
      %v5162 = vadd.f32 %v4717, %v5116
      %v5163 = vadd.f32 %v4718, %v5119
      %v5164 = vadd.f32 %v4719, %v5124
      %v5165 = vadd.f32 %v4720, %v5127
      %v5166 = vld [vmem:[#allocation2 + $0x10] sm:$0x8]
      %v5168 = vunpack.c.l.b16 %v5166
      %v5169 = vpack.c.b16 %v4359, %v5168
      %vm5170 = vcmask 1044480
      %v5171 = vrot.slane %v5169, 3
      %v5172 = vrot.slane %v4396, 3
      %v5173 = vsel %vm5170, %v5171, %v5172
      %v5174 = vrot.slane %v4397, 3
      %v5175 = vsel %vm5170, %v5172, %v5174
      %v5176 = vrot.slane %v4398, 3
      %v5177 = vsel %vm5170, %v5174, %v5176
      %v5178 = vrot.slane %v4399, 3
      %v5179 = vsel %vm5170, %v5176, %v5178
      %v5180 = vrot.slane %v4400, 3
      %v5181 = vsel %vm5170, %v5178, %v5180
      %v5182 = vrot.slane %v4401, 3
      %v5183 = vsel %vm5170, %v5180, %v5182
      %v5184 = vrot.slane %v4402, 3
      %v5185 = vsel %vm5170, %v5182, %v5184
      %v5186 = vrot.slane %v4403, 3
      %v5187 = vsel %vm5170, %v5184, %v5186
      %v5188 = vrot.slane %v4404, 3
      %v5189 = vsel %vm5170, %v5186, %v5188
      %v5190 = vrot.slane %v4405, 3
      %v5191 = vsel %vm5170, %v5188, %v5190
      %v5192 = vrot.slane %v4406, 3
      %v5193 = vsel %vm5170, %v5190, %v5192
      %v5194 = vrot.slane %v4407, 3
      %v5195 = vsel %vm5170, %v5192, %v5194
      %v5196 = vrot.slane %v4408, 3
      %v5197 = vsel %vm5170, %v5194, %v5196
      %v5198 = vrot.slane %v4409, 3
      %v5199 = vsel %vm5170, %v5196, %v5198
      %v5200 = vrot.slane %v4410, 3
      %v5201 = vsel %vm5170, %v5198, %v5200
      %v5202 = vrot.slane %v4411, 3
      %v5203 = vsel %vm5170, %v5200, %v5202
      %v5204 = vrot.slane %v4412, 3
      %v5205 = vsel %vm5170, %v5202, %v5204
      %v5206 = vrot.slane %v4724, 3
      %v5207 = vsel %vm5170, %v5204, %v5206
      %v5209 = vsel %vm2326, %v5173, 0
      %v5212 = vsel %vm2326, %v5175, 0
      %v5215 = vsel %vm2326, %v5177, 0
      %v5218 = vsel %vm2326, %v5179, 0
      %v5221 = vsel %vm2326, %v5181, 0
      %v5224 = vsel %vm2326, %v5183, 0
      %v5227 = vsel %vm2326, %v5185, 0
      %v5230 = vsel %vm2326, %v5187, 0
      %v5233 = vsel %vm2326, %v5189, 0
      %v5236 = vsel %vm2326, %v5191, 0
      %v5239 = vsel %vm2326, %v5193, 0
      %v5242 = vsel %vm2326, %v5195, 0
      %v5245 = vsel %vm2326, %v5197, 0
      %v5248 = vsel %vm2326, %v5199, 0
      %v5251 = vsel %vm2326, %v5201, 0
      %v5254 = vsel %vm2326, %v5203, 0
      %v5257 = vsel %vm2326, %v5205, 0
      %v5260 = vsel %vm2326, %v5207, 0
      %v5263 = vsel %vm2381, %v340, 0
      %5265 = vmatprep.subr.bf16.mxu0 0
      %5266 = vmatpush1.bf16.msra.mxu0 %v5263
      %5267 = vmatprep.subr.bf16.mxu0 0
      %5268 = vmatpush1.bf16.msra.mxu0 0
      %5269 = vmatprep.subr.bf16.mxu0 0
      %5270 = vmatpush1.bf16.msra.mxu0 0
      %5271 = vmatprep.subr.bf16.mxu0 0
      %5272 = vmatpush1.bf16.msra.mxu0 0
      %5273 = vmatprep.subr.bf16.mxu0 0
      %5274 = vmatpush1.bf16.msra.mxu0 0
      %5275 = vmatprep.subr.bf16.mxu0 0
      %5276 = vmatpush1.bf16.msra.mxu0 0
      %5277 = vmatprep.subr.bf16.mxu0 0
      %5278 = vmatpush1.bf16.msra.mxu0 0
      %5279 = vmatprep.subr.bf16.mxu0 0
      %5280 = vmatpush1.bf16.msra.mxu0 0
      %5281 = vmatprep.subr.bf16.mxu0 0
      %5282 = vmatpush1.bf16.msra.mxu0 0
      %5283 = vmatprep.subr.bf16.mxu0 0
      %5284 = vmatpush1.bf16.msra.mxu0 0
      %5285 = vmatprep.subr.bf16.mxu0 0
      %5286 = vmatpush1.bf16.msra.mxu0 0
      %5287 = vmatprep.subr.bf16.mxu0 0
      %5288 = vmatpush1.bf16.msra.mxu0 0
      %5289 = vmatprep.subr.bf16.mxu0 0
      %5290 = vmatpush1.bf16.msra.mxu0 0
      %5291 = vmatprep.subr.bf16.mxu0 0
      %5292 = vmatpush1.bf16.msra.mxu0 0
      %5293 = vmatprep.subr.bf16.mxu0 0
      %5294 = vmatpush1.bf16.msra.mxu0 0
      %5295 = vmatprep.subr.bf16.mxu0 0
      %5296 = vmatpush1.bf16.msra.mxu0 0
      %5297 = vmatprep.mubr.bf16.mxu0 0
      %5298 = vmatmul.mubr.bf16.gmra.mrb[0].mxu0 %v5209
      %v5299 = vpop.f32.mrb[0].mxu0
      %v5300 = vadd.f32 0.0, %v5299
      %v5301 = vpop.f32.mrb[0].mxu0
      %v5302 = vpop.f32.mrb[0].mxu0
      %v5303 = vadd.f32 0.0, %v5302
      %v5304 = vpop.f32.mrb[0].mxu0
      %5305 = vmatprep.mubr.bf16.mxu0 0
      %5306 = vmatmul.mubr.bf16.gmra.mrb[0].mxu0 %v5212
      %v5307 = vpop.f32.mrb[0].mxu0
      %v5308 = vadd.f32 0.0, %v5307
      %v5309 = vpop.f32.mrb[0].mxu0
      %v5310 = vpop.f32.mrb[0].mxu0
      %v5311 = vadd.f32 0.0, %v5310
      %v5312 = vpop.f32.mrb[0].mxu0
      %5313 = vmatprep.mubr.bf16.mxu0 0
      %5314 = vmatmul.mubr.bf16.gmra.mrb[0].mxu0 %v5215
      %v5315 = vpop.f32.mrb[0].mxu0
      %v5316 = vadd.f32 0.0, %v5315
      %v5317 = vpop.f32.mrb[0].mxu0
      %v5318 = vpop.f32.mrb[0].mxu0
      %v5319 = vadd.f32 0.0, %v5318
      %v5320 = vpop.f32.mrb[0].mxu0
      %5321 = vmatprep.mubr.bf16.mxu0 0
      %5322 = vmatmul.mubr.bf16.gmra.mrb[0].mxu0 %v5218
      %v5323 = vpop.f32.mrb[0].mxu0
      %v5324 = vadd.f32 0.0, %v5323
      %v5325 = vpop.f32.mrb[0].mxu0
      %v5326 = vpop.f32.mrb[0].mxu0
      %v5327 = vadd.f32 0.0, %v5326
      %v5328 = vpop.f32.mrb[0].mxu0
      %5329 = vmatprep.mubr.bf16.mxu0 0
      %5330 = vmatmul.mubr.bf16.gmra.mrb[0].mxu0 %v5221
      %v5331 = vpop.f32.mrb[0].mxu0
      %v5332 = vadd.f32 0.0, %v5331
      %v5333 = vpop.f32.mrb[0].mxu0
      %v5334 = vpop.f32.mrb[0].mxu0
      %v5335 = vadd.f32 0.0, %v5334
      %v5336 = vpop.f32.mrb[0].mxu0
      %5337 = vmatprep.mubr.bf16.mxu0 0
      %5338 = vmatmul.mubr.bf16.gmra.mrb[0].mxu0 %v5224
      %v5339 = vpop.f32.mrb[0].mxu0
      %v5340 = vadd.f32 0.0, %v5339
      %v5341 = vpop.f32.mrb[0].mxu0
      %v5342 = vpop.f32.mrb[0].mxu0
      %v5343 = vadd.f32 0.0, %v5342
      %v5344 = vpop.f32.mrb[0].mxu0
      %5345 = vmatprep.mubr.bf16.mxu0 0
      %5346 = vmatmul.mubr.bf16.gmra.mrb[0].mxu0 %v5227
      %v5347 = vpop.f32.mrb[0].mxu0
      %v5348 = vadd.f32 0.0, %v5347
      %v5349 = vpop.f32.mrb[0].mxu0
      %v5350 = vpop.f32.mrb[0].mxu0
      %v5351 = vadd.f32 0.0, %v5350
      %v5352 = vpop.f32.mrb[0].mxu0
      %5353 = vmatprep.mubr.bf16.mxu0 0
      %5354 = vmatmul.mubr.bf16.gmra.mrb[0].mxu0 %v5230
      %v5355 = vpop.f32.mrb[0].mxu0
      %v5356 = vadd.f32 0.0, %v5355
      %v5357 = vpop.f32.mrb[0].mxu0
      %v5358 = vpop.f32.mrb[0].mxu0
      %v5359 = vadd.f32 0.0, %v5358
      %v5360 = vpop.f32.mrb[0].mxu0
      %5361 = vmatprep.mubr.bf16.mxu0 0
      %5362 = vmatmul.mubr.bf16.gmra.mrb[0].mxu0 %v5233
      %v5363 = vpop.f32.mrb[0].mxu0
      %v5364 = vadd.f32 0.0, %v5363
      %v5365 = vpop.f32.mrb[0].mxu0
      %v5366 = vpop.f32.mrb[0].mxu0
      %v5367 = vadd.f32 0.0, %v5366
      %v5368 = vpop.f32.mrb[0].mxu0
      %5369 = vmatprep.mubr.bf16.mxu0 0
      %5370 = vmatmul.mubr.bf16.gmra.mrb[0].mxu0 %v5236
      %v5371 = vpop.f32.mrb[0].mxu0
      %v5372 = vadd.f32 0.0, %v5371
      %v5373 = vpop.f32.mrb[0].mxu0
      %v5374 = vpop.f32.mrb[0].mxu0
      %v5375 = vadd.f32 0.0, %v5374
      %v5376 = vpop.f32.mrb[0].mxu0
      %5377 = vmatprep.mubr.bf16.mxu0 0
      %5378 = vmatmul.mubr.bf16.gmra.mrb[0].mxu0 %v5239
      %v5379 = vpop.f32.mrb[0].mxu0
      %v5380 = vadd.f32 0.0, %v5379
      %v5381 = vpop.f32.mrb[0].mxu0
      %v5382 = vpop.f32.mrb[0].mxu0
      %v5383 = vadd.f32 0.0, %v5382
      %v5384 = vpop.f32.mrb[0].mxu0
      %5385 = vmatprep.mubr.bf16.mxu0 0
      %5386 = vmatmul.mubr.bf16.gmra.mrb[0].mxu0 %v5242
      %v5387 = vpop.f32.mrb[0].mxu0
      %v5388 = vadd.f32 0.0, %v5387
      %v5389 = vpop.f32.mrb[0].mxu0
      %v5390 = vpop.f32.mrb[0].mxu0
      %v5391 = vadd.f32 0.0, %v5390
      %v5392 = vpop.f32.mrb[0].mxu0
      %5393 = vmatprep.mubr.bf16.mxu0 0
      %5394 = vmatmul.mubr.bf16.gmra.mrb[0].mxu0 %v5245
      %v5395 = vpop.f32.mrb[0].mxu0
      %v5396 = vadd.f32 0.0, %v5395
      %v5397 = vpop.f32.mrb[0].mxu0
      %v5398 = vpop.f32.mrb[0].mxu0
      %v5399 = vadd.f32 0.0, %v5398
      %v5400 = vpop.f32.mrb[0].mxu0
      %5401 = vmatprep.mubr.bf16.mxu0 0
      %5402 = vmatmul.mubr.bf16.gmra.mrb[0].mxu0 %v5248
      %v5403 = vpop.f32.mrb[0].mxu0
      %v5404 = vadd.f32 0.0, %v5403
      %v5405 = vpop.f32.mrb[0].mxu0
      %v5406 = vpop.f32.mrb[0].mxu0
      %v5407 = vadd.f32 0.0, %v5406
      %v5408 = vpop.f32.mrb[0].mxu0
      %5409 = vmatprep.mubr.bf16.mxu0 0
      %5410 = vmatmul.mubr.bf16.gmra.mrb[0].mxu0 %v5251
      %v5411 = vpop.f32.mrb[0].mxu0
      %v5412 = vadd.f32 0.0, %v5411
      %v5413 = vpop.f32.mrb[0].mxu0
      %v5414 = vpop.f32.mrb[0].mxu0
      %v5415 = vadd.f32 0.0, %v5414
      %v5416 = vpop.f32.mrb[0].mxu0
      %5417 = vmatprep.mubr.bf16.mxu0 0
      %5418 = vmatmul.mubr.bf16.gmra.mrb[0].mxu0 %v5254
      %v5419 = vpop.f32.mrb[0].mxu0
      %v5420 = vadd.f32 0.0, %v5419
      %v5421 = vpop.f32.mrb[0].mxu0
      %v5422 = vpop.f32.mrb[0].mxu0
      %v5423 = vadd.f32 0.0, %v5422
      %v5424 = vpop.f32.mrb[0].mxu0
      %5425 = vmatprep.mubr.bf16.mxu0 0
      %5426 = vmatmul.mubr.bf16.gmra.mrb[0].mxu0 %v5257
      %v5427 = vpop.f32.mrb[0].mxu0
      %v5428 = vadd.f32 0.0, %v5427
      %v5429 = vpop.f32.mrb[0].mxu0
      %v5430 = vpop.f32.mrb[0].mxu0
      %v5431 = vadd.f32 0.0, %v5430
      %v5432 = vpop.f32.mrb[0].mxu0
      %5433 = vmatprep.mubr.bf16.mxu0 0
      %5434 = vmatmul.mubr.bf16.gmra.mrb[0].mxu0 %v5260
      %v5435 = vpop.f32.mrb[0].mxu0
      %v5436 = vadd.f32 0.0, %v5435
      %v5437 = vpop.f32.mrb[0].mxu0
      %v5438 = vpop.f32.mrb[0].mxu0
      %v5439 = vadd.f32 0.0, %v5438
      %v5440 = vpop.f32.mrb[0].mxu0
      %5441 = vdwg.mxu0
      %v5442 = vadd.f32 %v5130, %v5300
      %v5443 = vadd.f32 %v5131, %v5303
      %v5444 = vadd.f32 %v5132, %v5308
      %v5445 = vadd.f32 %v5133, %v5311
      %v5446 = vadd.f32 %v5134, %v5316
      %v5447 = vadd.f32 %v5135, %v5319
      %v5448 = vadd.f32 %v5136, %v5324
      %v5449 = vadd.f32 %v5137, %v5327
      %v5450 = vadd.f32 %v5138, %v5332
      %v5451 = vadd.f32 %v5139, %v5335
      %v5452 = vadd.f32 %v5140, %v5340
      %v5453 = vadd.f32 %v5141, %v5343
      %v5454 = vadd.f32 %v5142, %v5348
      %v5455 = vadd.f32 %v5143, %v5351
      %v5456 = vadd.f32 %v5144, %v5356
      %v5457 = vadd.f32 %v5145, %v5359
      %v5458 = vadd.f32 %v5146, %v5364
      %v5459 = vadd.f32 %v5147, %v5367
      %v5460 = vadd.f32 %v5148, %v5372
      %v5461 = vadd.f32 %v5149, %v5375
      %v5462 = vadd.f32 %v5150, %v5380
      %v5463 = vadd.f32 %v5151, %v5383
      %v5464 = vadd.f32 %v5152, %v5388
      %v5465 = vadd.f32 %v5153, %v5391
      %v5466 = vadd.f32 %v5154, %v5396
      %v5467 = vadd.f32 %v5155, %v5399
      %v5468 = vadd.f32 %v5156, %v5404
      %v5469 = vadd.f32 %v5157, %v5407
      %v5470 = vadd.f32 %v5158, %v5412
      %v5471 = vadd.f32 %v5159, %v5415
      %v5472 = vadd.f32 %v5160, %v5420
      %v5473 = vadd.f32 %v5161, %v5423
      %v5474 = vadd.f32 %v5162, %v5428
      %v5475 = vadd.f32 %v5163, %v5431
      %v5476 = vadd.f32 %v5164, %v5436
      %v5477 = vadd.f32 %v5165, %v5439
      %v5478 = vpack.c.bf16 %v5443, %v5442
      %v5479 = vpack.c.bf16 %v5445, %v5444
      %v5480 = vpack.c.bf16 %v5447, %v5446
      %v5481 = vpack.c.bf16 %v5449, %v5448
      %v5482 = vpack.c.bf16 %v5451, %v5450
      %v5483 = vpack.c.bf16 %v5453, %v5452
      %v5484 = vpack.c.bf16 %v5455, %v5454
      %v5485 = vpack.c.bf16 %v5457, %v5456
      %v5486 = vpack.c.bf16 %v5459, %v5458
      %v5487 = vpack.c.bf16 %v5461, %v5460
      %v5488 = vpack.c.bf16 %v5463, %v5462
      %v5489 = vpack.c.bf16 %v5465, %v5464
      %v5490 = vpack.c.bf16 %v5467, %v5466
      %v5491 = vpack.c.bf16 %v5469, %v5468
      %v5492 = vpack.c.bf16 %v5471, %v5470
      %v5493 = vpack.c.bf16 %v5473, %v5472
      %v5494 = vpack.c.bf16 %v5475, %v5474
      %v5495 = vpack.c.bf16 %v5477, %v5476
      %5496 = vst.msk [vmem:[#allocation3] sm:$0xff] %vm2326, %v5478
      %5497 = vst.msk [vmem:[#allocation3 + $0x8] sm:$0xff] %vm2326, %v5479
      %5498 = vst.msk [vmem:[#allocation3 + $0x10] sm:$0xff] %vm2326, %v5480
      %5499 = vst.msk [vmem:[#allocation3 + $0x18] sm:$0xff] %vm2326, %v5481
      %5500 = vst.msk [vmem:[#allocation3 + $0x20] sm:$0xff] %vm2326, %v5482
      %5501 = vst.msk [vmem:[#allocation3 + $0x28] sm:$0xff] %vm2326, %v5483
      %5502 = vst.msk [vmem:[#allocation3 + $0x30] sm:$0xff] %vm2326, %v5484
      %5503 = vst.msk [vmem:[#allocation3 + $0x38] sm:$0xff] %vm2326, %v5485
      %5504 = vst.msk [vmem:[#allocation3 + $0x40] sm:$0xff] %vm2326, %v5486
      %5505 = vst.msk [vmem:[#allocation3 + $0x48] sm:$0xff] %vm2326, %v5487
      %5506 = vst.msk [vmem:[#allocation3 + $0x50] sm:$0xff] %vm2326, %v5488
      %5507 = vst.msk [vmem:[#allocation3 + $0x58] sm:$0xff] %vm2326, %v5489
      %5508 = vst.msk [vmem:[#allocation3 + $0x60] sm:$0xff] %vm2326, %v5490
      %5509 = vst.msk [vmem:[#allocation3 + $0x68] sm:$0xff] %vm2326, %v5491
      %5510 = vst.msk [vmem:[#allocation3 + $0x70] sm:$0xff] %vm2326, %v5492
      %5511 = vst.msk [vmem:[#allocation3 + $0x78] sm:$0xff] %vm2326, %v5493
      %5512 = vst.msk [vmem:[#allocation3 + $0x80] sm:$0xff] %vm2326, %v5494
      %5513 = vst.msk [vmem:[#allocation3 + $0x88] sm:$0xff] %vm2326, %v5495
      %v5514 = vld [vmem:[%s320] sm:$0xf]
      %v5515 = vld [vmem:[%s320 + $0x4] sm:$0xf]
      %v5516 = vld [vmem:[%s320 + $0x8] sm:$0xf]
      %v5517 = vld [vmem:[%s320 + $0xc] sm:$0xf]
      %v5518 = vld [vmem:[%s320 + $0x10] sm:$0xf]
      %v5519 = vld [vmem:[%s320 + $0x14] sm:$0xf]
      %v5520 = vld [vmem:[%s320 + $0x18] sm:$0xf]
      %v5521 = vld [vmem:[%s320 + $0x1c] sm:$0xf]
      %v5523 = vlaneseq
      %v5524 = vshrl.u32 %v5523, 7
      %v5525 = vsub.s32 0, %v5524
      %v5526 = vrot.slane %v343, %v5525
      %v5536 = vunpack.c.l.b16 %v5514
      %v5537 = vunpack.c.l.b16 %v5515
      %v5538 = vunpack.c.l.b16 %v5516
      %v5539 = vunpack.c.l.b16 %v5517
      %v5540 = vunpack.c.l.b16 %v5518
      %v5541 = vunpack.c.l.b16 %v5519
      %v5542 = vunpack.c.l.b16 %v5520
      %v5543 = vunpack.c.l.b16 %v5521
      %v5544 = vpack.c.b16 %v5537, %v5536
      %v5545 = vpack.c.b16 %v5539, %v5538
      %v5546 = vpack.c.b16 %v5541, %v5540
      %v5547 = vpack.c.b16 %v5543, %v5542
      %vm5548 = vcmask 31744
      %v5550 = vsel %vm5548, %v5544, 0
      %v5553 = vsel %vm5548, %v5545, 0
      %v5556 = vsel %vm5548, %v5546, 0
      %v5559 = vsel %vm5548, %v5547, 0
      %v5562 = vsel %vm1241, %v341, 0
      %5564 = vmatprep.subr.bf16.mxu0 0
      %5565 = vmatpush1.bf16.msra.mxu0 %v5562
      %5566 = vmatprep.subr.bf16.mxu0 0
      %5567 = vmatpush1.bf16.msra.mxu0 0
      %5568 = vmatprep.subr.bf16.mxu0 0
      %5569 = vmatpush1.bf16.msra.mxu0 0
      %5570 = vmatprep.subr.bf16.mxu0 0
      %5571 = vmatpush1.bf16.msra.mxu0 0
      %5572 = vmatprep.subr.bf16.mxu0 0
      %5573 = vmatpush1.bf16.msra.mxu0 0
      %5574 = vmatprep.subr.bf16.mxu0 0
      %5575 = vmatpush1.bf16.msra.mxu0 0
      %5576 = vmatprep.subr.bf16.mxu0 0
      %5577 = vmatpush1.bf16.msra.mxu0 0
      %5578 = vmatprep.subr.bf16.mxu0 0
      %5579 = vmatpush1.bf16.msra.mxu0 0
      %5580 = vmatprep.subr.bf16.mxu0 0
      %5581 = vmatpush1.bf16.msra.mxu0 0
      %5582 = vmatprep.subr.bf16.mxu0 0
      %5583 = vmatpush1.bf16.msra.mxu0 0
      %5584 = vmatprep.subr.bf16.mxu0 0
      %5585 = vmatpush1.bf16.msra.mxu0 0
      %5586 = vmatprep.subr.bf16.mxu0 0
      %5587 = vmatpush1.bf16.msra.mxu0 0
      %5588 = vmatprep.subr.bf16.mxu0 0
      %5589 = vmatpush1.bf16.msra.mxu0 0
      %5590 = vmatprep.subr.bf16.mxu0 0
      %5591 = vmatpush1.bf16.msra.mxu0 0
      %5592 = vmatprep.subr.bf16.mxu0 0
      %5593 = vmatpush1.bf16.msra.mxu0 0
      %5594 = vmatprep.subr.bf16.mxu0 0
      %5595 = vmatpush1.bf16.msra.mxu0 0
      %5596 = vmatprep.mubr.bf16.mxu0 0
      %5597 = vmatmul.mubr.bf16.gmra.mrb[0].mxu0 %v5550
      %v5598 = vpop.f32.mrb[0].mxu0
      %v5599 = vadd.f32 %v5526, %v5598
      %v5600 = vpop.f32.mrb[0].mxu0
      %v5601 = vpop.f32.mrb[0].mxu0
      %v5602 = vadd.f32 %v5526, %v5601
      %v5603 = vpop.f32.mrb[0].mxu0
      %5604 = vmatprep.mubr.bf16.mxu0 0
      %5605 = vmatmul.mubr.bf16.gmra.mrb[0].mxu0 %v5553
      %v5606 = vpop.f32.mrb[0].mxu0
      %v5607 = vadd.f32 %v5526, %v5606
      %v5608 = vpop.f32.mrb[0].mxu0
      %v5609 = vpop.f32.mrb[0].mxu0
      %v5610 = vadd.f32 %v5526, %v5609
      %v5611 = vpop.f32.mrb[0].mxu0
      %5612 = vmatprep.mubr.bf16.mxu0 0
      %5613 = vmatmul.mubr.bf16.gmra.mrb[0].mxu0 %v5556
      %v5614 = vpop.f32.mrb[0].mxu0
      %v5615 = vadd.f32 %v5526, %v5614
      %v5616 = vpop.f32.mrb[0].mxu0
      %v5617 = vpop.f32.mrb[0].mxu0
      %v5618 = vadd.f32 %v5526, %v5617
      %v5619 = vpop.f32.mrb[0].mxu0
      %5620 = vmatprep.mubr.bf16.mxu0 0
      %5621 = vmatmul.mubr.bf16.gmra.mrb[0].mxu0 %v5559
      %v5622 = vpop.f32.mrb[0].mxu0
      %v5623 = vadd.f32 %v5526, %v5622
      %v5624 = vpop.f32.mrb[0].mxu0
      %v5625 = vpop.f32.mrb[0].mxu0
      %v5626 = vadd.f32 %v5526, %v5625
      %v5627 = vpop.f32.mrb[0].mxu0
      %5628 = vdwg.mxu0
      %v5629 = vld [vmem:[#allocation3] sm:$0xff]
      %v5630 = vld [vmem:[#allocation3 + $0x8] sm:$0xff]
      %v5631 = vld [vmem:[#allocation3 + $0x10] sm:$0x3]
      %v5633 = vsel %vm1186, %v344, 0
      %v5636 = vsel %vm1241, %v5631, 0
      %5638 = vmatprep.subr.bf16.mxu0 0
      %5639 = vmatpush1.bf16.msra.mxu0 %v5629
      %5640 = vmatprep.subr.bf16.mxu0 0
      %5641 = vmatpush1.bf16.msra.mxu0 %v5630
      %5642 = vmatprep.subr.bf16.mxu0 0
      %5643 = vmatpush1.bf16.msra.mxu0 %v5636
      %5644 = vmatprep.subr.bf16.mxu0 0
      %5645 = vmatpush1.bf16.msra.mxu0 0
      %5646 = vmatprep.subr.bf16.mxu0 0
      %5647 = vmatpush1.bf16.msra.mxu0 0
      %5648 = vmatprep.subr.bf16.mxu0 0
      %5649 = vmatpush1.bf16.msra.mxu0 0
      %5650 = vmatprep.subr.bf16.mxu0 0
      %5651 = vmatpush1.bf16.msra.mxu0 0
      %5652 = vmatprep.subr.bf16.mxu0 0
      %5653 = vmatpush1.bf16.msra.mxu0 0
      %5654 = vmatprep.subr.bf16.mxu0 0
      %5655 = vmatpush1.bf16.msra.mxu0 0
      %5656 = vmatprep.subr.bf16.mxu0 0
      %5657 = vmatpush1.bf16.msra.mxu0 0
      %5658 = vmatprep.subr.bf16.mxu0 0
      %5659 = vmatpush1.bf16.msra.mxu0 0
      %5660 = vmatprep.subr.bf16.mxu0 0
      %5661 = vmatpush1.bf16.msra.mxu0 0
      %5662 = vmatprep.subr.bf16.mxu0 0
      %5663 = vmatpush1.bf16.msra.mxu0 0
      %5664 = vmatprep.subr.bf16.mxu0 0
      %5665 = vmatpush1.bf16.msra.mxu0 0
      %5666 = vmatprep.subr.bf16.mxu0 0
      %5667 = vmatpush1.bf16.msra.mxu0 0
      %5668 = vmatprep.subr.bf16.mxu0 0
      %5669 = vmatpush1.bf16.msra.mxu0 0
      %5670 = vmatprep.mubr.bf16.mxu0 0
      %5671 = vmatmul.mubr.bf16.gmra.mrb[0].mxu0 %v5633
      %v5672 = vpop.f32.mrb[0].mxu0
      %v5673 = vadd.f32 0.0, %v5672
      %v5674 = vpop.f32.mrb[0].mxu0
      %v5675 = vpop.f32.mrb[0].mxu0
      %v5676 = vpop.f32.mrb[0].mxu0
      %5677 = vdwg.mxu0
      %v5678 = vld [vmem:[#allocation3 + $0x10] sm:$0xfc]
      %v5679 = vld [vmem:[#allocation3 + $0x18] sm:$0xff]
      %v5680 = vld [vmem:[#allocation3 + $0x20] sm:$0xf]
      %v5684 = vrot.slane %v5678, 2
      %v5685 = vrot.slane %v5679, 2
      %v5686 = vsel %vm3976, %v5684, %v5685
      %v5687 = vrot.slane %v5680, 2
      %v5688 = vsel %vm3976, %v5685, %v5687
      %v5692 = vsel %vm1241, %v5687, 0
      %5694 = vmatprep.subr.bf16.mxu0 0
      %5695 = vmatpush1.bf16.msra.mxu0 %v5686
      %5696 = vmatprep.subr.bf16.mxu0 0
      %5697 = vmatpush1.bf16.msra.mxu0 %v5688
      %5698 = vmatprep.subr.bf16.mxu0 0
      %5699 = vmatpush1.bf16.msra.mxu0 %v5692
      %5700 = vmatprep.subr.bf16.mxu0 0
      %5701 = vmatpush1.bf16.msra.mxu0 0
      %5702 = vmatprep.subr.bf16.mxu0 0
      %5703 = vmatpush1.bf16.msra.mxu0 0
      %5704 = vmatprep.subr.bf16.mxu0 0
      %5705 = vmatpush1.bf16.msra.mxu0 0
      %5706 = vmatprep.subr.bf16.mxu0 0
      %5707 = vmatpush1.bf16.msra.mxu0 0
      %5708 = vmatprep.subr.bf16.mxu0 0
      %5709 = vmatpush1.bf16.msra.mxu0 0
      %5710 = vmatprep.subr.bf16.mxu0 0
      %5711 = vmatpush1.bf16.msra.mxu0 0
      %5712 = vmatprep.subr.bf16.mxu0 0
      %5713 = vmatpush1.bf16.msra.mxu0 0
      %5714 = vmatprep.subr.bf16.mxu0 0
      %5715 = vmatpush1.bf16.msra.mxu0 0
      %5716 = vmatprep.subr.bf16.mxu0 0
      %5717 = vmatpush1.bf16.msra.mxu0 0
      %5718 = vmatprep.subr.bf16.mxu0 0
      %5719 = vmatpush1.bf16.msra.mxu0 0
      %5720 = vmatprep.subr.bf16.mxu0 0
      %5721 = vmatpush1.bf16.msra.mxu0 0
      %5722 = vmatprep.subr.bf16.mxu0 0
      %5723 = vmatpush1.bf16.msra.mxu0 0
      %5724 = vmatprep.subr.bf16.mxu0 0
      %5725 = vmatpush1.bf16.msra.mxu0 0
      %5726 = vmatprep.mubr.bf16.mxu0 0
      %5727 = vmatmul.mubr.bf16.gmra.mrb[0].mxu0 %v5633
      %v5728 = vpop.f32.mrb[0].mxu0
      %v5729 = vadd.f32 0.0, %v5728
      %v5730 = vpop.f32.mrb[0].mxu0
      %v5731 = vpop.f32.mrb[0].mxu0
      %v5732 = vpop.f32.mrb[0].mxu0
      %5733 = vdwg.mxu0
      %v5734 = vld [vmem:[#allocation3 + $0x20] sm:$0xf0]
      %v5735 = vld [vmem:[#allocation3 + $0x28] sm:$0xff]
      %v5736 = vld [vmem:[#allocation3 + $0x30] sm:$0x3f]
      %vm5740 = vcmask 1043456
      %v5741 = vrot.slane %v5734, 4
      %v5742 = vrot.slane %v5735, 4
      %v5743 = vsel %vm5740, %v5741, %v5742
      %v5744 = vrot.slane %v5736, 4
      %v5745 = vsel %vm5740, %v5742, %v5744
      %v5749 = vsel %vm1241, %v5744, 0
      %5751 = vmatprep.subr.bf16.mxu0 0
      %5752 = vmatpush1.bf16.msra.mxu0 %v5743
      %5753 = vmatprep.subr.bf16.mxu0 0
      %5754 = vmatpush1.bf16.msra.mxu0 %v5745
      %5755 = vmatprep.subr.bf16.mxu0 0
      %5756 = vmatpush1.bf16.msra.mxu0 %v5749
      %5757 = vmatprep.subr.bf16.mxu0 0
      %5758 = vmatpush1.bf16.msra.mxu0 0
      %5759 = vmatprep.subr.bf16.mxu0 0
      %5760 = vmatpush1.bf16.msra.mxu0 0
      %5761 = vmatprep.subr.bf16.mxu0 0
      %5762 = vmatpush1.bf16.msra.mxu0 0
      %5763 = vmatprep.subr.bf16.mxu0 0
      %5764 = vmatpush1.bf16.msra.mxu0 0
      %5765 = vmatprep.subr.bf16.mxu0 0
      %5766 = vmatpush1.bf16.msra.mxu0 0
      %5767 = vmatprep.subr.bf16.mxu0 0
      %5768 = vmatpush1.bf16.msra.mxu0 0
      %5769 = vmatprep.subr.bf16.mxu0 0
      %5770 = vmatpush1.bf16.msra.mxu0 0
      %5771 = vmatprep.subr.bf16.mxu0 0
      %5772 = vmatpush1.bf16.msra.mxu0 0
      %5773 = vmatprep.subr.bf16.mxu0 0
      %5774 = vmatpush1.bf16.msra.mxu0 0
      %5775 = vmatprep.subr.bf16.mxu0 0
      %5776 = vmatpush1.bf16.msra.mxu0 0
      %5777 = vmatprep.subr.bf16.mxu0 0
      %5778 = vmatpush1.bf16.msra.mxu0 0
      %5779 = vmatprep.subr.bf16.mxu0 0
      %5780 = vmatpush1.bf16.msra.mxu0 0
      %5781 = vmatprep.subr.bf16.mxu0 0
      %5782 = vmatpush1.bf16.msra.mxu0 0
      %5783 = vmatprep.mubr.bf16.mxu0 0
      %5784 = vmatmul.mubr.bf16.gmra.mrb[0].mxu0 %v5633
      %v5785 = vpop.f32.mrb[0].mxu0
      %v5786 = vadd.f32 0.0, %v5785
      %v5787 = vpop.f32.mrb[0].mxu0
      %v5788 = vpop.f32.mrb[0].mxu0
      %v5789 = vpop.f32.mrb[0].mxu0
      %5790 = vdwg.mxu0
      %v5791 = vld [vmem:[#allocation3 + $0x30] sm:$0xc0]
      %v5792 = vld [vmem:[#allocation3 + $0x38] sm:$0xff]
      %v5793 = vld [vmem:[#allocation3 + $0x40] sm:$0xff]
      %vm5797 = vcmask 1041408
      %v5798 = vrot.slane %v5791, 6
      %v5799 = vrot.slane %v5792, 6
      %v5800 = vsel %vm5797, %v5798, %v5799
      %v5801 = vrot.slane %v5793, 6
      %v5802 = vsel %vm5797, %v5799, %v5801
      %v5806 = vsel %vm1241, %v5801, 0
      %5808 = vmatprep.subr.bf16.mxu0 0
      %5809 = vmatpush1.bf16.msra.mxu0 %v5800
      %5810 = vmatprep.subr.bf16.mxu0 0
      %5811 = vmatpush1.bf16.msra.mxu0 %v5802
      %5812 = vmatprep.subr.bf16.mxu0 0
      %5813 = vmatpush1.bf16.msra.mxu0 %v5806
      %5814 = vmatprep.subr.bf16.mxu0 0
      %5815 = vmatpush1.bf16.msra.mxu0 0
      %5816 = vmatprep.subr.bf16.mxu0 0
      %5817 = vmatpush1.bf16.msra.mxu0 0
      %5818 = vmatprep.subr.bf16.mxu0 0
      %5819 = vmatpush1.bf16.msra.mxu0 0
      %5820 = vmatprep.subr.bf16.mxu0 0
      %5821 = vmatpush1.bf16.msra.mxu0 0
      %5822 = vmatprep.subr.bf16.mxu0 0
      %5823 = vmatpush1.bf16.msra.mxu0 0
      %5824 = vmatprep.subr.bf16.mxu0 0
      %5825 = vmatpush1.bf16.msra.mxu0 0
      %5826 = vmatprep.subr.bf16.mxu0 0
      %5827 = vmatpush1.bf16.msra.mxu0 0
      %5828 = vmatprep.subr.bf16.mxu0 0
      %5829 = vmatpush1.bf16.msra.mxu0 0
      %5830 = vmatprep.subr.bf16.mxu0 0
      %5831 = vmatpush1.bf16.msra.mxu0 0
      %5832 = vmatprep.subr.bf16.mxu0 0
      %5833 = vmatpush1.bf16.msra.mxu0 0
      %5834 = vmatprep.subr.bf16.mxu0 0
      %5835 = vmatpush1.bf16.msra.mxu0 0
      %5836 = vmatprep.subr.bf16.mxu0 0
      %5837 = vmatpush1.bf16.msra.mxu0 0
      %5838 = vmatprep.subr.bf16.mxu0 0
      %5839 = vmatpush1.bf16.msra.mxu0 0
      %5840 = vmatprep.mubr.bf16.mxu0 0
      %5841 = vmatmul.mubr.bf16.gmra.mrb[0].mxu0 %v5633
      %v5842 = vpop.f32.mrb[0].mxu0
      %v5843 = vadd.f32 0.0, %v5842
      %v5844 = vpop.f32.mrb[0].mxu0
      %v5845 = vpop.f32.mrb[0].mxu0
      %v5846 = vpop.f32.mrb[0].mxu0
      %5847 = vdwg.mxu0
      %v5848 = vld [vmem:[#allocation3 + $0x48] sm:$0xff]
      %v5849 = vld [vmem:[#allocation3 + $0x50] sm:$0xff]
      %v5850 = vld [vmem:[#allocation3 + $0x58] sm:$0x3]
      %v5852 = vsel %vm1241, %v5850, 0
      %5854 = vmatprep.subr.bf16.mxu0 0
      %5855 = vmatpush1.bf16.msra.mxu0 %v5848
      %5856 = vmatprep.subr.bf16.mxu0 0
      %5857 = vmatpush1.bf16.msra.mxu0 %v5849
      %5858 = vmatprep.subr.bf16.mxu0 0
      %5859 = vmatpush1.bf16.msra.mxu0 %v5852
      %5860 = vmatprep.subr.bf16.mxu0 0
      %5861 = vmatpush1.bf16.msra.mxu0 0
      %5862 = vmatprep.subr.bf16.mxu0 0
      %5863 = vmatpush1.bf16.msra.mxu0 0
      %5864 = vmatprep.subr.bf16.mxu0 0
      %5865 = vmatpush1.bf16.msra.mxu0 0
      %5866 = vmatprep.subr.bf16.mxu0 0
      %5867 = vmatpush1.bf16.msra.mxu0 0
      %5868 = vmatprep.subr.bf16.mxu0 0
      %5869 = vmatpush1.bf16.msra.mxu0 0
      %5870 = vmatprep.subr.bf16.mxu0 0
      %5871 = vmatpush1.bf16.msra.mxu0 0
      %5872 = vmatprep.subr.bf16.mxu0 0
      %5873 = vmatpush1.bf16.msra.mxu0 0
      %5874 = vmatprep.subr.bf16.mxu0 0
      %5875 = vmatpush1.bf16.msra.mxu0 0
      %5876 = vmatprep.subr.bf16.mxu0 0
      %5877 = vmatpush1.bf16.msra.mxu0 0
      %5878 = vmatprep.subr.bf16.mxu0 0
      %5879 = vmatpush1.bf16.msra.mxu0 0
      %5880 = vmatprep.subr.bf16.mxu0 0
      %5881 = vmatpush1.bf16.msra.mxu0 0
      %5882 = vmatprep.subr.bf16.mxu0 0
      %5883 = vmatpush1.bf16.msra.mxu0 0
      %5884 = vmatprep.subr.bf16.mxu0 0
      %5885 = vmatpush1.bf16.msra.mxu0 0
      %5886 = vmatprep.mubr.bf16.mxu0 0
      %5887 = vmatmul.mubr.bf16.gmra.mrb[0].mxu0 %v5633
      %v5888 = vpop.f32.mrb[0].mxu0
      %v5889 = vadd.f32 0.0, %v5888
      %v5890 = vpop.f32.mrb[0].mxu0
      %v5891 = vpop.f32.mrb[0].mxu0
      %v5892 = vpop.f32.mrb[0].mxu0
      %5893 = vdwg.mxu0
      %v5894 = vld [vmem:[#allocation3 + $0x58] sm:$0xfc]
      %v5895 = vld [vmem:[#allocation3 + $0x60] sm:$0xff]
      %v5896 = vld [vmem:[#allocation3 + $0x68] sm:$0xf]
      %v5900 = vrot.slane %v5894, 2
      %v5901 = vrot.slane %v5895, 2
      %v5902 = vsel %vm3976, %v5900, %v5901
      %v5903 = vrot.slane %v5896, 2
      %v5904 = vsel %vm3976, %v5901, %v5903
      %v5908 = vsel %vm1241, %v5903, 0
      %5910 = vmatprep.subr.bf16.mxu0 0
      %5911 = vmatpush1.bf16.msra.mxu0 %v5902
      %5912 = vmatprep.subr.bf16.mxu0 0
      %5913 = vmatpush1.bf16.msra.mxu0 %v5904
      %5914 = vmatprep.subr.bf16.mxu0 0
      %5915 = vmatpush1.bf16.msra.mxu0 %v5908
      %5916 = vmatprep.subr.bf16.mxu0 0
      %5917 = vmatpush1.bf16.msra.mxu0 0
      %5918 = vmatprep.subr.bf16.mxu0 0
      %5919 = vmatpush1.bf16.msra.mxu0 0
      %5920 = vmatprep.subr.bf16.mxu0 0
      %5921 = vmatpush1.bf16.msra.mxu0 0
      %5922 = vmatprep.subr.bf16.mxu0 0
      %5923 = vmatpush1.bf16.msra.mxu0 0
      %5924 = vmatprep.subr.bf16.mxu0 0
      %5925 = vmatpush1.bf16.msra.mxu0 0
      %5926 = vmatprep.subr.bf16.mxu0 0
      %5927 = vmatpush1.bf16.msra.mxu0 0
      %5928 = vmatprep.subr.bf16.mxu0 0
      %5929 = vmatpush1.bf16.msra.mxu0 0
      %5930 = vmatprep.subr.bf16.mxu0 0
      %5931 = vmatpush1.bf16.msra.mxu0 0
      %5932 = vmatprep.subr.bf16.mxu0 0
      %5933 = vmatpush1.bf16.msra.mxu0 0
      %5934 = vmatprep.subr.bf16.mxu0 0
      %5935 = vmatpush1.bf16.msra.mxu0 0
      %5936 = vmatprep.subr.bf16.mxu0 0
      %5937 = vmatpush1.bf16.msra.mxu0 0
      %5938 = vmatprep.subr.bf16.mxu0 0
      %5939 = vmatpush1.bf16.msra.mxu0 0
      %5940 = vmatprep.subr.bf16.mxu0 0
      %5941 = vmatpush1.bf16.msra.mxu0 0
      %5942 = vmatprep.mubr.bf16.mxu0 0
      %5943 = vmatmul.mubr.bf16.gmra.mrb[0].mxu0 %v5633
      %v5944 = vpop.f32.mrb[0].mxu0
      %v5945 = vadd.f32 0.0, %v5944
      %v5946 = vpop.f32.mrb[0].mxu0
      %v5947 = vpop.f32.mrb[0].mxu0
      %v5948 = vpop.f32.mrb[0].mxu0
      %5949 = vdwg.mxu0
      %v5950 = vld [vmem:[#allocation3 + $0x68] sm:$0xf0]
      %v5951 = vld [vmem:[#allocation3 + $0x70] sm:$0xff]
      %v5952 = vld [vmem:[#allocation3 + $0x78] sm:$0x3f]
      %v5956 = vrot.slane %v5950, 4
      %v5957 = vrot.slane %v5951, 4
      %v5958 = vsel %vm5740, %v5956, %v5957
      %v5959 = vrot.slane %v5952, 4
      %v5960 = vsel %vm5740, %v5957, %v5959
      %v5964 = vsel %vm1241, %v5959, 0
      %5966 = vmatprep.subr.bf16.mxu0 0
      %5967 = vmatpush1.bf16.msra.mxu0 %v5958
      %5968 = vmatprep.subr.bf16.mxu0 0
      %5969 = vmatpush1.bf16.msra.mxu0 %v5960
      %5970 = vmatprep.subr.bf16.mxu0 0
      %5971 = vmatpush1.bf16.msra.mxu0 %v5964
      %5972 = vmatprep.subr.bf16.mxu0 0
      %5973 = vmatpush1.bf16.msra.mxu0 0
      %5974 = vmatprep.subr.bf16.mxu0 0
      %5975 = vmatpush1.bf16.msra.mxu0 0
      %5976 = vmatprep.subr.bf16.mxu0 0
      %5977 = vmatpush1.bf16.msra.mxu0 0
      %5978 = vmatprep.subr.bf16.mxu0 0
      %5979 = vmatpush1.bf16.msra.mxu0 0
      %5980 = vmatprep.subr.bf16.mxu0 0
      %5981 = vmatpush1.bf16.msra.mxu0 0
      %5982 = vmatprep.subr.bf16.mxu0 0
      %5983 = vmatpush1.bf16.msra.mxu0 0
      %5984 = vmatprep.subr.bf16.mxu0 0
      %5985 = vmatpush1.bf16.msra.mxu0 0
      %5986 = vmatprep.subr.bf16.mxu0 0
      %5987 = vmatpush1.bf16.msra.mxu0 0
      %5988 = vmatprep.subr.bf16.mxu0 0
      %5989 = vmatpush1.bf16.msra.mxu0 0
      %5990 = vmatprep.subr.bf16.mxu0 0
      %5991 = vmatpush1.bf16.msra.mxu0 0
      %5992 = vmatprep.subr.bf16.mxu0 0
      %5993 = vmatpush1.bf16.msra.mxu0 0
      %5994 = vmatprep.subr.bf16.mxu0 0
      %5995 = vmatpush1.bf16.msra.mxu0 0
      %5996 = vmatprep.subr.bf16.mxu0 0
      %5997 = vmatpush1.bf16.msra.mxu0 0
      %5998 = vmatprep.mubr.bf16.mxu0 0
      %5999 = vmatmul.mubr.bf16.gmra.mrb[0].mxu0 %v5633
      %v6000 = vpop.f32.mrb[0].mxu0
      %v6001 = vadd.f32 0.0, %v6000
      %v6002 = vpop.f32.mrb[0].mxu0
      %v6003 = vpop.f32.mrb[0].mxu0
      %v6004 = vpop.f32.mrb[0].mxu0
      %6005 = vdwg.mxu0
      %v6006 = vld [vmem:[#allocation3 + $0x78] sm:$0xc0]
      %v6007 = vld [vmem:[#allocation3 + $0x80] sm:$0xff]
      %v6008 = vld [vmem:[#allocation3 + $0x88] sm:$0xff]
      %v6012 = vrot.slane %v6006, 6
      %v6013 = vrot.slane %v6007, 6
      %v6014 = vsel %vm5797, %v6012, %v6013
      %v6015 = vrot.slane %v6008, 6
      %v6016 = vsel %vm5797, %v6013, %v6015
      %v6020 = vsel %vm1241, %v6015, 0
      %6022 = vmatprep.subr.bf16.mxu0 0
      %6023 = vmatpush1.bf16.msra.mxu0 %v6014
      %6024 = vmatprep.subr.bf16.mxu0 0
      %6025 = vmatpush1.bf16.msra.mxu0 %v6016
      %6026 = vmatprep.subr.bf16.mxu0 0
      %6027 = vmatpush1.bf16.msra.mxu0 %v6020
      %6028 = vmatprep.subr.bf16.mxu0 0
      %6029 = vmatpush1.bf16.msra.mxu0 0
      %6030 = vmatprep.subr.bf16.mxu0 0
      %6031 = vmatpush1.bf16.msra.mxu0 0
      %6032 = vmatprep.subr.bf16.mxu0 0
      %6033 = vmatpush1.bf16.msra.mxu0 0
      %6034 = vmatprep.subr.bf16.mxu0 0
      %6035 = vmatpush1.bf16.msra.mxu0 0
      %6036 = vmatprep.subr.bf16.mxu0 0
      %6037 = vmatpush1.bf16.msra.mxu0 0
      %6038 = vmatprep.subr.bf16.mxu0 0
      %6039 = vmatpush1.bf16.msra.mxu0 0
      %6040 = vmatprep.subr.bf16.mxu0 0
      %6041 = vmatpush1.bf16.msra.mxu0 0
      %6042 = vmatprep.subr.bf16.mxu0 0
      %6043 = vmatpush1.bf16.msra.mxu0 0
      %6044 = vmatprep.subr.bf16.mxu0 0
      %6045 = vmatpush1.bf16.msra.mxu0 0
      %6046 = vmatprep.subr.bf16.mxu0 0
      %6047 = vmatpush1.bf16.msra.mxu0 0
      %6048 = vmatprep.subr.bf16.mxu0 0
      %6049 = vmatpush1.bf16.msra.mxu0 0
      %6050 = vmatprep.subr.bf16.mxu0 0
      %6051 = vmatpush1.bf16.msra.mxu0 0
      %6052 = vmatprep.subr.bf16.mxu0 0
      %6053 = vmatpush1.bf16.msra.mxu0 0
      %6054 = vmatprep.mubr.bf16.mxu0 0
      %6055 = vmatmul.mubr.bf16.gmra.mrb[0].mxu0 %v5633
      %v6056 = vpop.f32.mrb[0].mxu0
      %v6057 = vadd.f32 0.0, %v6056
      %v6058 = vpop.f32.mrb[0].mxu0
      %v6059 = vpop.f32.mrb[0].mxu0
      %v6060 = vpop.f32.mrb[0].mxu0
      %6061 = vdwg.mxu0
      %v6062 = vadd.f32 %v5673, %v5599
      %v6063 = vadd.f32 %v5729, %v5602
      %v6064 = vadd.f32 %v5786, %v5607
      %v6065 = vadd.f32 %v5843, %v5610
      %v6066 = vadd.f32 %v5889, %v5615
      %v6067 = vadd.f32 %v5945, %v5618
      %v6068 = vadd.f32 %v6001, %v5623
      %v6069 = vadd.f32 %v6057, %v5626
      %6070 = vst.msk [vmem:[%s325] sm:$0xff] %vm2326, %v6062
      %6071 = vst.msk [vmem:[%s325 + $0x8] sm:$0xff] %vm2326, %v6063
      %6072 = vst.msk [vmem:[%s325 + $0x10] sm:$0xff] %vm2326, %v6064
      %6073 = vst.msk [vmem:[%s325 + $0x18] sm:$0xff] %vm2326, %v6065
      %6074 = vst.msk [vmem:[%s325 + $0x20] sm:$0xff] %vm2326, %v6066
      %6075 = vst.msk [vmem:[%s325 + $0x28] sm:$0xff] %vm2326, %v6067
      %6076 = vst.msk [vmem:[%s325 + $0x30] sm:$0xff] %vm2326, %v6068
      %6077 = vst.msk [vmem:[%s325 + $0x38] sm:$0xff] %vm2326, %v6069
      %p6078 = scmp.lt.s32.totalorder %s19, 1
      %s6079 = scalar_select %p6078, %s19, 1
      %s6080 = smul.addr %s6079, 8
      %s6081 = smul.addr %s6080, 8
      %s6082 = scalar_lea.vmem %s8, %s6081
      // Predicated region
      $region53: #{tpu_custom_call.1} parent=51 // pred_check
        %p6083 = pneg %p215
      $region54: #{tpu_custom_call.1} parent=51 // pred_check_branch
        %6085 = sbr.rel (%p6083) target = $region56
      $region55: #{tpu_custom_call.1} parent=51 // pred_region
        _
      $region56: #{tpu_custom_call.1} parent=51 // pred_fallthru
        _
    $region52: #{tpu_custom_call.1} parent=5 // pred_fallthru
      _
    %p6086 = scmp.le.s32.totalorder 2, %s14
    // Predicated region
    $region57: #{tpu_custom_call.1} parent=5 // pred_check
      %p6087 = pneg %p6086
    $region58: #{tpu_custom_call.1} parent=5 // pred_check_branch
      %6089 = sbr.rel (%p6087) target = $region60
    $region59: #{tpu_custom_call.1} parent=5 // pred_region
      %s6090 = ssub.s32 %s14, 2
      // Predicated region
      $region61: #{tpu_custom_call.1} parent=59 // pred_check
        %p6091 = pneg %p221
      $region62: #{tpu_custom_call.1} parent=59 // pred_check_branch
        %6093 = sbr.rel (%p6091) target = $region64
      $region63: #{tpu_custom_call.1} parent=59 // pred_region
        %p6094 = scmp.lt.s32.totalorder %s20, 1
        %s6095 = scalar_select %p6094, %s20, 1
        %s6096 = smul.addr %s6095, 8
        %s6097 = smul.addr %s6096, 8
        %s6098 = scalar_lea.vmem %s8, %s6097
      $region64: #{tpu_custom_call.1} parent=59 // pred_fallthru
        _
    $region60: #{tpu_custom_call.1} parent=5 // pred_fallthru
      _
  $region6: #{tpu_custom_call.1} parent=0 // loop_footer
    %s18 = sadd.s32 1, %s14
  $region7: #{tpu_custom_call.1} parent=0 // loop_footer_branch
    %13 = sbr.rel target = $region3
  $region8: #{tpu_custom_call.1} parent=0 // loop_exit
    _

</llo_original>
